<compile_context>
chip_gen: v7x
topology: tpu7x:2x2x1
jax: 0.10.0
libtpu: 0.0.40
codegen_flags: <defaults>
</compile_context>

<pallas_src>
import jax
import jax.numpy as jnp
from jax.experimental import pallas as pl
from jax.experimental.pallas import tpu as pltpu  # noqa: F401  (TPU backend)


def _dropout_linear_dropout_kernel(x_ref, w_ref, b_ref, o_ref):
    # Dropout(p=0.0) -> Linear -> Dropout(p=0.0): hot path is just x @ w + b.
    # Cast activations to bf16 in-kernel (MXU bf16 path, f32 accumulation).
    x_bf = x_ref[...].astype(jnp.bfloat16)
    o_ref[...] = (
        jnp.dot(x_bf, w_ref[...], preferred_element_type=jnp.float32)
        + b_ref[...]
    ).astype(o_ref.dtype)


def prepare_params(w, b):
    """One-time (init-time) param prep: bf16 weight, f32 bias as (1, N)."""
    return w.astype(jnp.bfloat16), b.reshape(1, -1).astype(jnp.float32)


def linear_pallas(x2d, w_bf, b2d):
    """x2d: [M, K] f32, w_bf: [K, N] bf16, b2d: [1, N] f32 -> [M, N] f32.

    Single grid step (whole problem resident in VMEM), f32 accumulate.
    """
    M, K = x2d.shape
    Kw, N = w_bf.shape
    assert K == Kw, "x / w inner dims must match"
    assert b2d.shape == (1, N)

    bytes_accessed = (
        M * K * x2d.dtype.itemsize        # activations (f32)
        + K * N * w_bf.dtype.itemsize     # weight (bf16)
        + N * b2d.dtype.itemsize          # bias (f32)
        + M * N * 4                       # output (f32)
    )

    return pl.pallas_call(
        _dropout_linear_dropout_kernel,
        out_shape=jax.ShapeDtypeStruct((M, N), jnp.float32),
        grid=(1,),
        in_specs=[
            pl.BlockSpec((M, K), lambda i: (0, 0)),   # activations (full)
            pl.BlockSpec((K, N), lambda i: (0, 0)),   # weight (full)
            pl.BlockSpec((1, N), lambda i: (0, 0)),   # bias
        ],
        out_specs=pl.BlockSpec((M, N), lambda i: (0, 0)),
        cost_estimate=pl.CostEstimate(
            flops=2 * M * K * N,
            transcendentals=0,
            bytes_accessed=bytes_accessed,
        ),
    )(x2d, w_bf, b2d)


def module_m_forward(x, w_bf, b2d):
    """x: [B, H, W, Cin] f32 -> [B, H, W, Cout] f32. Dropouts (p=0.0) elided."""
    B, H, W, Cin = x.shape
    Cout = w_bf.shape[1]
    y2d = linear_pallas(x.reshape(B * H * W, Cin), w_bf, b2d)
    return y2d.reshape(B, H, W, Cout)


if __name__ == "__main__":
    key = jax.random.PRNGKey(0)
    kx, kw, kb = jax.random.split(key, 3)

    B, H, W, CIN, COUT = 1, 14, 14, 2048, 512

    x = jax.random.normal(kx, (B, H, W, CIN), dtype=jnp.float32)
    # Deterministic init mimicking nn.Linear default (uniform +-1/sqrt(fan_in)).
    bound = 1.0 / (CIN ** 0.5)
    w = jax.random.uniform(kw, (CIN, COUT), minval=-bound, maxval=bound,
                           dtype=jnp.float32)
    b = jax.random.uniform(kb, (COUT,), minval=-bound, maxval=bound,
                           dtype=jnp.float32)

    # Init-time param prep (weight cast happens exactly once, not per call).
    w_bf, b2d = prepare_params(w, b)

    out = jax.block_until_ready(module_m_forward(x, w_bf, b2d))
    assert out.shape == (B, H, W, COUT)

    # Reference with the same bf16 cast (f32 accumulation) — tight check.
    ref_bf = (
        jnp.dot(
            x.reshape(-1, CIN).astype(jnp.bfloat16),
            w.astype(jnp.bfloat16),
            preferred_element_type=jnp.float32,
        )
        + b
    ).reshape(B, H, W, COUT)
    assert jnp.allclose(out, ref_bf, atol=2e-3, rtol=2e-3)

    # Sanity check against the full-f32 reference (bf16 quantization only).
    ref_f32 = (x.reshape(-1, CIN) @ w + b).reshape(B, H, W, COUT)
    assert jnp.allclose(out, ref_f32, atol=5e-2, rtol=5e-2)

    print("KERNEL_OK")
</pallas_src>

<mosaic_0001>
module attributes {stable_mosaic.version = 11 : i64} {
  func.func @_dropout_linear_dropout_kernel(%arg0: i32, %arg1: memref<196x2048xf32, #tpu.memory_space<vmem>>, %arg2: memref<2048x512xbf16, #tpu.memory_space<vmem>>, %arg3: memref<1x512xf32, #tpu.memory_space<vmem>>, %arg4: memref<196x512xf32, #tpu.memory_space<vmem>>) attributes {dimension_semantics = [#tpu.dimension_semantics<arbitrary>], iteration_bounds = array<i64: 1>, scalar_prefetch = 0 : i64, scratch_operands = 0 : i64, tpu.core_type = #tpu.core_type<tc>, window_params = [{pipeline_mode = #tpu.pipeline_mode<synchronous>, transform_indices = @transform_0, window_bounds = array<i64: 196, 2048>}, {pipeline_mode = #tpu.pipeline_mode<synchronous>, transform_indices = @transform_1, window_bounds = array<i64: 2048, 512>}, {pipeline_mode = #tpu.pipeline_mode<synchronous>, transform_indices = @transform_2, window_bounds = array<i64: 1, 512>}, {pipeline_mode = #tpu.pipeline_mode<synchronous>, transform_indices = @transform_3, window_bounds = array<i64: 196, 512>}]} {
    %c0 = arith.constant 0 : index
    %c0_0 = arith.constant 0 : index
    %0 = vector.load %arg1[%c0, %c0_0] : memref<196x2048xf32, #tpu.memory_space<vmem>>, vector<196x2048xf32>
    %1 = arith.truncf %0 : vector<196x2048xf32> to vector<196x2048xbf16>
    %c0_1 = arith.constant 0 : index
    %c0_2 = arith.constant 0 : index
    %2 = vector.load %arg2[%c0_1, %c0_2] : memref<2048x512xbf16, #tpu.memory_space<vmem>>, vector<2048x512xbf16>
    %cst = arith.constant dense<0.000000e+00> : vector<196x512xf32>
    %3 = tpu.matmul %1, %2, %cst {dimension_numbers = #tpu.dot_dimension_numbers<[1], [0], [0], [1], [0, 0, 1, 1], [], []>} : vector<196x2048xbf16>, vector<2048x512xbf16>, vector<196x512xf32> -> vector<196x512xf32>
    %c0_3 = arith.constant 0 : index
    %c0_4 = arith.constant 0 : index
    %4 = vector.load %arg3[%c0_3, %c0_4] : memref<1x512xf32, #tpu.memory_space<vmem>>, vector<1x512xf32>
    %5 = vector.broadcast %4 : vector<1x512xf32> to vector<196x512xf32>
    %6 = arith.addf %3, %5 : vector<196x512xf32>
    %c0_5 = arith.constant 0 : index
    %c0_6 = arith.constant 0 : index
    %7 = vector.load %arg4[%c0_5, %c0_6] : memref<196x512xf32, #tpu.memory_space<vmem>>, vector<196x512xf32>
    tpu.vector_store %arg4[%c0_5, %c0_6], %6 {strides = array<i32>} : memref<196x512xf32, #tpu.memory_space<vmem>>, vector<196x512xf32>,
    return
  }
  func.func @transform_0(%arg0: i32) -> (i32, i32) {
    %c0_i32 = arith.constant 0 : i32
    %c0_i32_0 = arith.constant 0 : i32
    %c0_i32_1 = arith.constant 0 : i32
    return %c0_i32, %c0_i32_0 : i32, i32
  }
  func.func @transform_1(%arg0: i32) -> (i32, i32) {
    %c0_i32 = arith.constant 0 : i32
    %c0_i32_0 = arith.constant 0 : i32
    %c0_i32_1 = arith.constant 0 : i32
    return %c0_i32, %c0_i32_0 : i32, i32
  }
  func.func @transform_2(%arg0: i32) -> (i32, i32) {
    %c0_i32 = arith.constant 0 : i32
    %c0_i32_0 = arith.constant 0 : i32
    %c0_i32_1 = arith.constant 0 : i32
    return %c0_i32, %c0_i32_0 : i32, i32
  }
  func.func @transform_3(%arg0: i32) -> (i32, i32) {
    %c0_i32 = arith.constant 0 : i32
    %c0_i32_0 = arith.constant 0 : i32
    %c0_i32_1 = arith.constant 0 : i32
    return %c0_i32, %c0_i32_0 : i32, i32
  }
}

</mosaic_0001>

<llo_original>
// kernel: tpu_custom_call.1
$region0: #{tpu_custom_call.1}
  #allocation0 [shape = 'u32[]', space=smem, size = 0x4, offset = 0x4, fixed_abs, tag = 'smem constant byte address 0x4 - core index']
  #allocation1 [shape = 'u32[144,128]{1,0:T(1,128)}', space=vmem, size = 0x12000, scoped, tag = 'internal scratch']
  %s0 = inlined_call_operand.hbm [shape: f32[196,2048], index: 0, kind: input, shape index: {}]
  %s1 = inlined_call_operand.hbm [shape: bf16[2048,512], index: 1, kind: input, shape index: {}]
  %s2 = inlined_call_operand.hbm [shape: f32[1,512], index: 2, kind: input, shape index: {}]
  %s3 = inlined_call_operand.hbm [shape: f32[196,512], index: 3, kind: output, shape index: {}]
  %s4 = sld [smem:[#allocation0]]
  $region34: #{tpu_custom_call.1} parent=0
    _
  %s6 = ssub.s32 1, %s4
  %s7 = scalar_select 0, %s6, %s4
  $region1: #{tpu_custom_call.1} parent=0
    #allocation2 [shape = 'u8[1638400]{0}', space=vmem, size = 0x190000, scoped, tag = 'input window, operand 0, single buffered']
    #allocation3 [shape = 's32[1]{0}', space=sflag, size = 0x4, scoped, tag = 'scoped memory for tpu_custom_call.1']
    #allocation4 [shape = 's32[1]{0}', space=sflag, size = 0x4, scoped, tag = 'scoped memory for tpu_custom_call.1']
    #allocation5 [shape = 'u8[2097152]{0}', space=vmem, size = 0x200000, scoped, tag = 'input window, operand 1, single buffered']
    #allocation6 [shape = 's32[1]{0}', space=sflag, size = 0x4, scoped, tag = 'scoped memory for tpu_custom_call.1']
    #allocation7 [shape = 'u8[2048]{0}', space=vmem, size = 0x800, scoped, tag = 'input window, operand 2, single buffered']
    #allocation8 [shape = 'u8[409600]{0}', space=vmem, size = 0x64000, scoped, tag = 'output window, operand 0, single buffered']
    %8 = vsyncpa [#allocation3], 0
    %9 = vsyncpa [#allocation6], 0
    %10 = vsyncpa [#allocation4], 0
    // Predicated region
    $region2: #{tpu_custom_call.1} parent=1 // pred_check
      _
    $region3: #{tpu_custom_call.1} parent=1 // pred_check_branch
      %12 = sbr.rel (0) target = $region5
    $region4: #{tpu_custom_call.1} parent=1 // pred_region
      %s14 = ssub.s32 51200, 51200
      %15 = vsyncadd [#allocation3], %s14
      %s16 = sshll.u32 [#allocation2], 4
      %s17 = int_to_ptr.vmem [resolvable:$true] %s16
      %22 = dma.hbm_to_vmem [thread:$0]  %s0, 51200, %s17, [#allocation3], 2048, 2048, 128
    $region5: #{tpu_custom_call.1} parent=1 // pred_fallthru
      _
    // Predicated region
    $region6: #{tpu_custom_call.1} parent=1 // pred_check
      _
    $region7: #{tpu_custom_call.1} parent=1 // pred_check_branch
      %24 = sbr.rel (0) target = $region9
    $region8: #{tpu_custom_call.1} parent=1 // pred_region
      %s26 = ssub.s32 65536, 65536
      %27 = vsyncadd [#allocation6], %s26
      %s28 = sshll.u32 [#allocation5], 4
      %s29 = int_to_ptr.vmem [resolvable:$true] %s28
      %34 = dma.hbm_to_vmem [thread:$0]  %s1, 65536, %s29, [#allocation6], 256, 256, 16
    $region9: #{tpu_custom_call.1} parent=1 // pred_fallthru
      _
    // Predicated region
    $region10: #{tpu_custom_call.1} parent=1 // pred_check
      _
    $region11: #{tpu_custom_call.1} parent=1 // pred_check_branch
      %36 = sbr.rel (0) target = $region13
    $region12: #{tpu_custom_call.1} parent=1 // pred_region
      %s38 = ssub.s32 64, 64
      %39 = vsyncadd [#allocation6], %s38
      %s41 = sshll.u32 [#allocation7], 4
      %s42 = int_to_ptr.vmem [resolvable:$true] %s41
      %44 = dma.hbm_to_vmem [thread:$0]  %s2, 64, %s42, [#allocation6]
    $region13: #{tpu_custom_call.1} parent=1 // pred_fallthru
      _
    // Predicated region
    $region14: #{tpu_custom_call.1} parent=1 // pred_check
      _
    $region15: #{tpu_custom_call.1} parent=1 // pred_check_branch
      %46 = sbr.rel (0) target = $region17
    $region16: #{tpu_custom_call.1} parent=1 // pred_region
      %47 = dma.done [#allocation3], 51200
    $region17: #{tpu_custom_call.1} parent=1 // pred_fallthru
      _
    // Predicated region
    $region18: #{tpu_custom_call.1} parent=1 // pred_check
      _
    $region19: #{tpu_custom_call.1} parent=1 // pred_check_branch
      %49 = sbr.rel (0) target = $region21
    $region20: #{tpu_custom_call.1} parent=1 // pred_region
      %50 = dma.done [#allocation6], 65536
    $region21: #{tpu_custom_call.1} parent=1 // pred_fallthru
      _
    // Predicated region
    $region22: #{tpu_custom_call.1} parent=1 // pred_check
      _
    $region23: #{tpu_custom_call.1} parent=1 // pred_check_branch
      %52 = sbr.rel (0) target = $region25
    $region24: #{tpu_custom_call.1} parent=1 // pred_region
      %53 = dma.done [#allocation6], 64
    $region25: #{tpu_custom_call.1} parent=1 // pred_fallthru
      _
    %v54 = vld [vmem:[#allocation2] sm:$0xff]
    %v55 = vld [vmem:[#allocation2 + $0x8] sm:$0xff]
    %v56 = vld [vmem:[#allocation2 + $0x10] sm:$0xff]
    %v57 = vld [vmem:[#allocation2 + $0x18] sm:$0xff]
    %v58 = vld [vmem:[#allocation2 + $0x20] sm:$0xff]
    %v59 = vld [vmem:[#allocation2 + $0x28] sm:$0xff]
    %v60 = vld [vmem:[#allocation2 + $0x30] sm:$0xff]
    %v61 = vld [vmem:[#allocation2 + $0x38] sm:$0xff]
    %v62 = vld [vmem:[#allocation2 + $0x40] sm:$0xff]
    %v63 = vld [vmem:[#allocation2 + $0x48] sm:$0xff]
    %v64 = vld [vmem:[#allocation2 + $0x50] sm:$0xff]
    %v65 = vld [vmem:[#allocation2 + $0x58] sm:$0xff]
    %v66 = vld [vmem:[#allocation2 + $0x60] sm:$0xff]
    %v67 = vld [vmem:[#allocation2 + $0x68] sm:$0xff]
    %v68 = vld [vmem:[#allocation2 + $0x70] sm:$0xff]
    %v69 = vld [vmem:[#allocation2 + $0x78] sm:$0xff]
    %v70 = vld [vmem:[#allocation2 + $0x80] sm:$0xff]
    %v71 = vld [vmem:[#allocation2 + $0x88] sm:$0xff]
    %v72 = vld [vmem:[#allocation2 + $0x90] sm:$0xff]
    %v73 = vld [vmem:[#allocation2 + $0x98] sm:$0xff]
    %v74 = vld [vmem:[#allocation2 + $0xa0] sm:$0xff]
    %v75 = vld [vmem:[#allocation2 + $0xa8] sm:$0xff]
    %v76 = vld [vmem:[#allocation2 + $0xb0] sm:$0xff]
    %v77 = vld [vmem:[#allocation2 + $0xb8] sm:$0xff]
    %v78 = vld [vmem:[#allocation2 + $0xc0] sm:$0xff]
    %v79 = vld [vmem:[#allocation2 + $0xc8] sm:$0xff]
    %v80 = vld [vmem:[#allocation2 + $0xd0] sm:$0xff]
    %v81 = vld [vmem:[#allocation2 + $0xd8] sm:$0xff]
    %v82 = vld [vmem:[#allocation2 + $0xe0] sm:$0xff]
    %v83 = vld [vmem:[#allocation2 + $0xe8] sm:$0xff]
    %v84 = vld [vmem:[#allocation2 + $0xf0] sm:$0xff]
    %v85 = vld [vmem:[#allocation2 + $0xf8] sm:$0xff]
    %v86 = vld [vmem:[#allocation2 + $0x100] sm:$0xff]
    %v87 = vld [vmem:[#allocation2 + $0x108] sm:$0xff]
    %v88 = vld [vmem:[#allocation2 + $0x110] sm:$0xff]
    %v89 = vld [vmem:[#allocation2 + $0x118] sm:$0xff]
    %v90 = vld [vmem:[#allocation2 + $0x120] sm:$0xff]
    %v91 = vld [vmem:[#allocation2 + $0x128] sm:$0xff]
    %v92 = vld [vmem:[#allocation2 + $0x130] sm:$0xff]
    %v93 = vld [vmem:[#allocation2 + $0x138] sm:$0xff]
    %v94 = vld [vmem:[#allocation2 + $0x140] sm:$0xff]
    %v95 = vld [vmem:[#allocation2 + $0x148] sm:$0xff]
    %v96 = vld [vmem:[#allocation2 + $0x150] sm:$0xff]
    %v97 = vld [vmem:[#allocation2 + $0x158] sm:$0xff]
    %v98 = vld [vmem:[#allocation2 + $0x160] sm:$0xff]
    %v99 = vld [vmem:[#allocation2 + $0x168] sm:$0xff]
    %v100 = vld [vmem:[#allocation2 + $0x170] sm:$0xff]
    %v101 = vld [vmem:[#allocation2 + $0x178] sm:$0xff]
    %v102 = vld [vmem:[#allocation2 + $0x180] sm:$0xff]
    %v103 = vld [vmem:[#allocation2 + $0x188] sm:$0xff]
    %v104 = vld [vmem:[#allocation2 + $0x190] sm:$0xff]
    %v105 = vld [vmem:[#allocation2 + $0x198] sm:$0xff]
    %v106 = vld [vmem:[#allocation2 + $0x1a0] sm:$0xff]
    %v107 = vld [vmem:[#allocation2 + $0x1a8] sm:$0xff]
    %v108 = vld [vmem:[#allocation2 + $0x1b0] sm:$0xff]
    %v109 = vld [vmem:[#allocation2 + $0x1b8] sm:$0xff]
    %v110 = vld [vmem:[#allocation2 + $0x1c0] sm:$0xff]
    %v111 = vld [vmem:[#allocation2 + $0x1c8] sm:$0xff]
    %v112 = vld [vmem:[#allocation2 + $0x1d0] sm:$0xff]
    %v113 = vld [vmem:[#allocation2 + $0x1d8] sm:$0xff]
    %v114 = vld [vmem:[#allocation2 + $0x1e0] sm:$0xff]
    %v115 = vld [vmem:[#allocation2 + $0x1e8] sm:$0xff]
    %v116 = vld [vmem:[#allocation2 + $0x1f0] sm:$0xff]
    %v117 = vld [vmem:[#allocation2 + $0x1f8] sm:$0xff]
    %v118 = vld [vmem:[#allocation2 + $0x200] sm:$0xff]
    %v119 = vld [vmem:[#allocation2 + $0x208] sm:$0xff]
    %v120 = vld [vmem:[#allocation2 + $0x210] sm:$0xff]
    %v121 = vld [vmem:[#allocation2 + $0x218] sm:$0xff]
    %v122 = vld [vmem:[#allocation2 + $0x220] sm:$0xff]
    %v123 = vld [vmem:[#allocation2 + $0x228] sm:$0xff]
    %v124 = vld [vmem:[#allocation2 + $0x230] sm:$0xff]
    %v125 = vld [vmem:[#allocation2 + $0x238] sm:$0xff]
    %v126 = vld [vmem:[#allocation2 + $0x240] sm:$0xff]
    %v127 = vld [vmem:[#allocation2 + $0x248] sm:$0xff]
    %v128 = vld [vmem:[#allocation2 + $0x250] sm:$0xff]
    %v129 = vld [vmem:[#allocation2 + $0x258] sm:$0xff]
    %v130 = vld [vmem:[#allocation2 + $0x260] sm:$0xff]
    %v131 = vld [vmem:[#allocation2 + $0x268] sm:$0xff]
    %v132 = vld [vmem:[#allocation2 + $0x270] sm:$0xff]
    %v133 = vld [vmem:[#allocation2 + $0x278] sm:$0xff]
    %v134 = vld [vmem:[#allocation2 + $0x280] sm:$0xff]
    %v135 = vld [vmem:[#allocation2 + $0x288] sm:$0xff]
    %v136 = vld [vmem:[#allocation2 + $0x290] sm:$0xff]
    %v137 = vld [vmem:[#allocation2 + $0x298] sm:$0xff]
    %v138 = vld [vmem:[#allocation2 + $0x2a0] sm:$0xff]
    %v139 = vld [vmem:[#allocation2 + $0x2a8] sm:$0xff]
    %v140 = vld [vmem:[#allocation2 + $0x2b0] sm:$0xff]
    %v141 = vld [vmem:[#allocation2 + $0x2b8] sm:$0xff]
    %v142 = vld [vmem:[#allocation2 + $0x2c0] sm:$0xff]
    %v143 = vld [vmem:[#allocation2 + $0x2c8] sm:$0xff]
    %v144 = vld [vmem:[#allocation2 + $0x2d0] sm:$0xff]
    %v145 = vld [vmem:[#allocation2 + $0x2d8] sm:$0xff]
    %v146 = vld [vmem:[#allocation2 + $0x2e0] sm:$0xff]
    %v147 = vld [vmem:[#allocation2 + $0x2e8] sm:$0xff]
    %v148 = vld [vmem:[#allocation2 + $0x2f0] sm:$0xff]
    %v149 = vld [vmem:[#allocation2 + $0x2f8] sm:$0xff]
    %v150 = vld [vmem:[#allocation2 + $0x300] sm:$0xff]
    %v151 = vld [vmem:[#allocation2 + $0x308] sm:$0xff]
    %v152 = vld [vmem:[#allocation2 + $0x310] sm:$0xff]
    %v153 = vld [vmem:[#allocation2 + $0x318] sm:$0xff]
    %v154 = vld [vmem:[#allocation2 + $0x320] sm:$0xff]
    %v155 = vld [vmem:[#allocation2 + $0x328] sm:$0xff]
    %v156 = vld [vmem:[#allocation2 + $0x330] sm:$0xff]
    %v157 = vld [vmem:[#allocation2 + $0x338] sm:$0xff]
    %v158 = vld [vmem:[#allocation2 + $0x340] sm:$0xff]
    %v159 = vld [vmem:[#allocation2 + $0x348] sm:$0xff]
    %v160 = vld [vmem:[#allocation2 + $0x350] sm:$0xff]
    %v161 = vld [vmem:[#allocation2 + $0x358] sm:$0xff]
    %v162 = vld [vmem:[#allocation2 + $0x360] sm:$0xff]
    %v163 = vld [vmem:[#allocation2 + $0x368] sm:$0xff]
    %v164 = vld [vmem:[#allocation2 + $0x370] sm:$0xff]
    %v165 = vld [vmem:[#allocation2 + $0x378] sm:$0xff]
    %v166 = vld [vmem:[#allocation2 + $0x380] sm:$0xff]
    %v167 = vld [vmem:[#allocation2 + $0x388] sm:$0xff]
    %v168 = vld [vmem:[#allocation2 + $0x390] sm:$0xff]
    %v169 = vld [vmem:[#allocation2 + $0x398] sm:$0xff]
    %v170 = vld [vmem:[#allocation2 + $0x3a0] sm:$0xff]
    %v171 = vld [vmem:[#allocation2 + $0x3a8] sm:$0xff]
    %v172 = vld [vmem:[#allocation2 + $0x3b0] sm:$0xff]
    %v173 = vld [vmem:[#allocation2 + $0x3b8] sm:$0xff]
    %v174 = vld [vmem:[#allocation2 + $0x3c0] sm:$0xff]
    %v175 = vld [vmem:[#allocation2 + $0x3c8] sm:$0xff]
    %v176 = vld [vmem:[#allocation2 + $0x3d0] sm:$0xff]
    %v177 = vld [vmem:[#allocation2 + $0x3d8] sm:$0xff]
    %v178 = vld [vmem:[#allocation2 + $0x3e0] sm:$0xff]
    %v179 = vld [vmem:[#allocation2 + $0x3e8] sm:$0xff]
    %v180 = vld [vmem:[#allocation2 + $0x3f0] sm:$0xff]
    %v181 = vld [vmem:[#allocation2 + $0x3f8] sm:$0xff]
    %v182 = vld [vmem:[#allocation2 + $0x400] sm:$0xff]
    %v183 = vld [vmem:[#allocation2 + $0x408] sm:$0xff]
    %v184 = vld [vmem:[#allocation2 + $0x410] sm:$0xff]
    %v185 = vld [vmem:[#allocation2 + $0x418] sm:$0xff]
    %v186 = vld [vmem:[#allocation2 + $0x420] sm:$0xff]
    %v187 = vld [vmem:[#allocation2 + $0x428] sm:$0xff]
    %v188 = vld [vmem:[#allocation2 + $0x430] sm:$0xff]
    %v189 = vld [vmem:[#allocation2 + $0x438] sm:$0xff]
    %v190 = vld [vmem:[#allocation2 + $0x440] sm:$0xff]
    %v191 = vld [vmem:[#allocation2 + $0x448] sm:$0xff]
    %v192 = vld [vmem:[#allocation2 + $0x450] sm:$0xff]
    %v193 = vld [vmem:[#allocation2 + $0x458] sm:$0xff]
    %v194 = vld [vmem:[#allocation2 + $0x460] sm:$0xff]
    %v195 = vld [vmem:[#allocation2 + $0x468] sm:$0xff]
    %v196 = vld [vmem:[#allocation2 + $0x470] sm:$0xff]
    %v197 = vld [vmem:[#allocation2 + $0x478] sm:$0xff]
    %v198 = vld [vmem:[#allocation2 + $0x480] sm:$0xff]
    %v199 = vld [vmem:[#allocation2 + $0x488] sm:$0xff]
    %v200 = vld [vmem:[#allocation2 + $0x490] sm:$0xff]
    %v201 = vld [vmem:[#allocation2 + $0x498] sm:$0xff]
    %v202 = vld [vmem:[#allocation2 + $0x4a0] sm:$0xff]
    %v203 = vld [vmem:[#allocation2 + $0x4a8] sm:$0xff]
    %v204 = vld [vmem:[#allocation2 + $0x4b0] sm:$0xff]
    %v205 = vld [vmem:[#allocation2 + $0x4b8] sm:$0xff]
    %v206 = vld [vmem:[#allocation2 + $0x4c0] sm:$0xff]
    %v207 = vld [vmem:[#allocation2 + $0x4c8] sm:$0xff]
    %v208 = vld [vmem:[#allocation2 + $0x4d0] sm:$0xff]
    %v209 = vld [vmem:[#allocation2 + $0x4d8] sm:$0xff]
    %v210 = vld [vmem:[#allocation2 + $0x4e0] sm:$0xff]
    %v211 = vld [vmem:[#allocation2 + $0x4e8] sm:$0xff]
    %v212 = vld [vmem:[#allocation2 + $0x4f0] sm:$0xff]
    %v213 = vld [vmem:[#allocation2 + $0x4f8] sm:$0xff]
    %v214 = vld [vmem:[#allocation2 + $0x500] sm:$0xff]
    %v215 = vld [vmem:[#allocation2 + $0x508] sm:$0xff]
    %v216 = vld [vmem:[#allocation2 + $0x510] sm:$0xff]
    %v217 = vld [vmem:[#allocation2 + $0x518] sm:$0xff]
    %v218 = vld [vmem:[#allocation2 + $0x520] sm:$0xff]
    %v219 = vld [vmem:[#allocation2 + $0x528] sm:$0xff]
    %v220 = vld [vmem:[#allocation2 + $0x530] sm:$0xff]
    %v221 = vld [vmem:[#allocation2 + $0x538] sm:$0xff]
    %v222 = vld [vmem:[#allocation2 + $0x540] sm:$0xff]
    %v223 = vld [vmem:[#allocation2 + $0x548] sm:$0xff]
    %v224 = vld [vmem:[#allocation2 + $0x550] sm:$0xff]
    %v225 = vld [vmem:[#allocation2 + $0x558] sm:$0xff]
    %v226 = vld [vmem:[#allocation2 + $0x560] sm:$0xff]
    %v227 = vld [vmem:[#allocation2 + $0x568] sm:$0xff]
    %v228 = vld [vmem:[#allocation2 + $0x570] sm:$0xff]
    %v229 = vld [vmem:[#allocation2 + $0x578] sm:$0xff]
    %v230 = vld [vmem:[#allocation2 + $0x580] sm:$0xff]
    %v231 = vld [vmem:[#allocation2 + $0x588] sm:$0xff]
    %v232 = vld [vmem:[#allocation2 + $0x590] sm:$0xff]
    %v233 = vld [vmem:[#allocation2 + $0x598] sm:$0xff]
    %v234 = vld [vmem:[#allocation2 + $0x5a0] sm:$0xff]
    %v235 = vld [vmem:[#allocation2 + $0x5a8] sm:$0xff]
    %v236 = vld [vmem:[#allocation2 + $0x5b0] sm:$0xff]
    %v237 = vld [vmem:[#allocation2 + $0x5b8] sm:$0xff]
    %v238 = vld [vmem:[#allocation2 + $0x5c0] sm:$0xff]
    %v239 = vld [vmem:[#allocation2 + $0x5c8] sm:$0xff]
    %v240 = vld [vmem:[#allocation2 + $0x5d0] sm:$0xff]
    %v241 = vld [vmem:[#allocation2 + $0x5d8] sm:$0xff]
    %v242 = vld [vmem:[#allocation2 + $0x5e0] sm:$0xff]
    %v243 = vld [vmem:[#allocation2 + $0x5e8] sm:$0xff]
    %v244 = vld [vmem:[#allocation2 + $0x5f0] sm:$0xff]
    %v245 = vld [vmem:[#allocation2 + $0x5f8] sm:$0xff]
    %v246 = vld [vmem:[#allocation2 + $0x600] sm:$0xff]
    %v247 = vld [vmem:[#allocation2 + $0x608] sm:$0xff]
    %v248 = vld [vmem:[#allocation2 + $0x610] sm:$0xff]
    %v249 = vld [vmem:[#allocation2 + $0x618] sm:$0xff]
    %v250 = vld [vmem:[#allocation2 + $0x620] sm:$0xff]
    %v251 = vld [vmem:[#allocation2 + $0x628] sm:$0xff]
    %v252 = vld [vmem:[#allocation2 + $0x630] sm:$0xff]
    %v253 = vld [vmem:[#allocation2 + $0x638] sm:$0xff]
    %v254 = vld [vmem:[#allocation2 + $0x640] sm:$0xff]
    %v255 = vld [vmem:[#allocation2 + $0x648] sm:$0xff]
    %v256 = vld [vmem:[#allocation2 + $0x650] sm:$0xff]
    %v257 = vld [vmem:[#allocation2 + $0x658] sm:$0xff]
    %v258 = vld [vmem:[#allocation2 + $0x660] sm:$0xff]
    %v259 = vld [vmem:[#allocation2 + $0x668] sm:$0xff]
    %v260 = vld [vmem:[#allocation2 + $0x670] sm:$0xff]
    %v261 = vld [vmem:[#allocation2 + $0x678] sm:$0xff]
    %v262 = vld [vmem:[#allocation2 + $0x680] sm:$0xff]
    %v263 = vld [vmem:[#allocation2 + $0x688] sm:$0xff]
    %v264 = vld [vmem:[#allocation2 + $0x690] sm:$0xff]
    %v265 = vld [vmem:[#allocation2 + $0x698] sm:$0xff]
    %v266 = vld [vmem:[#allocation2 + $0x6a0] sm:$0xff]
    %v267 = vld [vmem:[#allocation2 + $0x6a8] sm:$0xff]
    %v268 = vld [vmem:[#allocation2 + $0x6b0] sm:$0xff]
    %v269 = vld [vmem:[#allocation2 + $0x6b8] sm:$0xff]
    %v270 = vld [vmem:[#allocation2 + $0x6c0] sm:$0xff]
    %v271 = vld [vmem:[#allocation2 + $0x6c8] sm:$0xff]
    %v272 = vld [vmem:[#allocation2 + $0x6d0] sm:$0xff]
    %v273 = vld [vmem:[#allocation2 + $0x6d8] sm:$0xff]
    %v274 = vld [vmem:[#allocation2 + $0x6e0] sm:$0xff]
    %v275 = vld [vmem:[#allocation2 + $0x6e8] sm:$0xff]
    %v276 = vld [vmem:[#allocation2 + $0x6f0] sm:$0xff]
    %v277 = vld [vmem:[#allocation2 + $0x6f8] sm:$0xff]
    %v278 = vld [vmem:[#allocation2 + $0x700] sm:$0xff]
    %v279 = vld [vmem:[#allocation2 + $0x708] sm:$0xff]
    %v280 = vld [vmem:[#allocation2 + $0x710] sm:$0xff]
    %v281 = vld [vmem:[#allocation2 + $0x718] sm:$0xff]
    %v282 = vld [vmem:[#allocation2 + $0x720] sm:$0xff]
    %v283 = vld [vmem:[#allocation2 + $0x728] sm:$0xff]
    %v284 = vld [vmem:[#allocation2 + $0x730] sm:$0xff]
    %v285 = vld [vmem:[#allocation2 + $0x738] sm:$0xff]
    %v286 = vld [vmem:[#allocation2 + $0x740] sm:$0xff]
    %v287 = vld [vmem:[#allocation2 + $0x748] sm:$0xff]
    %v288 = vld [vmem:[#allocation2 + $0x750] sm:$0xff]
    %v289 = vld [vmem:[#allocation2 + $0x758] sm:$0xff]
    %v290 = vld [vmem:[#allocation2 + $0x760] sm:$0xff]
    %v291 = vld [vmem:[#allocation2 + $0x768] sm:$0xff]
    %v292 = vld [vmem:[#allocation2 + $0x770] sm:$0xff]
    %v293 = vld [vmem:[#allocation2 + $0x778] sm:$0xff]
    %v294 = vld [vmem:[#allocation2 + $0x780] sm:$0xff]
    %v295 = vld [vmem:[#allocation2 + $0x788] sm:$0xff]
    %v296 = vld [vmem:[#allocation2 + $0x790] sm:$0xff]
    %v297 = vld [vmem:[#allocation2 + $0x798] sm:$0xff]
    %v298 = vld [vmem:[#allocation2 + $0x7a0] sm:$0xff]
    %v299 = vld [vmem:[#allocation2 + $0x7a8] sm:$0xff]
    %v300 = vld [vmem:[#allocation2 + $0x7b0] sm:$0xff]
    %v301 = vld [vmem:[#allocation2 + $0x7b8] sm:$0xff]
    %v302 = vld [vmem:[#allocation2 + $0x7c0] sm:$0xff]
    %v303 = vld [vmem:[#allocation2 + $0x7c8] sm:$0xff]
    %v304 = vld [vmem:[#allocation2 + $0x7d0] sm:$0xff]
    %v305 = vld [vmem:[#allocation2 + $0x7d8] sm:$0xff]
    %v306 = vld [vmem:[#allocation2 + $0x7e0] sm:$0xff]
    %v307 = vld [vmem:[#allocation2 + $0x7e8] sm:$0xff]
    %v308 = vld [vmem:[#allocation2 + $0x7f0] sm:$0xff]
    %v309 = vld [vmem:[#allocation2 + $0x7f8] sm:$0xff]
    %v310 = vld [vmem:[#allocation2 + $0x800] sm:$0xff]
    %v311 = vld [vmem:[#allocation2 + $0x808] sm:$0xff]
    %v312 = vld [vmem:[#allocation2 + $0x810] sm:$0xff]
    %v313 = vld [vmem:[#allocation2 + $0x818] sm:$0xff]
    %v314 = vld [vmem:[#allocation2 + $0x820] sm:$0xff]
    %v315 = vld [vmem:[#allocation2 + $0x828] sm:$0xff]
    %v316 = vld [vmem:[#allocation2 + $0x830] sm:$0xff]
    %v317 = vld [vmem:[#allocation2 + $0x838] sm:$0xff]
    %v318 = vld [vmem:[#allocation2 + $0x840] sm:$0xff]
    %v319 = vld [vmem:[#allocation2 + $0x848] sm:$0xff]
    %v320 = vld [vmem:[#allocation2 + $0x850] sm:$0xff]
    %v321 = vld [vmem:[#allocation2 + $0x858] sm:$0xff]
    %v322 = vld [vmem:[#allocation2 + $0x860] sm:$0xff]
    %v323 = vld [vmem:[#allocation2 + $0x868] sm:$0xff]
    %v324 = vld [vmem:[#allocation2 + $0x870] sm:$0xff]
    %v325 = vld [vmem:[#allocation2 + $0x878] sm:$0xff]
    %v326 = vld [vmem:[#allocation2 + $0x880] sm:$0xff]
    %v327 = vld [vmem:[#allocation2 + $0x888] sm:$0xff]
    %v328 = vld [vmem:[#allocation2 + $0x890] sm:$0xff]
    %v329 = vld [vmem:[#allocation2 + $0x898] sm:$0xff]
    %v330 = vld [vmem:[#allocation2 + $0x8a0] sm:$0xff]
    %v331 = vld [vmem:[#allocation2 + $0x8a8] sm:$0xff]
    %v332 = vld [vmem:[#allocation2 + $0x8b0] sm:$0xff]
    %v333 = vld [vmem:[#allocation2 + $0x8b8] sm:$0xff]
    %v334 = vld [vmem:[#allocation2 + $0x8c0] sm:$0xff]
    %v335 = vld [vmem:[#allocation2 + $0x8c8] sm:$0xff]
    %v336 = vld [vmem:[#allocation2 + $0x8d0] sm:$0xff]
    %v337 = vld [vmem:[#allocation2 + $0x8d8] sm:$0xff]
    %v338 = vld [vmem:[#allocation2 + $0x8e0] sm:$0xff]
    %v339 = vld [vmem:[#allocation2 + $0x8e8] sm:$0xff]
    %v340 = vld [vmem:[#allocation2 + $0x8f0] sm:$0xff]
    %v341 = vld [vmem:[#allocation2 + $0x8f8] sm:$0xff]
    %v342 = vld [vmem:[#allocation2 + $0x900] sm:$0xff]
    %v343 = vld [vmem:[#allocation2 + $0x908] sm:$0xff]
    %v344 = vld [vmem:[#allocation2 + $0x910] sm:$0xff]
    %v345 = vld [vmem:[#allocation2 + $0x918] sm:$0xff]
    %v346 = vld [vmem:[#allocation2 + $0x920] sm:$0xff]
    %v347 = vld [vmem:[#allocation2 + $0x928] sm:$0xff]
    %v348 = vld [vmem:[#allocation2 + $0x930] sm:$0xff]
    %v349 = vld [vmem:[#allocation2 + $0x938] sm:$0xff]
    %v350 = vld [vmem:[#allocation2 + $0x940] sm:$0xff]
    %v351 = vld [vmem:[#allocation2 + $0x948] sm:$0xff]
    %v352 = vld [vmem:[#allocation2 + $0x950] sm:$0xff]
    %v353 = vld [vmem:[#allocation2 + $0x958] sm:$0xff]
    %v354 = vld [vmem:[#allocation2 + $0x960] sm:$0xff]
    %v355 = vld [vmem:[#allocation2 + $0x968] sm:$0xff]
    %v356 = vld [vmem:[#allocation2 + $0x970] sm:$0xff]
    %v357 = vld [vmem:[#allocation2 + $0x978] sm:$0xff]
    %v358 = vld [vmem:[#allocation2 + $0x980] sm:$0xff]
    %v359 = vld [vmem:[#allocation2 + $0x988] sm:$0xff]
    %v360 = vld [vmem:[#allocation2 + $0x990] sm:$0xff]
    %v361 = vld [vmem:[#allocation2 + $0x998] sm:$0xff]
    %v362 = vld [vmem:[#allocation2 + $0x9a0] sm:$0xff]
    %v363 = vld [vmem:[#allocation2 + $0x9a8] sm:$0xff]
    %v364 = vld [vmem:[#allocation2 + $0x9b0] sm:$0xff]
    %v365 = vld [vmem:[#allocation2 + $0x9b8] sm:$0xff]
    %v366 = vld [vmem:[#allocation2 + $0x9c0] sm:$0xff]
    %v367 = vld [vmem:[#allocation2 + $0x9c8] sm:$0xff]
    %v368 = vld [vmem:[#allocation2 + $0x9d0] sm:$0xff]
    %v369 = vld [vmem:[#allocation2 + $0x9d8] sm:$0xff]
    %v370 = vld [vmem:[#allocation2 + $0x9e0] sm:$0xff]
    %v371 = vld [vmem:[#allocation2 + $0x9e8] sm:$0xff]
    %v372 = vld [vmem:[#allocation2 + $0x9f0] sm:$0xff]
    %v373 = vld [vmem:[#allocation2 + $0x9f8] sm:$0xff]
    %v374 = vld [vmem:[#allocation2 + $0xa00] sm:$0xff]
    %v375 = vld [vmem:[#allocation2 + $0xa08] sm:$0xff]
    %v376 = vld [vmem:[#allocation2 + $0xa10] sm:$0xff]
    %v377 = vld [vmem:[#allocation2 + $0xa18] sm:$0xff]
    %v378 = vld [vmem:[#allocation2 + $0xa20] sm:$0xff]
    %v379 = vld [vmem:[#allocation2 + $0xa28] sm:$0xff]
    %v380 = vld [vmem:[#allocation2 + $0xa30] sm:$0xff]
    %v381 = vld [vmem:[#allocation2 + $0xa38] sm:$0xff]
    %v382 = vld [vmem:[#allocation2 + $0xa40] sm:$0xff]
    %v383 = vld [vmem:[#allocation2 + $0xa48] sm:$0xff]
    %v384 = vld [vmem:[#allocation2 + $0xa50] sm:$0xff]
    %v385 = vld [vmem:[#allocation2 + $0xa58] sm:$0xff]
    %v386 = vld [vmem:[#allocation2 + $0xa60] sm:$0xff]
    %v387 = vld [vmem:[#allocation2 + $0xa68] sm:$0xff]
    %v388 = vld [vmem:[#allocation2 + $0xa70] sm:$0xff]
    %v389 = vld [vmem:[#allocation2 + $0xa78] sm:$0xff]
    %v390 = vld [vmem:[#allocation2 + $0xa80] sm:$0xff]
    %v391 = vld [vmem:[#allocation2 + $0xa88] sm:$0xff]
    %v392 = vld [vmem:[#allocation2 + $0xa90] sm:$0xff]
    %v393 = vld [vmem:[#allocation2 + $0xa98] sm:$0xff]
    %v394 = vld [vmem:[#allocation2 + $0xaa0] sm:$0xff]
    %v395 = vld [vmem:[#allocation2 + $0xaa8] sm:$0xff]
    %v396 = vld [vmem:[#allocation2 + $0xab0] sm:$0xff]
    %v397 = vld [vmem:[#allocation2 + $0xab8] sm:$0xff]
    %v398 = vld [vmem:[#allocation2 + $0xac0] sm:$0xff]
    %v399 = vld [vmem:[#allocation2 + $0xac8] sm:$0xff]
    %v400 = vld [vmem:[#allocation2 + $0xad0] sm:$0xff]
    %v401 = vld [vmem:[#allocation2 + $0xad8] sm:$0xff]
    %v402 = vld [vmem:[#allocation2 + $0xae0] sm:$0xff]
    %v403 = vld [vmem:[#allocation2 + $0xae8] sm:$0xff]
    %v404 = vld [vmem:[#allocation2 + $0xaf0] sm:$0xff]
    %v405 = vld [vmem:[#allocation2 + $0xaf8] sm:$0xff]
    %v406 = vld [vmem:[#allocation2 + $0xb00] sm:$0xff]
    %v407 = vld [vmem:[#allocation2 + $0xb08] sm:$0xff]
    %v408 = vld [vmem:[#allocation2 + $0xb10] sm:$0xff]
    %v409 = vld [vmem:[#allocation2 + $0xb18] sm:$0xff]
    %v410 = vld [vmem:[#allocation2 + $0xb20] sm:$0xff]
    %v411 = vld [vmem:[#allocation2 + $0xb28] sm:$0xff]
    %v412 = vld [vmem:[#allocation2 + $0xb30] sm:$0xff]
    %v413 = vld [vmem:[#allocation2 + $0xb38] sm:$0xff]
    %v414 = vld [vmem:[#allocation2 + $0xb40] sm:$0xff]
    %v415 = vld [vmem:[#allocation2 + $0xb48] sm:$0xff]
    %v416 = vld [vmem:[#allocation2 + $0xb50] sm:$0xff]
    %v417 = vld [vmem:[#allocation2 + $0xb58] sm:$0xff]
    %v418 = vld [vmem:[#allocation2 + $0xb60] sm:$0xff]
    %v419 = vld [vmem:[#allocation2 + $0xb68] sm:$0xff]
    %v420 = vld [vmem:[#allocation2 + $0xb70] sm:$0xff]
    %v421 = vld [vmem:[#allocation2 + $0xb78] sm:$0xff]
    %v422 = vld [vmem:[#allocation2 + $0xb80] sm:$0xff]
    %v423 = vld [vmem:[#allocation2 + $0xb88] sm:$0xff]
    %v424 = vld [vmem:[#allocation2 + $0xb90] sm:$0xff]
    %v425 = vld [vmem:[#allocation2 + $0xb98] sm:$0xff]
    %v426 = vld [vmem:[#allocation2 + $0xba0] sm:$0xff]
    %v427 = vld [vmem:[#allocation2 + $0xba8] sm:$0xff]
    %v428 = vld [vmem:[#allocation2 + $0xbb0] sm:$0xff]
    %v429 = vld [vmem:[#allocation2 + $0xbb8] sm:$0xff]
    %v430 = vld [vmem:[#allocation2 + $0xbc0] sm:$0xff]
    %v431 = vld [vmem:[#allocation2 + $0xbc8] sm:$0xff]
    %v432 = vld [vmem:[#allocation2 + $0xbd0] sm:$0xff]
    %v433 = vld [vmem:[#allocation2 + $0xbd8] sm:$0xff]
    %v434 = vld [vmem:[#allocation2 + $0xbe0] sm:$0xff]
    %v435 = vld [vmem:[#allocation2 + $0xbe8] sm:$0xff]
    %v436 = vld [vmem:[#allocation2 + $0xbf0] sm:$0xff]
    %v437 = vld [vmem:[#allocation2 + $0xbf8] sm:$0xff]
    %v438 = vld [vmem:[#allocation2 + $0xc00] sm:$0xf]
    %v439 = vld [vmem:[#allocation2 + $0xc08] sm:$0xf]
    %v440 = vld [vmem:[#allocation2 + $0xc10] sm:$0xf]
    %v441 = vld [vmem:[#allocation2 + $0xc18] sm:$0xf]
    %v442 = vld [vmem:[#allocation2 + $0xc20] sm:$0xf]
    %v443 = vld [vmem:[#allocation2 + $0xc28] sm:$0xf]
    %v444 = vld [vmem:[#allocation2 + $0xc30] sm:$0xf]
    %v445 = vld [vmem:[#allocation2 + $0xc38] sm:$0xf]
    %v446 = vld [vmem:[#allocation2 + $0xc40] sm:$0xf]
    %v447 = vld [vmem:[#allocation2 + $0xc48] sm:$0xf]
    %v448 = vld [vmem:[#allocation2 + $0xc50] sm:$0xf]
    %v449 = vld [vmem:[#allocation2 + $0xc58] sm:$0xf]
    %v450 = vld [vmem:[#allocation2 + $0xc60] sm:$0xf]
    %v451 = vld [vmem:[#allocation2 + $0xc68] sm:$0xf]
    %v452 = vld [vmem:[#allocation2 + $0xc70] sm:$0xf]
    %v453 = vld [vmem:[#allocation2 + $0xc78] sm:$0xf]
    %v454 = vpack.c.bf16 %v70, %v54
    %v455 = vpack.c.bf16 %v71, %v55
    %v456 = vpack.c.bf16 %v72, %v56
    %v457 = vpack.c.bf16 %v73, %v57
    %v458 = vpack.c.bf16 %v74, %v58
    %v459 = vpack.c.bf16 %v75, %v59
    %v460 = vpack.c.bf16 %v76, %v60
    %v461 = vpack.c.bf16 %v77, %v61
    %v462 = vpack.c.bf16 %v78, %v62
    %v463 = vpack.c.bf16 %v79, %v63
    %v464 = vpack.c.bf16 %v80, %v64
    %v465 = vpack.c.bf16 %v81, %v65
    %v466 = vpack.c.bf16 %v82, %v66
    %v467 = vpack.c.bf16 %v83, %v67
    %v468 = vpack.c.bf16 %v84, %v68
    %v469 = vpack.c.bf16 %v85, %v69
    %v470 = vpack.c.bf16 %v102, %v86
    %v471 = vpack.c.bf16 %v103, %v87
    %v472 = vpack.c.bf16 %v104, %v88
    %v473 = vpack.c.bf16 %v105, %v89
    %v474 = vpack.c.bf16 %v106, %v90
    %v475 = vpack.c.bf16 %v107, %v91
    %v476 = vpack.c.bf16 %v108, %v92
    %v477 = vpack.c.bf16 %v109, %v93
    %v478 = vpack.c.bf16 %v110, %v94
    %v479 = vpack.c.bf16 %v111, %v95
    %v480 = vpack.c.bf16 %v112, %v96
    %v481 = vpack.c.bf16 %v113, %v97
    %v482 = vpack.c.bf16 %v114, %v98
    %v483 = vpack.c.bf16 %v115, %v99
    %v484 = vpack.c.bf16 %v116, %v100
    %v485 = vpack.c.bf16 %v117, %v101
    %v486 = vpack.c.bf16 %v134, %v118
    %v487 = vpack.c.bf16 %v135, %v119
    %v488 = vpack.c.bf16 %v136, %v120
    %v489 = vpack.c.bf16 %v137, %v121
    %v490 = vpack.c.bf16 %v138, %v122
    %v491 = vpack.c.bf16 %v139, %v123
    %v492 = vpack.c.bf16 %v140, %v124
    %v493 = vpack.c.bf16 %v141, %v125
    %v494 = vpack.c.bf16 %v142, %v126
    %v495 = vpack.c.bf16 %v143, %v127
    %v496 = vpack.c.bf16 %v144, %v128
    %v497 = vpack.c.bf16 %v145, %v129
    %v498 = vpack.c.bf16 %v146, %v130
    %v499 = vpack.c.bf16 %v147, %v131
    %v500 = vpack.c.bf16 %v148, %v132
    %v501 = vpack.c.bf16 %v149, %v133
    %v502 = vpack.c.bf16 %v166, %v150
    %v503 = vpack.c.bf16 %v167, %v151
    %v504 = vpack.c.bf16 %v168, %v152
    %v505 = vpack.c.bf16 %v169, %v153
    %v506 = vpack.c.bf16 %v170, %v154
    %v507 = vpack.c.bf16 %v171, %v155
    %v508 = vpack.c.bf16 %v172, %v156
    %v509 = vpack.c.bf16 %v173, %v157
    %v510 = vpack.c.bf16 %v174, %v158
    %v511 = vpack.c.bf16 %v175, %v159
    %v512 = vpack.c.bf16 %v176, %v160
    %v513 = vpack.c.bf16 %v177, %v161
    %v514 = vpack.c.bf16 %v178, %v162
    %v515 = vpack.c.bf16 %v179, %v163
    %v516 = vpack.c.bf16 %v180, %v164
    %v517 = vpack.c.bf16 %v181, %v165
    %v518 = vpack.c.bf16 %v198, %v182
    %v519 = vpack.c.bf16 %v199, %v183
    %v520 = vpack.c.bf16 %v200, %v184
    %v521 = vpack.c.bf16 %v201, %v185
    %v522 = vpack.c.bf16 %v202, %v186
    %v523 = vpack.c.bf16 %v203, %v187
    %v524 = vpack.c.bf16 %v204, %v188
    %v525 = vpack.c.bf16 %v205, %v189
    %v526 = vpack.c.bf16 %v206, %v190
    %v527 = vpack.c.bf16 %v207, %v191
    %v528 = vpack.c.bf16 %v208, %v192
    %v529 = vpack.c.bf16 %v209, %v193
    %v530 = vpack.c.bf16 %v210, %v194
    %v531 = vpack.c.bf16 %v211, %v195
    %v532 = vpack.c.bf16 %v212, %v196
    %v533 = vpack.c.bf16 %v213, %v197
    %v534 = vpack.c.bf16 %v230, %v214
    %v535 = vpack.c.bf16 %v231, %v215
    %v536 = vpack.c.bf16 %v232, %v216
    %v537 = vpack.c.bf16 %v233, %v217
    %v538 = vpack.c.bf16 %v234, %v218
    %v539 = vpack.c.bf16 %v235, %v219
    %v540 = vpack.c.bf16 %v236, %v220
    %v541 = vpack.c.bf16 %v237, %v221
    %v542 = vpack.c.bf16 %v238, %v222
    %v543 = vpack.c.bf16 %v239, %v223
    %v544 = vpack.c.bf16 %v240, %v224
    %v545 = vpack.c.bf16 %v241, %v225
    %v546 = vpack.c.bf16 %v242, %v226
    %v547 = vpack.c.bf16 %v243, %v227
    %v548 = vpack.c.bf16 %v244, %v228
    %v549 = vpack.c.bf16 %v245, %v229
    %v550 = vpack.c.bf16 %v262, %v246
    %v551 = vpack.c.bf16 %v263, %v247
    %v552 = vpack.c.bf16 %v264, %v248
    %v553 = vpack.c.bf16 %v265, %v249
    %v554 = vpack.c.bf16 %v266, %v250
    %v555 = vpack.c.bf16 %v267, %v251
    %v556 = vpack.c.bf16 %v268, %v252
    %v557 = vpack.c.bf16 %v269, %v253
    %v558 = vpack.c.bf16 %v270, %v254
    %v559 = vpack.c.bf16 %v271, %v255
    %v560 = vpack.c.bf16 %v272, %v256
    %v561 = vpack.c.bf16 %v273, %v257
    %v562 = vpack.c.bf16 %v274, %v258
    %v563 = vpack.c.bf16 %v275, %v259
    %v564 = vpack.c.bf16 %v276, %v260
    %v565 = vpack.c.bf16 %v277, %v261
    %v566 = vpack.c.bf16 %v294, %v278
    %v567 = vpack.c.bf16 %v295, %v279
    %v568 = vpack.c.bf16 %v296, %v280
    %v569 = vpack.c.bf16 %v297, %v281
    %v570 = vpack.c.bf16 %v298, %v282
    %v571 = vpack.c.bf16 %v299, %v283
    %v572 = vpack.c.bf16 %v300, %v284
    %v573 = vpack.c.bf16 %v301, %v285
    %v574 = vpack.c.bf16 %v302, %v286
    %v575 = vpack.c.bf16 %v303, %v287
    %v576 = vpack.c.bf16 %v304, %v288
    %v577 = vpack.c.bf16 %v305, %v289
    %v578 = vpack.c.bf16 %v306, %v290
    %v579 = vpack.c.bf16 %v307, %v291
    %v580 = vpack.c.bf16 %v308, %v292
    %v581 = vpack.c.bf16 %v309, %v293
    %v582 = vpack.c.bf16 %v326, %v310
    %v583 = vpack.c.bf16 %v327, %v311
    %v584 = vpack.c.bf16 %v328, %v312
    %v585 = vpack.c.bf16 %v329, %v313
    %v586 = vpack.c.bf16 %v330, %v314
    %v587 = vpack.c.bf16 %v331, %v315
    %v588 = vpack.c.bf16 %v332, %v316
    %v589 = vpack.c.bf16 %v333, %v317
    %v590 = vpack.c.bf16 %v334, %v318
    %v591 = vpack.c.bf16 %v335, %v319
    %v592 = vpack.c.bf16 %v336, %v320
    %v593 = vpack.c.bf16 %v337, %v321
    %v594 = vpack.c.bf16 %v338, %v322
    %v595 = vpack.c.bf16 %v339, %v323
    %v596 = vpack.c.bf16 %v340, %v324
    %v597 = vpack.c.bf16 %v341, %v325
    %v598 = vpack.c.bf16 %v358, %v342
    %v599 = vpack.c.bf16 %v359, %v343
    %v600 = vpack.c.bf16 %v360, %v344
    %v601 = vpack.c.bf16 %v361, %v345
    %v602 = vpack.c.bf16 %v362, %v346
    %v603 = vpack.c.bf16 %v363, %v347
    %v604 = vpack.c.bf16 %v364, %v348
    %v605 = vpack.c.bf16 %v365, %v349
    %v606 = vpack.c.bf16 %v366, %v350
    %v607 = vpack.c.bf16 %v367, %v351
    %v608 = vpack.c.bf16 %v368, %v352
    %v609 = vpack.c.bf16 %v369, %v353
    %v610 = vpack.c.bf16 %v370, %v354
    %v611 = vpack.c.bf16 %v371, %v355
    %v612 = vpack.c.bf16 %v372, %v356
    %v613 = vpack.c.bf16 %v373, %v357
    %v614 = vpack.c.bf16 %v390, %v374
    %v615 = vpack.c.bf16 %v391, %v375
    %v616 = vpack.c.bf16 %v392, %v376
    %v617 = vpack.c.bf16 %v393, %v377
    %v618 = vpack.c.bf16 %v394, %v378
    %v619 = vpack.c.bf16 %v395, %v379
    %v620 = vpack.c.bf16 %v396, %v380
    %v621 = vpack.c.bf16 %v397, %v381
    %v622 = vpack.c.bf16 %v398, %v382
    %v623 = vpack.c.bf16 %v399, %v383
    %v624 = vpack.c.bf16 %v400, %v384
    %v625 = vpack.c.bf16 %v401, %v385
    %v626 = vpack.c.bf16 %v402, %v386
    %v627 = vpack.c.bf16 %v403, %v387
    %v628 = vpack.c.bf16 %v404, %v388
    %v629 = vpack.c.bf16 %v405, %v389
    %v630 = vpack.c.bf16 %v422, %v406
    %v631 = vpack.c.bf16 %v423, %v407
    %v632 = vpack.c.bf16 %v424, %v408
    %v633 = vpack.c.bf16 %v425, %v409
    %v634 = vpack.c.bf16 %v426, %v410
    %v635 = vpack.c.bf16 %v427, %v411
    %v636 = vpack.c.bf16 %v428, %v412
    %v637 = vpack.c.bf16 %v429, %v413
    %v638 = vpack.c.bf16 %v430, %v414
    %v639 = vpack.c.bf16 %v431, %v415
    %v640 = vpack.c.bf16 %v432, %v416
    %v641 = vpack.c.bf16 %v433, %v417
    %v642 = vpack.c.bf16 %v434, %v418
    %v643 = vpack.c.bf16 %v435, %v419
    %v644 = vpack.c.bf16 %v436, %v420
    %v645 = vpack.c.bf16 %v437, %v421
    %v646 = vpack.c.bf16 %v438, %v438
    %v647 = vpack.c.bf16 %v439, %v439
    %v648 = vpack.c.bf16 %v440, %v440
    %v649 = vpack.c.bf16 %v441, %v441
    %v650 = vpack.c.bf16 %v442, %v442
    %v651 = vpack.c.bf16 %v443, %v443
    %v652 = vpack.c.bf16 %v444, %v444
    %v653 = vpack.c.bf16 %v445, %v445
    %v654 = vpack.c.bf16 %v446, %v446
    %v655 = vpack.c.bf16 %v447, %v447
    %v656 = vpack.c.bf16 %v448, %v448
    %v657 = vpack.c.bf16 %v449, %v449
    %v658 = vpack.c.bf16 %v450, %v450
    %v659 = vpack.c.bf16 %v451, %v451
    %v660 = vpack.c.bf16 %v452, %v452
    %v661 = vpack.c.bf16 %v453, %v453
    %v662 = vld [vmem:[#allocation5] sm:$0xff]
    %v663 = vld [vmem:[#allocation5 + $0x8] sm:$0xff]
    %v664 = vld [vmem:[#allocation5 + $0x10] sm:$0xff]
    %v665 = vld [vmem:[#allocation5 + $0x18] sm:$0xff]
    %v666 = vld [vmem:[#allocation5 + $0x20] sm:$0xff]
    %v667 = vld [vmem:[#allocation5 + $0x28] sm:$0xff]
    %v668 = vld [vmem:[#allocation5 + $0x30] sm:$0xff]
    %v669 = vld [vmem:[#allocation5 + $0x38] sm:$0xff]
    %v670 = vld [vmem:[#allocation5 + $0x40] sm:$0xff]
    %v671 = vld [vmem:[#allocation5 + $0x48] sm:$0xff]
    %v672 = vld [vmem:[#allocation5 + $0x50] sm:$0xff]
    %v673 = vld [vmem:[#allocation5 + $0x58] sm:$0xff]
    %v674 = vld [vmem:[#allocation5 + $0x60] sm:$0xff]
    %v675 = vld [vmem:[#allocation5 + $0x68] sm:$0xff]
    %v676 = vld [vmem:[#allocation5 + $0x70] sm:$0xff]
    %v677 = vld [vmem:[#allocation5 + $0x78] sm:$0xff]
    %v678 = vld [vmem:[#allocation5 + $0x80] sm:$0xff]
    %v679 = vld [vmem:[#allocation5 + $0x88] sm:$0xff]
    %v680 = vld [vmem:[#allocation5 + $0x90] sm:$0xff]
    %v681 = vld [vmem:[#allocation5 + $0x98] sm:$0xff]
    %v682 = vld [vmem:[#allocation5 + $0xa0] sm:$0xff]
    %v683 = vld [vmem:[#allocation5 + $0xa8] sm:$0xff]
    %v684 = vld [vmem:[#allocation5 + $0xb0] sm:$0xff]
    %v685 = vld [vmem:[#allocation5 + $0xb8] sm:$0xff]
    %v686 = vld [vmem:[#allocation5 + $0xc0] sm:$0xff]
    %v687 = vld [vmem:[#allocation5 + $0xc8] sm:$0xff]
    %v688 = vld [vmem:[#allocation5 + $0xd0] sm:$0xff]
    %v689 = vld [vmem:[#allocation5 + $0xd8] sm:$0xff]
    %v690 = vld [vmem:[#allocation5 + $0xe0] sm:$0xff]
    %v691 = vld [vmem:[#allocation5 + $0xe8] sm:$0xff]
    %v692 = vld [vmem:[#allocation5 + $0xf0] sm:$0xff]
    %v693 = vld [vmem:[#allocation5 + $0xf8] sm:$0xff]
    %v694 = vld [vmem:[#allocation5 + $0x100] sm:$0xff]
    %v695 = vld [vmem:[#allocation5 + $0x108] sm:$0xff]
    %v696 = vld [vmem:[#allocation5 + $0x110] sm:$0xff]
    %v697 = vld [vmem:[#allocation5 + $0x118] sm:$0xff]
    %v698 = vld [vmem:[#allocation5 + $0x120] sm:$0xff]
    %v699 = vld [vmem:[#allocation5 + $0x128] sm:$0xff]
    %v700 = vld [vmem:[#allocation5 + $0x130] sm:$0xff]
    %v701 = vld [vmem:[#allocation5 + $0x138] sm:$0xff]
    %v702 = vld [vmem:[#allocation5 + $0x140] sm:$0xff]
    %v703 = vld [vmem:[#allocation5 + $0x148] sm:$0xff]
    %v704 = vld [vmem:[#allocation5 + $0x150] sm:$0xff]
    %v705 = vld [vmem:[#allocation5 + $0x158] sm:$0xff]
    %v706 = vld [vmem:[#allocation5 + $0x160] sm:$0xff]
    %v707 = vld [vmem:[#allocation5 + $0x168] sm:$0xff]
    %v708 = vld [vmem:[#allocation5 + $0x170] sm:$0xff]
    %v709 = vld [vmem:[#allocation5 + $0x178] sm:$0xff]
    %v710 = vld [vmem:[#allocation5 + $0x180] sm:$0xff]
    %v711 = vld [vmem:[#allocation5 + $0x188] sm:$0xff]
    %v712 = vld [vmem:[#allocation5 + $0x190] sm:$0xff]
    %v713 = vld [vmem:[#allocation5 + $0x198] sm:$0xff]
    %v714 = vld [vmem:[#allocation5 + $0x1a0] sm:$0xff]
    %v715 = vld [vmem:[#allocation5 + $0x1a8] sm:$0xff]
    %v716 = vld [vmem:[#allocation5 + $0x1b0] sm:$0xff]
    %v717 = vld [vmem:[#allocation5 + $0x1b8] sm:$0xff]
    %v718 = vld [vmem:[#allocation5 + $0x1c0] sm:$0xff]
    %v719 = vld [vmem:[#allocation5 + $0x1c8] sm:$0xff]
    %v720 = vld [vmem:[#allocation5 + $0x1d0] sm:$0xff]
    %v721 = vld [vmem:[#allocation5 + $0x1d8] sm:$0xff]
    %v722 = vld [vmem:[#allocation5 + $0x1e0] sm:$0xff]
    %v723 = vld [vmem:[#allocation5 + $0x1e8] sm:$0xff]
    %v724 = vld [vmem:[#allocation5 + $0x1f0] sm:$0xff]
    %v725 = vld [vmem:[#allocation5 + $0x1f8] sm:$0xff]
    %v726 = vld [vmem:[#allocation5 + $0x200] sm:$0xff]
    %v727 = vld [vmem:[#allocation5 + $0x208] sm:$0xff]
    %v728 = vld [vmem:[#allocation5 + $0x210] sm:$0xff]
    %v729 = vld [vmem:[#allocation5 + $0x218] sm:$0xff]
    %v730 = vld [vmem:[#allocation5 + $0x220] sm:$0xff]
    %v731 = vld [vmem:[#allocation5 + $0x228] sm:$0xff]
    %v732 = vld [vmem:[#allocation5 + $0x230] sm:$0xff]
    %v733 = vld [vmem:[#allocation5 + $0x238] sm:$0xff]
    %v734 = vld [vmem:[#allocation5 + $0x240] sm:$0xff]
    %v735 = vld [vmem:[#allocation5 + $0x248] sm:$0xff]
    %v736 = vld [vmem:[#allocation5 + $0x250] sm:$0xff]
    %v737 = vld [vmem:[#allocation5 + $0x258] sm:$0xff]
    %v738 = vld [vmem:[#allocation5 + $0x260] sm:$0xff]
    %v739 = vld [vmem:[#allocation5 + $0x268] sm:$0xff]
    %v740 = vld [vmem:[#allocation5 + $0x270] sm:$0xff]
    %v741 = vld [vmem:[#allocation5 + $0x278] sm:$0xff]
    %v742 = vld [vmem:[#allocation5 + $0x280] sm:$0xff]
    %v743 = vld [vmem:[#allocation5 + $0x288] sm:$0xff]
    %v744 = vld [vmem:[#allocation5 + $0x290] sm:$0xff]
    %v745 = vld [vmem:[#allocation5 + $0x298] sm:$0xff]
    %v746 = vld [vmem:[#allocation5 + $0x2a0] sm:$0xff]
    %v747 = vld [vmem:[#allocation5 + $0x2a8] sm:$0xff]
    %v748 = vld [vmem:[#allocation5 + $0x2b0] sm:$0xff]
    %v749 = vld [vmem:[#allocation5 + $0x2b8] sm:$0xff]
    %v750 = vld [vmem:[#allocation5 + $0x2c0] sm:$0xff]
    %v751 = vld [vmem:[#allocation5 + $0x2c8] sm:$0xff]
    %v752 = vld [vmem:[#allocation5 + $0x2d0] sm:$0xff]
    %v753 = vld [vmem:[#allocation5 + $0x2d8] sm:$0xff]
    %v754 = vld [vmem:[#allocation5 + $0x2e0] sm:$0xff]
    %v755 = vld [vmem:[#allocation5 + $0x2e8] sm:$0xff]
    %v756 = vld [vmem:[#allocation5 + $0x2f0] sm:$0xff]
    %v757 = vld [vmem:[#allocation5 + $0x2f8] sm:$0xff]
    %v758 = vld [vmem:[#allocation5 + $0x300] sm:$0xff]
    %v759 = vld [vmem:[#allocation5 + $0x308] sm:$0xff]
    %v760 = vld [vmem:[#allocation5 + $0x310] sm:$0xff]
    %v761 = vld [vmem:[#allocation5 + $0x318] sm:$0xff]
    %v762 = vld [vmem:[#allocation5 + $0x320] sm:$0xff]
    %v763 = vld [vmem:[#allocation5 + $0x328] sm:$0xff]
    %v764 = vld [vmem:[#allocation5 + $0x330] sm:$0xff]
    %v765 = vld [vmem:[#allocation5 + $0x338] sm:$0xff]
    %v766 = vld [vmem:[#allocation5 + $0x340] sm:$0xff]
    %v767 = vld [vmem:[#allocation5 + $0x348] sm:$0xff]
    %v768 = vld [vmem:[#allocation5 + $0x350] sm:$0xff]
    %v769 = vld [vmem:[#allocation5 + $0x358] sm:$0xff]
    %v770 = vld [vmem:[#allocation5 + $0x360] sm:$0xff]
    %v771 = vld [vmem:[#allocation5 + $0x368] sm:$0xff]
    %v772 = vld [vmem:[#allocation5 + $0x370] sm:$0xff]
    %v773 = vld [vmem:[#allocation5 + $0x378] sm:$0xff]
    %v774 = vld [vmem:[#allocation5 + $0x380] sm:$0xff]
    %v775 = vld [vmem:[#allocation5 + $0x388] sm:$0xff]
    %v776 = vld [vmem:[#allocation5 + $0x390] sm:$0xff]
    %v777 = vld [vmem:[#allocation5 + $0x398] sm:$0xff]
    %v778 = vld [vmem:[#allocation5 + $0x3a0] sm:$0xff]
    %v779 = vld [vmem:[#allocation5 + $0x3a8] sm:$0xff]
    %v780 = vld [vmem:[#allocation5 + $0x3b0] sm:$0xff]
    %v781 = vld [vmem:[#allocation5 + $0x3b8] sm:$0xff]
    %v782 = vld [vmem:[#allocation5 + $0x3c0] sm:$0xff]
    %v783 = vld [vmem:[#allocation5 + $0x3c8] sm:$0xff]
    %v784 = vld [vmem:[#allocation5 + $0x3d0] sm:$0xff]
    %v785 = vld [vmem:[#allocation5 + $0x3d8] sm:$0xff]
    %v786 = vld [vmem:[#allocation5 + $0x3e0] sm:$0xff]
    %v787 = vld [vmem:[#allocation5 + $0x3e8] sm:$0xff]
    %v788 = vld [vmem:[#allocation5 + $0x3f0] sm:$0xff]
    %v789 = vld [vmem:[#allocation5 + $0x3f8] sm:$0xff]
    %v790 = vld [vmem:[#allocation5 + $0x400] sm:$0xff]
    %v791 = vld [vmem:[#allocation5 + $0x408] sm:$0xff]
    %v792 = vld [vmem:[#allocation5 + $0x410] sm:$0xff]
    %v793 = vld [vmem:[#allocation5 + $0x418] sm:$0xff]
    %v794 = vld [vmem:[#allocation5 + $0x420] sm:$0xff]
    %v795 = vld [vmem:[#allocation5 + $0x428] sm:$0xff]
    %v796 = vld [vmem:[#allocation5 + $0x430] sm:$0xff]
    %v797 = vld [vmem:[#allocation5 + $0x438] sm:$0xff]
    %v798 = vld [vmem:[#allocation5 + $0x440] sm:$0xff]
    %v799 = vld [vmem:[#allocation5 + $0x448] sm:$0xff]
    %v800 = vld [vmem:[#allocation5 + $0x450] sm:$0xff]
    %v801 = vld [vmem:[#allocation5 + $0x458] sm:$0xff]
    %v802 = vld [vmem:[#allocation5 + $0x460] sm:$0xff]
    %v803 = vld [vmem:[#allocation5 + $0x468] sm:$0xff]
    %v804 = vld [vmem:[#allocation5 + $0x470] sm:$0xff]
    %v805 = vld [vmem:[#allocation5 + $0x478] sm:$0xff]
    %v806 = vld [vmem:[#allocation5 + $0x480] sm:$0xff]
    %v807 = vld [vmem:[#allocation5 + $0x488] sm:$0xff]
    %v808 = vld [vmem:[#allocation5 + $0x490] sm:$0xff]
    %v809 = vld [vmem:[#allocation5 + $0x498] sm:$0xff]
    %v810 = vld [vmem:[#allocation5 + $0x4a0] sm:$0xff]
    %v811 = vld [vmem:[#allocation5 + $0x4a8] sm:$0xff]
    %v812 = vld [vmem:[#allocation5 + $0x4b0] sm:$0xff]
    %v813 = vld [vmem:[#allocation5 + $0x4b8] sm:$0xff]
    %v814 = vld [vmem:[#allocation5 + $0x4c0] sm:$0xff]
    %v815 = vld [vmem:[#allocation5 + $0x4c8] sm:$0xff]
    %v816 = vld [vmem:[#allocation5 + $0x4d0] sm:$0xff]
    %v817 = vld [vmem:[#allocation5 + $0x4d8] sm:$0xff]
    %v818 = vld [vmem:[#allocation5 + $0x4e0] sm:$0xff]
    %v819 = vld [vmem:[#allocation5 + $0x4e8] sm:$0xff]
    %v820 = vld [vmem:[#allocation5 + $0x4f0] sm:$0xff]
    %v821 = vld [vmem:[#allocation5 + $0x4f8] sm:$0xff]
    %v822 = vld [vmem:[#allocation5 + $0x500] sm:$0xff]
    %v823 = vld [vmem:[#allocation5 + $0x508] sm:$0xff]
    %v824 = vld [vmem:[#allocation5 + $0x510] sm:$0xff]
    %v825 = vld [vmem:[#allocation5 + $0x518] sm:$0xff]
    %v826 = vld [vmem:[#allocation5 + $0x520] sm:$0xff]
    %v827 = vld [vmem:[#allocation5 + $0x528] sm:$0xff]
    %v828 = vld [vmem:[#allocation5 + $0x530] sm:$0xff]
    %v829 = vld [vmem:[#allocation5 + $0x538] sm:$0xff]
    %v830 = vld [vmem:[#allocation5 + $0x540] sm:$0xff]
    %v831 = vld [vmem:[#allocation5 + $0x548] sm:$0xff]
    %v832 = vld [vmem:[#allocation5 + $0x550] sm:$0xff]
    %v833 = vld [vmem:[#allocation5 + $0x558] sm:$0xff]
    %v834 = vld [vmem:[#allocation5 + $0x560] sm:$0xff]
    %v835 = vld [vmem:[#allocation5 + $0x568] sm:$0xff]
    %v836 = vld [vmem:[#allocation5 + $0x570] sm:$0xff]
    %v837 = vld [vmem:[#allocation5 + $0x578] sm:$0xff]
    %v838 = vld [vmem:[#allocation5 + $0x580] sm:$0xff]
    %v839 = vld [vmem:[#allocation5 + $0x588] sm:$0xff]
    %v840 = vld [vmem:[#allocation5 + $0x590] sm:$0xff]
    %v841 = vld [vmem:[#allocation5 + $0x598] sm:$0xff]
    %v842 = vld [vmem:[#allocation5 + $0x5a0] sm:$0xff]
    %v843 = vld [vmem:[#allocation5 + $0x5a8] sm:$0xff]
    %v844 = vld [vmem:[#allocation5 + $0x5b0] sm:$0xff]
    %v845 = vld [vmem:[#allocation5 + $0x5b8] sm:$0xff]
    %v846 = vld [vmem:[#allocation5 + $0x5c0] sm:$0xff]
    %v847 = vld [vmem:[#allocation5 + $0x5c8] sm:$0xff]
    %v848 = vld [vmem:[#allocation5 + $0x5d0] sm:$0xff]
    %v849 = vld [vmem:[#allocation5 + $0x5d8] sm:$0xff]
    %v850 = vld [vmem:[#allocation5 + $0x5e0] sm:$0xff]
    %v851 = vld [vmem:[#allocation5 + $0x5e8] sm:$0xff]
    %v852 = vld [vmem:[#allocation5 + $0x5f0] sm:$0xff]
    %v853 = vld [vmem:[#allocation5 + $0x5f8] sm:$0xff]
    %v854 = vld [vmem:[#allocation5 + $0x600] sm:$0xff]
    %v855 = vld [vmem:[#allocation5 + $0x608] sm:$0xff]
    %v856 = vld [vmem:[#allocation5 + $0x610] sm:$0xff]
    %v857 = vld [vmem:[#allocation5 + $0x618] sm:$0xff]
    %v858 = vld [vmem:[#allocation5 + $0x620] sm:$0xff]
    %v859 = vld [vmem:[#allocation5 + $0x628] sm:$0xff]
    %v860 = vld [vmem:[#allocation5 + $0x630] sm:$0xff]
    %v861 = vld [vmem:[#allocation5 + $0x638] sm:$0xff]
    %v862 = vld [vmem:[#allocation5 + $0x640] sm:$0xff]
    %v863 = vld [vmem:[#allocation5 + $0x648] sm:$0xff]
    %v864 = vld [vmem:[#allocation5 + $0x650] sm:$0xff]
    %v865 = vld [vmem:[#allocation5 + $0x658] sm:$0xff]
    %v866 = vld [vmem:[#allocation5 + $0x660] sm:$0xff]
    %v867 = vld [vmem:[#allocation5 + $0x668] sm:$0xff]
    %v868 = vld [vmem:[#allocation5 + $0x670] sm:$0xff]
    %v869 = vld [vmem:[#allocation5 + $0x678] sm:$0xff]
    %v870 = vld [vmem:[#allocation5 + $0x680] sm:$0xff]
    %v871 = vld [vmem:[#allocation5 + $0x688] sm:$0xff]
    %v872 = vld [vmem:[#allocation5 + $0x690] sm:$0xff]
    %v873 = vld [vmem:[#allocation5 + $0x698] sm:$0xff]
    %v874 = vld [vmem:[#allocation5 + $0x6a0] sm:$0xff]
    %v875 = vld [vmem:[#allocation5 + $0x6a8] sm:$0xff]
    %v876 = vld [vmem:[#allocation5 + $0x6b0] sm:$0xff]
    %v877 = vld [vmem:[#allocation5 + $0x6b8] sm:$0xff]
    %v878 = vld [vmem:[#allocation5 + $0x6c0] sm:$0xff]
    %v879 = vld [vmem:[#allocation5 + $0x6c8] sm:$0xff]
    %v880 = vld [vmem:[#allocation5 + $0x6d0] sm:$0xff]
    %v881 = vld [vmem:[#allocation5 + $0x6d8] sm:$0xff]
    %v882 = vld [vmem:[#allocation5 + $0x6e0] sm:$0xff]
    %v883 = vld [vmem:[#allocation5 + $0x6e8] sm:$0xff]
    %v884 = vld [vmem:[#allocation5 + $0x6f0] sm:$0xff]
    %v885 = vld [vmem:[#allocation5 + $0x6f8] sm:$0xff]
    %v886 = vld [vmem:[#allocation5 + $0x700] sm:$0xff]
    %v887 = vld [vmem:[#allocation5 + $0x708] sm:$0xff]
    %v888 = vld [vmem:[#allocation5 + $0x710] sm:$0xff]
    %v889 = vld [vmem:[#allocation5 + $0x718] sm:$0xff]
    %v890 = vld [vmem:[#allocation5 + $0x720] sm:$0xff]
    %v891 = vld [vmem:[#allocation5 + $0x728] sm:$0xff]
    %v892 = vld [vmem:[#allocation5 + $0x730] sm:$0xff]
    %v893 = vld [vmem:[#allocation5 + $0x738] sm:$0xff]
    %v894 = vld [vmem:[#allocation5 + $0x740] sm:$0xff]
    %v895 = vld [vmem:[#allocation5 + $0x748] sm:$0xff]
    %v896 = vld [vmem:[#allocation5 + $0x750] sm:$0xff]
    %v897 = vld [vmem:[#allocation5 + $0x758] sm:$0xff]
    %v898 = vld [vmem:[#allocation5 + $0x760] sm:$0xff]
    %v899 = vld [vmem:[#allocation5 + $0x768] sm:$0xff]
    %v900 = vld [vmem:[#allocation5 + $0x770] sm:$0xff]
    %v901 = vld [vmem:[#allocation5 + $0x778] sm:$0xff]
    %v902 = vld [vmem:[#allocation5 + $0x780] sm:$0xff]
    %v903 = vld [vmem:[#allocation5 + $0x788] sm:$0xff]
    %v904 = vld [vmem:[#allocation5 + $0x790] sm:$0xff]
    %v905 = vld [vmem:[#allocation5 + $0x798] sm:$0xff]
    %v906 = vld [vmem:[#allocation5 + $0x7a0] sm:$0xff]
    %v907 = vld [vmem:[#allocation5 + $0x7a8] sm:$0xff]
    %v908 = vld [vmem:[#allocation5 + $0x7b0] sm:$0xff]
    %v909 = vld [vmem:[#allocation5 + $0x7b8] sm:$0xff]
    %v910 = vld [vmem:[#allocation5 + $0x7c0] sm:$0xff]
    %v911 = vld [vmem:[#allocation5 + $0x7c8] sm:$0xff]
    %v912 = vld [vmem:[#allocation5 + $0x7d0] sm:$0xff]
    %v913 = vld [vmem:[#allocation5 + $0x7d8] sm:$0xff]
    %v914 = vld [vmem:[#allocation5 + $0x7e0] sm:$0xff]
    %v915 = vld [vmem:[#allocation5 + $0x7e8] sm:$0xff]
    %v916 = vld [vmem:[#allocation5 + $0x7f0] sm:$0xff]
    %v917 = vld [vmem:[#allocation5 + $0x7f8] sm:$0xff]
    %v918 = vld [vmem:[#allocation5 + $0x800] sm:$0xff]
    %v919 = vld [vmem:[#allocation5 + $0x808] sm:$0xff]
    %v920 = vld [vmem:[#allocation5 + $0x810] sm:$0xff]
    %v921 = vld [vmem:[#allocation5 + $0x818] sm:$0xff]
    %v922 = vld [vmem:[#allocation5 + $0x820] sm:$0xff]
    %v923 = vld [vmem:[#allocation5 + $0x828] sm:$0xff]
    %v924 = vld [vmem:[#allocation5 + $0x830] sm:$0xff]
    %v925 = vld [vmem:[#allocation5 + $0x838] sm:$0xff]
    %v926 = vld [vmem:[#allocation5 + $0x840] sm:$0xff]
    %v927 = vld [vmem:[#allocation5 + $0x848] sm:$0xff]
    %v928 = vld [vmem:[#allocation5 + $0x850] sm:$0xff]
    %v929 = vld [vmem:[#allocation5 + $0x858] sm:$0xff]
    %v930 = vld [vmem:[#allocation5 + $0x860] sm:$0xff]
    %v931 = vld [vmem:[#allocation5 + $0x868] sm:$0xff]
    %v932 = vld [vmem:[#allocation5 + $0x870] sm:$0xff]
    %v933 = vld [vmem:[#allocation5 + $0x878] sm:$0xff]
    %v934 = vld [vmem:[#allocation5 + $0x880] sm:$0xff]
    %v935 = vld [vmem:[#allocation5 + $0x888] sm:$0xff]
    %v936 = vld [vmem:[#allocation5 + $0x890] sm:$0xff]
    %v937 = vld [vmem:[#allocation5 + $0x898] sm:$0xff]
    %v938 = vld [vmem:[#allocation5 + $0x8a0] sm:$0xff]
    %v939 = vld [vmem:[#allocation5 + $0x8a8] sm:$0xff]
    %v940 = vld [vmem:[#allocation5 + $0x8b0] sm:$0xff]
    %v941 = vld [vmem:[#allocation5 + $0x8b8] sm:$0xff]
    %v942 = vld [vmem:[#allocation5 + $0x8c0] sm:$0xff]
    %v943 = vld [vmem:[#allocation5 + $0x8c8] sm:$0xff]
    %v944 = vld [vmem:[#allocation5 + $0x8d0] sm:$0xff]
    %v945 = vld [vmem:[#allocation5 + $0x8d8] sm:$0xff]
    %v946 = vld [vmem:[#allocation5 + $0x8e0] sm:$0xff]
    %v947 = vld [vmem:[#allocation5 + $0x8e8] sm:$0xff]
    %v948 = vld [vmem:[#allocation5 + $0x8f0] sm:$0xff]
    %v949 = vld [vmem:[#allocation5 + $0x8f8] sm:$0xff]
    %v950 = vld [vmem:[#allocation5 + $0x900] sm:$0xff]
    %v951 = vld [vmem:[#allocation5 + $0x908] sm:$0xff]
    %v952 = vld [vmem:[#allocation5 + $0x910] sm:$0xff]
    %v953 = vld [vmem:[#allocation5 + $0x918] sm:$0xff]
    %v954 = vld [vmem:[#allocation5 + $0x920] sm:$0xff]
    %v955 = vld [vmem:[#allocation5 + $0x928] sm:$0xff]
    %v956 = vld [vmem:[#allocation5 + $0x930] sm:$0xff]
    %v957 = vld [vmem:[#allocation5 + $0x938] sm:$0xff]
    %v958 = vld [vmem:[#allocation5 + $0x940] sm:$0xff]
    %v959 = vld [vmem:[#allocation5 + $0x948] sm:$0xff]
    %v960 = vld [vmem:[#allocation5 + $0x950] sm:$0xff]
    %v961 = vld [vmem:[#allocation5 + $0x958] sm:$0xff]
    %v962 = vld [vmem:[#allocation5 + $0x960] sm:$0xff]
    %v963 = vld [vmem:[#allocation5 + $0x968] sm:$0xff]
    %v964 = vld [vmem:[#allocation5 + $0x970] sm:$0xff]
    %v965 = vld [vmem:[#allocation5 + $0x978] sm:$0xff]
    %v966 = vld [vmem:[#allocation5 + $0x980] sm:$0xff]
    %v967 = vld [vmem:[#allocation5 + $0x988] sm:$0xff]
    %v968 = vld [vmem:[#allocation5 + $0x990] sm:$0xff]
    %v969 = vld [vmem:[#allocation5 + $0x998] sm:$0xff]
    %v970 = vld [vmem:[#allocation5 + $0x9a0] sm:$0xff]
    %v971 = vld [vmem:[#allocation5 + $0x9a8] sm:$0xff]
    %v972 = vld [vmem:[#allocation5 + $0x9b0] sm:$0xff]
    %v973 = vld [vmem:[#allocation5 + $0x9b8] sm:$0xff]
    %v974 = vld [vmem:[#allocation5 + $0x9c0] sm:$0xff]
    %v975 = vld [vmem:[#allocation5 + $0x9c8] sm:$0xff]
    %v976 = vld [vmem:[#allocation5 + $0x9d0] sm:$0xff]
    %v977 = vld [vmem:[#allocation5 + $0x9d8] sm:$0xff]
    %v978 = vld [vmem:[#allocation5 + $0x9e0] sm:$0xff]
    %v979 = vld [vmem:[#allocation5 + $0x9e8] sm:$0xff]
    %v980 = vld [vmem:[#allocation5 + $0x9f0] sm:$0xff]
    %v981 = vld [vmem:[#allocation5 + $0x9f8] sm:$0xff]
    %v982 = vld [vmem:[#allocation5 + $0xa00] sm:$0xff]
    %v983 = vld [vmem:[#allocation5 + $0xa08] sm:$0xff]
    %v984 = vld [vmem:[#allocation5 + $0xa10] sm:$0xff]
    %v985 = vld [vmem:[#allocation5 + $0xa18] sm:$0xff]
    %v986 = vld [vmem:[#allocation5 + $0xa20] sm:$0xff]
    %v987 = vld [vmem:[#allocation5 + $0xa28] sm:$0xff]
    %v988 = vld [vmem:[#allocation5 + $0xa30] sm:$0xff]
    %v989 = vld [vmem:[#allocation5 + $0xa38] sm:$0xff]
    %v990 = vld [vmem:[#allocation5 + $0xa40] sm:$0xff]
    %v991 = vld [vmem:[#allocation5 + $0xa48] sm:$0xff]
    %v992 = vld [vmem:[#allocation5 + $0xa50] sm:$0xff]
    %v993 = vld [vmem:[#allocation5 + $0xa58] sm:$0xff]
    %v994 = vld [vmem:[#allocation5 + $0xa60] sm:$0xff]
    %v995 = vld [vmem:[#allocation5 + $0xa68] sm:$0xff]
    %v996 = vld [vmem:[#allocation5 + $0xa70] sm:$0xff]
    %v997 = vld [vmem:[#allocation5 + $0xa78] sm:$0xff]
    %v998 = vld [vmem:[#allocation5 + $0xa80] sm:$0xff]
    %v999 = vld [vmem:[#allocation5 + $0xa88] sm:$0xff]
    %v1000 = vld [vmem:[#allocation5 + $0xa90] sm:$0xff]
    %v1001 = vld [vmem:[#allocation5 + $0xa98] sm:$0xff]
    %v1002 = vld [vmem:[#allocation5 + $0xaa0] sm:$0xff]
    %v1003 = vld [vmem:[#allocation5 + $0xaa8] sm:$0xff]
    %v1004 = vld [vmem:[#allocation5 + $0xab0] sm:$0xff]
    %v1005 = vld [vmem:[#allocation5 + $0xab8] sm:$0xff]
    %v1006 = vld [vmem:[#allocation5 + $0xac0] sm:$0xff]
    %v1007 = vld [vmem:[#allocation5 + $0xac8] sm:$0xff]
    %v1008 = vld [vmem:[#allocation5 + $0xad0] sm:$0xff]
    %v1009 = vld [vmem:[#allocation5 + $0xad8] sm:$0xff]
    %v1010 = vld [vmem:[#allocation5 + $0xae0] sm:$0xff]
    %v1011 = vld [vmem:[#allocation5 + $0xae8] sm:$0xff]
    %v1012 = vld [vmem:[#allocation5 + $0xaf0] sm:$0xff]
    %v1013 = vld [vmem:[#allocation5 + $0xaf8] sm:$0xff]
    %v1014 = vld [vmem:[#allocation5 + $0xb00] sm:$0xff]
    %v1015 = vld [vmem:[#allocation5 + $0xb08] sm:$0xff]
    %v1016 = vld [vmem:[#allocation5 + $0xb10] sm:$0xff]
    %v1017 = vld [vmem:[#allocation5 + $0xb18] sm:$0xff]
    %v1018 = vld [vmem:[#allocation5 + $0xb20] sm:$0xff]
    %v1019 = vld [vmem:[#allocation5 + $0xb28] sm:$0xff]
    %v1020 = vld [vmem:[#allocation5 + $0xb30] sm:$0xff]
    %v1021 = vld [vmem:[#allocation5 + $0xb38] sm:$0xff]
    %v1022 = vld [vmem:[#allocation5 + $0xb40] sm:$0xff]
    %v1023 = vld [vmem:[#allocation5 + $0xb48] sm:$0xff]
    %v1024 = vld [vmem:[#allocation5 + $0xb50] sm:$0xff]
    %v1025 = vld [vmem:[#allocation5 + $0xb58] sm:$0xff]
    %v1026 = vld [vmem:[#allocation5 + $0xb60] sm:$0xff]
    %v1027 = vld [vmem:[#allocation5 + $0xb68] sm:$0xff]
    %v1028 = vld [vmem:[#allocation5 + $0xb70] sm:$0xff]
    %v1029 = vld [vmem:[#allocation5 + $0xb78] sm:$0xff]
    %v1030 = vld [vmem:[#allocation5 + $0xb80] sm:$0xff]
    %v1031 = vld [vmem:[#allocation5 + $0xb88] sm:$0xff]
    %v1032 = vld [vmem:[#allocation5 + $0xb90] sm:$0xff]
    %v1033 = vld [vmem:[#allocation5 + $0xb98] sm:$0xff]
    %v1034 = vld [vmem:[#allocation5 + $0xba0] sm:$0xff]
    %v1035 = vld [vmem:[#allocation5 + $0xba8] sm:$0xff]
    %v1036 = vld [vmem:[#allocation5 + $0xbb0] sm:$0xff]
    %v1037 = vld [vmem:[#allocation5 + $0xbb8] sm:$0xff]
    %v1038 = vld [vmem:[#allocation5 + $0xbc0] sm:$0xff]
    %v1039 = vld [vmem:[#allocation5 + $0xbc8] sm:$0xff]
    %v1040 = vld [vmem:[#allocation5 + $0xbd0] sm:$0xff]
    %v1041 = vld [vmem:[#allocation5 + $0xbd8] sm:$0xff]
    %v1042 = vld [vmem:[#allocation5 + $0xbe0] sm:$0xff]
    %v1043 = vld [vmem:[#allocation5 + $0xbe8] sm:$0xff]
    %v1044 = vld [vmem:[#allocation5 + $0xbf0] sm:$0xff]
    %v1045 = vld [vmem:[#allocation5 + $0xbf8] sm:$0xff]
    %v1046 = vld [vmem:[#allocation5 + $0xc00] sm:$0xff]
    %v1047 = vld [vmem:[#allocation5 + $0xc08] sm:$0xff]
    %v1048 = vld [vmem:[#allocation5 + $0xc10] sm:$0xff]
    %v1049 = vld [vmem:[#allocation5 + $0xc18] sm:$0xff]
    %v1050 = vld [vmem:[#allocation5 + $0xc20] sm:$0xff]
    %v1051 = vld [vmem:[#allocation5 + $0xc28] sm:$0xff]
    %v1052 = vld [vmem:[#allocation5 + $0xc30] sm:$0xff]
    %v1053 = vld [vmem:[#allocation5 + $0xc38] sm:$0xff]
    %v1054 = vld [vmem:[#allocation5 + $0xc40] sm:$0xff]
    %v1055 = vld [vmem:[#allocation5 + $0xc48] sm:$0xff]
    %v1056 = vld [vmem:[#allocation5 + $0xc50] sm:$0xff]
    %v1057 = vld [vmem:[#allocation5 + $0xc58] sm:$0xff]
    %v1058 = vld [vmem:[#allocation5 + $0xc60] sm:$0xff]
    %v1059 = vld [vmem:[#allocation5 + $0xc68] sm:$0xff]
    %v1060 = vld [vmem:[#allocation5 + $0xc70] sm:$0xff]
    %v1061 = vld [vmem:[#allocation5 + $0xc78] sm:$0xff]
    %v1062 = vld [vmem:[#allocation5 + $0xc80] sm:$0xff]
    %v1063 = vld [vmem:[#allocation5 + $0xc88] sm:$0xff]
    %v1064 = vld [vmem:[#allocation5 + $0xc90] sm:$0xff]
    %v1065 = vld [vmem:[#allocation5 + $0xc98] sm:$0xff]
    %v1066 = vld [vmem:[#allocation5 + $0xca0] sm:$0xff]
    %v1067 = vld [vmem:[#allocation5 + $0xca8] sm:$0xff]
    %v1068 = vld [vmem:[#allocation5 + $0xcb0] sm:$0xff]
    %v1069 = vld [vmem:[#allocation5 + $0xcb8] sm:$0xff]
    %v1070 = vld [vmem:[#allocation5 + $0xcc0] sm:$0xff]
    %v1071 = vld [vmem:[#allocation5 + $0xcc8] sm:$0xff]
    %v1072 = vld [vmem:[#allocation5 + $0xcd0] sm:$0xff]
    %v1073 = vld [vmem:[#allocation5 + $0xcd8] sm:$0xff]
    %v1074 = vld [vmem:[#allocation5 + $0xce0] sm:$0xff]
    %v1075 = vld [vmem:[#allocation5 + $0xce8] sm:$0xff]
    %v1076 = vld [vmem:[#allocation5 + $0xcf0] sm:$0xff]
    %v1077 = vld [vmem:[#allocation5 + $0xcf8] sm:$0xff]
    %v1078 = vld [vmem:[#allocation5 + $0xd00] sm:$0xff]
    %v1079 = vld [vmem:[#allocation5 + $0xd08] sm:$0xff]
    %v1080 = vld [vmem:[#allocation5 + $0xd10] sm:$0xff]
    %v1081 = vld [vmem:[#allocation5 + $0xd18] sm:$0xff]
    %v1082 = vld [vmem:[#allocation5 + $0xd20] sm:$0xff]
    %v1083 = vld [vmem:[#allocation5 + $0xd28] sm:$0xff]
    %v1084 = vld [vmem:[#allocation5 + $0xd30] sm:$0xff]
    %v1085 = vld [vmem:[#allocation5 + $0xd38] sm:$0xff]
    %v1086 = vld [vmem:[#allocation5 + $0xd40] sm:$0xff]
    %v1087 = vld [vmem:[#allocation5 + $0xd48] sm:$0xff]
    %v1088 = vld [vmem:[#allocation5 + $0xd50] sm:$0xff]
    %v1089 = vld [vmem:[#allocation5 + $0xd58] sm:$0xff]
    %v1090 = vld [vmem:[#allocation5 + $0xd60] sm:$0xff]
    %v1091 = vld [vmem:[#allocation5 + $0xd68] sm:$0xff]
    %v1092 = vld [vmem:[#allocation5 + $0xd70] sm:$0xff]
    %v1093 = vld [vmem:[#allocation5 + $0xd78] sm:$0xff]
    %v1094 = vld [vmem:[#allocation5 + $0xd80] sm:$0xff]
    %v1095 = vld [vmem:[#allocation5 + $0xd88] sm:$0xff]
    %v1096 = vld [vmem:[#allocation5 + $0xd90] sm:$0xff]
    %v1097 = vld [vmem:[#allocation5 + $0xd98] sm:$0xff]
    %v1098 = vld [vmem:[#allocation5 + $0xda0] sm:$0xff]
    %v1099 = vld [vmem:[#allocation5 + $0xda8] sm:$0xff]
    %v1100 = vld [vmem:[#allocation5 + $0xdb0] sm:$0xff]
    %v1101 = vld [vmem:[#allocation5 + $0xdb8] sm:$0xff]
    %v1102 = vld [vmem:[#allocation5 + $0xdc0] sm:$0xff]
    %v1103 = vld [vmem:[#allocation5 + $0xdc8] sm:$0xff]
    %v1104 = vld [vmem:[#allocation5 + $0xdd0] sm:$0xff]
    %v1105 = vld [vmem:[#allocation5 + $0xdd8] sm:$0xff]
    %v1106 = vld [vmem:[#allocation5 + $0xde0] sm:$0xff]
    %v1107 = vld [vmem:[#allocation5 + $0xde8] sm:$0xff]
    %v1108 = vld [vmem:[#allocation5 + $0xdf0] sm:$0xff]
    %v1109 = vld [vmem:[#allocation5 + $0xdf8] sm:$0xff]
    %v1110 = vld [vmem:[#allocation5 + $0xe00] sm:$0xff]
    %v1111 = vld [vmem:[#allocation5 + $0xe08] sm:$0xff]
    %v1112 = vld [vmem:[#allocation5 + $0xe10] sm:$0xff]
    %v1113 = vld [vmem:[#allocation5 + $0xe18] sm:$0xff]
    %v1114 = vld [vmem:[#allocation5 + $0xe20] sm:$0xff]
    %v1115 = vld [vmem:[#allocation5 + $0xe28] sm:$0xff]
    %v1116 = vld [vmem:[#allocation5 + $0xe30] sm:$0xff]
    %v1117 = vld [vmem:[#allocation5 + $0xe38] sm:$0xff]
    %v1118 = vld [vmem:[#allocation5 + $0xe40] sm:$0xff]
    %v1119 = vld [vmem:[#allocation5 + $0xe48] sm:$0xff]
    %v1120 = vld [vmem:[#allocation5 + $0xe50] sm:$0xff]
    %v1121 = vld [vmem:[#allocation5 + $0xe58] sm:$0xff]
    %v1122 = vld [vmem:[#allocation5 + $0xe60] sm:$0xff]
    %v1123 = vld [vmem:[#allocation5 + $0xe68] sm:$0xff]
    %v1124 = vld [vmem:[#allocation5 + $0xe70] sm:$0xff]
    %v1125 = vld [vmem:[#allocation5 + $0xe78] sm:$0xff]
    %v1126 = vld [vmem:[#allocation5 + $0xe80] sm:$0xff]
    %v1127 = vld [vmem:[#allocation5 + $0xe88] sm:$0xff]
    %v1128 = vld [vmem:[#allocation5 + $0xe90] sm:$0xff]
    %v1129 = vld [vmem:[#allocation5 + $0xe98] sm:$0xff]
    %v1130 = vld [vmem:[#allocation5 + $0xea0] sm:$0xff]
    %v1131 = vld [vmem:[#allocation5 + $0xea8] sm:$0xff]
    %v1132 = vld [vmem:[#allocation5 + $0xeb0] sm:$0xff]
    %v1133 = vld [vmem:[#allocation5 + $0xeb8] sm:$0xff]
    %v1134 = vld [vmem:[#allocation5 + $0xec0] sm:$0xff]
    %v1135 = vld [vmem:[#allocation5 + $0xec8] sm:$0xff]
    %v1136 = vld [vmem:[#allocation5 + $0xed0] sm:$0xff]
    %v1137 = vld [vmem:[#allocation5 + $0xed8] sm:$0xff]
    %v1138 = vld [vmem:[#allocation5 + $0xee0] sm:$0xff]
    %v1139 = vld [vmem:[#allocation5 + $0xee8] sm:$0xff]
    %v1140 = vld [vmem:[#allocation5 + $0xef0] sm:$0xff]
    %v1141 = vld [vmem:[#allocation5 + $0xef8] sm:$0xff]
    %v1142 = vld [vmem:[#allocation5 + $0xf00] sm:$0xff]
    %v1143 = vld [vmem:[#allocation5 + $0xf08] sm:$0xff]
    %v1144 = vld [vmem:[#allocation5 + $0xf10] sm:$0xff]
    %v1145 = vld [vmem:[#allocation5 + $0xf18] sm:$0xff]
    %v1146 = vld [vmem:[#allocation5 + $0xf20] sm:$0xff]
    %v1147 = vld [vmem:[#allocation5 + $0xf28] sm:$0xff]
    %v1148 = vld [vmem:[#allocation5 + $0xf30] sm:$0xff]
    %v1149 = vld [vmem:[#allocation5 + $0xf38] sm:$0xff]
    %v1150 = vld [vmem:[#allocation5 + $0xf40] sm:$0xff]
    %v1151 = vld [vmem:[#allocation5 + $0xf48] sm:$0xff]
    %v1152 = vld [vmem:[#allocation5 + $0xf50] sm:$0xff]
    %v1153 = vld [vmem:[#allocation5 + $0xf58] sm:$0xff]
    %v1154 = vld [vmem:[#allocation5 + $0xf60] sm:$0xff]
    %v1155 = vld [vmem:[#allocation5 + $0xf68] sm:$0xff]
    %v1156 = vld [vmem:[#allocation5 + $0xf70] sm:$0xff]
    %v1157 = vld [vmem:[#allocation5 + $0xf78] sm:$0xff]
    %v1158 = vld [vmem:[#allocation5 + $0xf80] sm:$0xff]
    %v1159 = vld [vmem:[#allocation5 + $0xf88] sm:$0xff]
    %v1160 = vld [vmem:[#allocation5 + $0xf90] sm:$0xff]
    %v1161 = vld [vmem:[#allocation5 + $0xf98] sm:$0xff]
    %v1162 = vld [vmem:[#allocation5 + $0xfa0] sm:$0xff]
    %v1163 = vld [vmem:[#allocation5 + $0xfa8] sm:$0xff]
    %v1164 = vld [vmem:[#allocation5 + $0xfb0] sm:$0xff]
    %v1165 = vld [vmem:[#allocation5 + $0xfb8] sm:$0xff]
    %v1166 = vld [vmem:[#allocation5 + $0xfc0] sm:$0xff]
    %v1167 = vld [vmem:[#allocation5 + $0xfc8] sm:$0xff]
    %v1168 = vld [vmem:[#allocation5 + $0xfd0] sm:$0xff]
    %v1169 = vld [vmem:[#allocation5 + $0xfd8] sm:$0xff]
    %v1170 = vld [vmem:[#allocation5 + $0xfe0] sm:$0xff]
    %v1171 = vld [vmem:[#allocation5 + $0xfe8] sm:$0xff]
    %v1172 = vld [vmem:[#allocation5 + $0xff0] sm:$0xff]
    %v1173 = vld [vmem:[#allocation5 + $0xff8] sm:$0xff]
    %v1174 = vld [vmem:[#allocation7] sm:$0xf]
    %v1176 = vlaneseq
    %v1177 = vshrl.u32 %v1176, 7
    %v1178 = vsub.s32 0, %v1177
    %v1179 = vrot.slane %v1174, %v1178
    %v1180 = vlaneseq
    %v1181 = vshrl.u32 %v1180, 7
    %v1182 = vsub.s32 1, %v1181
    %v1183 = vrot.slane %v1174, %v1182
    %v1184 = vlaneseq
    %v1185 = vshrl.u32 %v1184, 7
    %v1186 = vsub.s32 2, %v1185
    %v1187 = vrot.slane %v1174, %v1186
    %v1188 = vlaneseq
    %v1189 = vshrl.u32 %v1188, 7
    %v1190 = vsub.s32 3, %v1189
    %v1191 = vrot.slane %v1174, %v1190
    %v1708 = vunpack.c.l.b16 %v662
    %v1709 = vunpack.c.h.b16 %v662
    %v1710 = vunpack.c.l.b16 %v663
    %v1711 = vunpack.c.h.b16 %v663
    %v1712 = vunpack.c.l.b16 %v664
    %v1713 = vunpack.c.h.b16 %v664
    %v1714 = vunpack.c.l.b16 %v665
    %v1715 = vunpack.c.h.b16 %v665
    %v1716 = vunpack.c.l.b16 %v666
    %v1717 = vunpack.c.h.b16 %v666
    %v1718 = vunpack.c.l.b16 %v667
    %v1719 = vunpack.c.h.b16 %v667
    %v1720 = vunpack.c.l.b16 %v668
    %v1721 = vunpack.c.h.b16 %v668
    %v1722 = vunpack.c.l.b16 %v669
    %v1723 = vunpack.c.h.b16 %v669
    %v1724 = vunpack.c.l.b16 %v670
    %v1725 = vunpack.c.h.b16 %v670
    %v1726 = vunpack.c.l.b16 %v671
    %v1727 = vunpack.c.h.b16 %v671
    %v1728 = vunpack.c.l.b16 %v672
    %v1729 = vunpack.c.h.b16 %v672
    %v1730 = vunpack.c.l.b16 %v673
    %v1731 = vunpack.c.h.b16 %v673
    %v1732 = vunpack.c.l.b16 %v674
    %v1733 = vunpack.c.h.b16 %v674
    %v1734 = vunpack.c.l.b16 %v675
    %v1735 = vunpack.c.h.b16 %v675
    %v1736 = vunpack.c.l.b16 %v676
    %v1737 = vunpack.c.h.b16 %v676
    %v1738 = vunpack.c.l.b16 %v677
    %v1739 = vunpack.c.h.b16 %v677
    %v1740 = vunpack.c.l.b16 %v678
    %v1741 = vunpack.c.h.b16 %v678
    %v1742 = vunpack.c.l.b16 %v679
    %v1743 = vunpack.c.h.b16 %v679
    %v1744 = vunpack.c.l.b16 %v680
    %v1745 = vunpack.c.h.b16 %v680
    %v1746 = vunpack.c.l.b16 %v681
    %v1747 = vunpack.c.h.b16 %v681
    %v1748 = vunpack.c.l.b16 %v682
    %v1749 = vunpack.c.h.b16 %v682
    %v1750 = vunpack.c.l.b16 %v683
    %v1751 = vunpack.c.h.b16 %v683
    %v1752 = vunpack.c.l.b16 %v684
    %v1753 = vunpack.c.h.b16 %v684
    %v1754 = vunpack.c.l.b16 %v685
    %v1755 = vunpack.c.h.b16 %v685
    %v1756 = vunpack.c.l.b16 %v686
    %v1757 = vunpack.c.h.b16 %v686
    %v1758 = vunpack.c.l.b16 %v687
    %v1759 = vunpack.c.h.b16 %v687
    %v1760 = vunpack.c.l.b16 %v688
    %v1761 = vunpack.c.h.b16 %v688
    %v1762 = vunpack.c.l.b16 %v689
    %v1763 = vunpack.c.h.b16 %v689
    %v1764 = vunpack.c.l.b16 %v690
    %v1765 = vunpack.c.h.b16 %v690
    %v1766 = vunpack.c.l.b16 %v691
    %v1767 = vunpack.c.h.b16 %v691
    %v1768 = vunpack.c.l.b16 %v692
    %v1769 = vunpack.c.h.b16 %v692
    %v1770 = vunpack.c.l.b16 %v693
    %v1771 = vunpack.c.h.b16 %v693
    %v1772 = vunpack.c.l.b16 %v694
    %v1773 = vunpack.c.h.b16 %v694
    %v1774 = vunpack.c.l.b16 %v695
    %v1775 = vunpack.c.h.b16 %v695
    %v1776 = vunpack.c.l.b16 %v696
    %v1777 = vunpack.c.h.b16 %v696
    %v1778 = vunpack.c.l.b16 %v697
    %v1779 = vunpack.c.h.b16 %v697
    %v1780 = vunpack.c.l.b16 %v698
    %v1781 = vunpack.c.h.b16 %v698
    %v1782 = vunpack.c.l.b16 %v699
    %v1783 = vunpack.c.h.b16 %v699
    %v1784 = vunpack.c.l.b16 %v700
    %v1785 = vunpack.c.h.b16 %v700
    %v1786 = vunpack.c.l.b16 %v701
    %v1787 = vunpack.c.h.b16 %v701
    %v1788 = vunpack.c.l.b16 %v702
    %v1789 = vunpack.c.h.b16 %v702
    %v1790 = vunpack.c.l.b16 %v703
    %v1791 = vunpack.c.h.b16 %v703
    %v1792 = vunpack.c.l.b16 %v704
    %v1793 = vunpack.c.h.b16 %v704
    %v1794 = vunpack.c.l.b16 %v705
    %v1795 = vunpack.c.h.b16 %v705
    %v1796 = vunpack.c.l.b16 %v706
    %v1797 = vunpack.c.h.b16 %v706
    %v1798 = vunpack.c.l.b16 %v707
    %v1799 = vunpack.c.h.b16 %v707
    %v1800 = vunpack.c.l.b16 %v708
    %v1801 = vunpack.c.h.b16 %v708
    %v1802 = vunpack.c.l.b16 %v709
    %v1803 = vunpack.c.h.b16 %v709
    %v1804 = vunpack.c.l.b16 %v710
    %v1805 = vunpack.c.h.b16 %v710
    %v1806 = vunpack.c.l.b16 %v711
    %v1807 = vunpack.c.h.b16 %v711
    %v1808 = vunpack.c.l.b16 %v712
    %v1809 = vunpack.c.h.b16 %v712
    %v1810 = vunpack.c.l.b16 %v713
    %v1811 = vunpack.c.h.b16 %v713
    %v1812 = vunpack.c.l.b16 %v714
    %v1813 = vunpack.c.h.b16 %v714
    %v1814 = vunpack.c.l.b16 %v715
    %v1815 = vunpack.c.h.b16 %v715
    %v1816 = vunpack.c.l.b16 %v716
    %v1817 = vunpack.c.h.b16 %v716
    %v1818 = vunpack.c.l.b16 %v717
    %v1819 = vunpack.c.h.b16 %v717
    %v1820 = vunpack.c.l.b16 %v718
    %v1821 = vunpack.c.h.b16 %v718
    %v1822 = vunpack.c.l.b16 %v719
    %v1823 = vunpack.c.h.b16 %v719
    %v1824 = vunpack.c.l.b16 %v720
    %v1825 = vunpack.c.h.b16 %v720
    %v1826 = vunpack.c.l.b16 %v721
    %v1827 = vunpack.c.h.b16 %v721
    %v1828 = vunpack.c.l.b16 %v722
    %v1829 = vunpack.c.h.b16 %v722
    %v1830 = vunpack.c.l.b16 %v723
    %v1831 = vunpack.c.h.b16 %v723
    %v1832 = vunpack.c.l.b16 %v724
    %v1833 = vunpack.c.h.b16 %v724
    %v1834 = vunpack.c.l.b16 %v725
    %v1835 = vunpack.c.h.b16 %v725
    %v1836 = vunpack.c.l.b16 %v726
    %v1837 = vunpack.c.h.b16 %v726
    %v1838 = vunpack.c.l.b16 %v727
    %v1839 = vunpack.c.h.b16 %v727
    %v1840 = vunpack.c.l.b16 %v728
    %v1841 = vunpack.c.h.b16 %v728
    %v1842 = vunpack.c.l.b16 %v729
    %v1843 = vunpack.c.h.b16 %v729
    %v1844 = vunpack.c.l.b16 %v730
    %v1845 = vunpack.c.h.b16 %v730
    %v1846 = vunpack.c.l.b16 %v731
    %v1847 = vunpack.c.h.b16 %v731
    %v1848 = vunpack.c.l.b16 %v732
    %v1849 = vunpack.c.h.b16 %v732
    %v1850 = vunpack.c.l.b16 %v733
    %v1851 = vunpack.c.h.b16 %v733
    %v1852 = vunpack.c.l.b16 %v734
    %v1853 = vunpack.c.h.b16 %v734
    %v1854 = vunpack.c.l.b16 %v735
    %v1855 = vunpack.c.h.b16 %v735
    %v1856 = vunpack.c.l.b16 %v736
    %v1857 = vunpack.c.h.b16 %v736
    %v1858 = vunpack.c.l.b16 %v737
    %v1859 = vunpack.c.h.b16 %v737
    %v1860 = vunpack.c.l.b16 %v738
    %v1861 = vunpack.c.h.b16 %v738
    %v1862 = vunpack.c.l.b16 %v739
    %v1863 = vunpack.c.h.b16 %v739
    %v1864 = vunpack.c.l.b16 %v740
    %v1865 = vunpack.c.h.b16 %v740
    %v1866 = vunpack.c.l.b16 %v741
    %v1867 = vunpack.c.h.b16 %v741
    %v1868 = vunpack.c.l.b16 %v742
    %v1869 = vunpack.c.h.b16 %v742
    %v1870 = vunpack.c.l.b16 %v743
    %v1871 = vunpack.c.h.b16 %v743
    %v1872 = vunpack.c.l.b16 %v744
    %v1873 = vunpack.c.h.b16 %v744
    %v1874 = vunpack.c.l.b16 %v745
    %v1875 = vunpack.c.h.b16 %v745
    %v1876 = vunpack.c.l.b16 %v746
    %v1877 = vunpack.c.h.b16 %v746
    %v1878 = vunpack.c.l.b16 %v747
    %v1879 = vunpack.c.h.b16 %v747
    %v1880 = vunpack.c.l.b16 %v748
    %v1881 = vunpack.c.h.b16 %v748
    %v1882 = vunpack.c.l.b16 %v749
    %v1883 = vunpack.c.h.b16 %v749
    %v1884 = vunpack.c.l.b16 %v750
    %v1885 = vunpack.c.h.b16 %v750
    %v1886 = vunpack.c.l.b16 %v751
    %v1887 = vunpack.c.h.b16 %v751
    %v1888 = vunpack.c.l.b16 %v752
    %v1889 = vunpack.c.h.b16 %v752
    %v1890 = vunpack.c.l.b16 %v753
    %v1891 = vunpack.c.h.b16 %v753
    %v1892 = vunpack.c.l.b16 %v754
    %v1893 = vunpack.c.h.b16 %v754
    %v1894 = vunpack.c.l.b16 %v755
    %v1895 = vunpack.c.h.b16 %v755
    %v1896 = vunpack.c.l.b16 %v756
    %v1897 = vunpack.c.h.b16 %v756
    %v1898 = vunpack.c.l.b16 %v757
    %v1899 = vunpack.c.h.b16 %v757
    %v1900 = vunpack.c.l.b16 %v758
    %v1901 = vunpack.c.h.b16 %v758
    %v1902 = vunpack.c.l.b16 %v759
    %v1903 = vunpack.c.h.b16 %v759
    %v1904 = vunpack.c.l.b16 %v760
    %v1905 = vunpack.c.h.b16 %v760
    %v1906 = vunpack.c.l.b16 %v761
    %v1907 = vunpack.c.h.b16 %v761
    %v1908 = vunpack.c.l.b16 %v762
    %v1909 = vunpack.c.h.b16 %v762
    %v1910 = vunpack.c.l.b16 %v763
    %v1911 = vunpack.c.h.b16 %v763
    %v1912 = vunpack.c.l.b16 %v764
    %v1913 = vunpack.c.h.b16 %v764
    %v1914 = vunpack.c.l.b16 %v765
    %v1915 = vunpack.c.h.b16 %v765
    %v1916 = vunpack.c.l.b16 %v766
    %v1917 = vunpack.c.h.b16 %v766
    %v1918 = vunpack.c.l.b16 %v767
    %v1919 = vunpack.c.h.b16 %v767
    %v1920 = vunpack.c.l.b16 %v768
    %v1921 = vunpack.c.h.b16 %v768
    %v1922 = vunpack.c.l.b16 %v769
    %v1923 = vunpack.c.h.b16 %v769
    %v1924 = vunpack.c.l.b16 %v770
    %v1925 = vunpack.c.h.b16 %v770
    %v1926 = vunpack.c.l.b16 %v771
    %v1927 = vunpack.c.h.b16 %v771
    %v1928 = vunpack.c.l.b16 %v772
    %v1929 = vunpack.c.h.b16 %v772
    %v1930 = vunpack.c.l.b16 %v773
    %v1931 = vunpack.c.h.b16 %v773
    %v1932 = vunpack.c.l.b16 %v774
    %v1933 = vunpack.c.h.b16 %v774
    %v1934 = vunpack.c.l.b16 %v775
    %v1935 = vunpack.c.h.b16 %v775
    %v1936 = vunpack.c.l.b16 %v776
    %v1937 = vunpack.c.h.b16 %v776
    %v1938 = vunpack.c.l.b16 %v777
    %v1939 = vunpack.c.h.b16 %v777
    %v1940 = vunpack.c.l.b16 %v778
    %v1941 = vunpack.c.h.b16 %v778
    %v1942 = vunpack.c.l.b16 %v779
    %v1943 = vunpack.c.h.b16 %v779
    %v1944 = vunpack.c.l.b16 %v780
    %v1945 = vunpack.c.h.b16 %v780
    %v1946 = vunpack.c.l.b16 %v781
    %v1947 = vunpack.c.h.b16 %v781
    %v1948 = vunpack.c.l.b16 %v782
    %v1949 = vunpack.c.h.b16 %v782
    %v1950 = vunpack.c.l.b16 %v783
    %v1951 = vunpack.c.h.b16 %v783
    %v1952 = vunpack.c.l.b16 %v784
    %v1953 = vunpack.c.h.b16 %v784
    %v1954 = vunpack.c.l.b16 %v785
    %v1955 = vunpack.c.h.b16 %v785
    %v1956 = vunpack.c.l.b16 %v786
    %v1957 = vunpack.c.h.b16 %v786
    %v1958 = vunpack.c.l.b16 %v787
    %v1959 = vunpack.c.h.b16 %v787
    %v1960 = vunpack.c.l.b16 %v788
    %v1961 = vunpack.c.h.b16 %v788
    %v1962 = vunpack.c.l.b16 %v789
    %v1963 = vunpack.c.h.b16 %v789
    %v1964 = vunpack.c.l.b16 %v790
    %v1965 = vunpack.c.h.b16 %v790
    %v1966 = vunpack.c.l.b16 %v791
    %v1967 = vunpack.c.h.b16 %v791
    %v1968 = vunpack.c.l.b16 %v792
    %v1969 = vunpack.c.h.b16 %v792
    %v1970 = vunpack.c.l.b16 %v793
    %v1971 = vunpack.c.h.b16 %v793
    %v1972 = vunpack.c.l.b16 %v794
    %v1973 = vunpack.c.h.b16 %v794
    %v1974 = vunpack.c.l.b16 %v795
    %v1975 = vunpack.c.h.b16 %v795
    %v1976 = vunpack.c.l.b16 %v796
    %v1977 = vunpack.c.h.b16 %v796
    %v1978 = vunpack.c.l.b16 %v797
    %v1979 = vunpack.c.h.b16 %v797
    %v1980 = vunpack.c.l.b16 %v798
    %v1981 = vunpack.c.h.b16 %v798
    %v1982 = vunpack.c.l.b16 %v799
    %v1983 = vunpack.c.h.b16 %v799
    %v1984 = vunpack.c.l.b16 %v800
    %v1985 = vunpack.c.h.b16 %v800
    %v1986 = vunpack.c.l.b16 %v801
    %v1987 = vunpack.c.h.b16 %v801
    %v1988 = vunpack.c.l.b16 %v802
    %v1989 = vunpack.c.h.b16 %v802
    %v1990 = vunpack.c.l.b16 %v803
    %v1991 = vunpack.c.h.b16 %v803
    %v1992 = vunpack.c.l.b16 %v804
    %v1993 = vunpack.c.h.b16 %v804
    %v1994 = vunpack.c.l.b16 %v805
    %v1995 = vunpack.c.h.b16 %v805
    %v1996 = vunpack.c.l.b16 %v806
    %v1997 = vunpack.c.h.b16 %v806
    %v1998 = vunpack.c.l.b16 %v807
    %v1999 = vunpack.c.h.b16 %v807
    %v2000 = vunpack.c.l.b16 %v808
    %v2001 = vunpack.c.h.b16 %v808
    %v2002 = vunpack.c.l.b16 %v809
    %v2003 = vunpack.c.h.b16 %v809
    %v2004 = vunpack.c.l.b16 %v810
    %v2005 = vunpack.c.h.b16 %v810
    %v2006 = vunpack.c.l.b16 %v811
    %v2007 = vunpack.c.h.b16 %v811
    %v2008 = vunpack.c.l.b16 %v812
    %v2009 = vunpack.c.h.b16 %v812
    %v2010 = vunpack.c.l.b16 %v813
    %v2011 = vunpack.c.h.b16 %v813
    %v2012 = vunpack.c.l.b16 %v814
    %v2013 = vunpack.c.h.b16 %v814
    %v2014 = vunpack.c.l.b16 %v815
    %v2015 = vunpack.c.h.b16 %v815
    %v2016 = vunpack.c.l.b16 %v816
    %v2017 = vunpack.c.h.b16 %v816
    %v2018 = vunpack.c.l.b16 %v817
    %v2019 = vunpack.c.h.b16 %v817
    %v2020 = vunpack.c.l.b16 %v818
    %v2021 = vunpack.c.h.b16 %v818
    %v2022 = vunpack.c.l.b16 %v819
    %v2023 = vunpack.c.h.b16 %v819
    %v2024 = vunpack.c.l.b16 %v820
    %v2025 = vunpack.c.h.b16 %v820
    %v2026 = vunpack.c.l.b16 %v821
    %v2027 = vunpack.c.h.b16 %v821
    %v2028 = vunpack.c.l.b16 %v822
    %v2029 = vunpack.c.h.b16 %v822
    %v2030 = vunpack.c.l.b16 %v823
    %v2031 = vunpack.c.h.b16 %v823
    %v2032 = vunpack.c.l.b16 %v824
    %v2033 = vunpack.c.h.b16 %v824
    %v2034 = vunpack.c.l.b16 %v825
    %v2035 = vunpack.c.h.b16 %v825
    %v2036 = vunpack.c.l.b16 %v826
    %v2037 = vunpack.c.h.b16 %v826
    %v2038 = vunpack.c.l.b16 %v827
    %v2039 = vunpack.c.h.b16 %v827
    %v2040 = vunpack.c.l.b16 %v828
    %v2041 = vunpack.c.h.b16 %v828
    %v2042 = vunpack.c.l.b16 %v829
    %v2043 = vunpack.c.h.b16 %v829
    %v2044 = vunpack.c.l.b16 %v830
    %v2045 = vunpack.c.h.b16 %v830
    %v2046 = vunpack.c.l.b16 %v831
    %v2047 = vunpack.c.h.b16 %v831
    %v2048 = vunpack.c.l.b16 %v832
    %v2049 = vunpack.c.h.b16 %v832
    %v2050 = vunpack.c.l.b16 %v833
    %v2051 = vunpack.c.h.b16 %v833
    %v2052 = vunpack.c.l.b16 %v834
    %v2053 = vunpack.c.h.b16 %v834
    %v2054 = vunpack.c.l.b16 %v835
    %v2055 = vunpack.c.h.b16 %v835
    %v2056 = vunpack.c.l.b16 %v836
    %v2057 = vunpack.c.h.b16 %v836
    %v2058 = vunpack.c.l.b16 %v837
    %v2059 = vunpack.c.h.b16 %v837
    %v2060 = vunpack.c.l.b16 %v838
    %v2061 = vunpack.c.h.b16 %v838
    %v2062 = vunpack.c.l.b16 %v839
    %v2063 = vunpack.c.h.b16 %v839
    %v2064 = vunpack.c.l.b16 %v840
    %v2065 = vunpack.c.h.b16 %v840
    %v2066 = vunpack.c.l.b16 %v841
    %v2067 = vunpack.c.h.b16 %v841
    %v2068 = vunpack.c.l.b16 %v842
    %v2069 = vunpack.c.h.b16 %v842
    %v2070 = vunpack.c.l.b16 %v843
    %v2071 = vunpack.c.h.b16 %v843
    %v2072 = vunpack.c.l.b16 %v844
    %v2073 = vunpack.c.h.b16 %v844
    %v2074 = vunpack.c.l.b16 %v845
    %v2075 = vunpack.c.h.b16 %v845
    %v2076 = vunpack.c.l.b16 %v846
    %v2077 = vunpack.c.h.b16 %v846
    %v2078 = vunpack.c.l.b16 %v847
    %v2079 = vunpack.c.h.b16 %v847
    %v2080 = vunpack.c.l.b16 %v848
    %v2081 = vunpack.c.h.b16 %v848
    %v2082 = vunpack.c.l.b16 %v849
    %v2083 = vunpack.c.h.b16 %v849
    %v2084 = vunpack.c.l.b16 %v850
    %v2085 = vunpack.c.h.b16 %v850
    %v2086 = vunpack.c.l.b16 %v851
    %v2087 = vunpack.c.h.b16 %v851
    %v2088 = vunpack.c.l.b16 %v852
    %v2089 = vunpack.c.h.b16 %v852
    %v2090 = vunpack.c.l.b16 %v853
    %v2091 = vunpack.c.h.b16 %v853
    %v2092 = vunpack.c.l.b16 %v854
    %v2093 = vunpack.c.h.b16 %v854
    %v2094 = vunpack.c.l.b16 %v855
    %v2095 = vunpack.c.h.b16 %v855
    %v2096 = vunpack.c.l.b16 %v856
    %v2097 = vunpack.c.h.b16 %v856
    %v2098 = vunpack.c.l.b16 %v857
    %v2099 = vunpack.c.h.b16 %v857
    %v2100 = vunpack.c.l.b16 %v858
    %v2101 = vunpack.c.h.b16 %v858
    %v2102 = vunpack.c.l.b16 %v859
    %v2103 = vunpack.c.h.b16 %v859
    %v2104 = vunpack.c.l.b16 %v860
    %v2105 = vunpack.c.h.b16 %v860
    %v2106 = vunpack.c.l.b16 %v861
    %v2107 = vunpack.c.h.b16 %v861
    %v2108 = vunpack.c.l.b16 %v862
    %v2109 = vunpack.c.h.b16 %v862
    %v2110 = vunpack.c.l.b16 %v863
    %v2111 = vunpack.c.h.b16 %v863
    %v2112 = vunpack.c.l.b16 %v864
    %v2113 = vunpack.c.h.b16 %v864
    %v2114 = vunpack.c.l.b16 %v865
    %v2115 = vunpack.c.h.b16 %v865
    %v2116 = vunpack.c.l.b16 %v866
    %v2117 = vunpack.c.h.b16 %v866
    %v2118 = vunpack.c.l.b16 %v867
    %v2119 = vunpack.c.h.b16 %v867
    %v2120 = vunpack.c.l.b16 %v868
    %v2121 = vunpack.c.h.b16 %v868
    %v2122 = vunpack.c.l.b16 %v869
    %v2123 = vunpack.c.h.b16 %v869
    %v2124 = vunpack.c.l.b16 %v870
    %v2125 = vunpack.c.h.b16 %v870
    %v2126 = vunpack.c.l.b16 %v871
    %v2127 = vunpack.c.h.b16 %v871
    %v2128 = vunpack.c.l.b16 %v872
    %v2129 = vunpack.c.h.b16 %v872
    %v2130 = vunpack.c.l.b16 %v873
    %v2131 = vunpack.c.h.b16 %v873
    %v2132 = vunpack.c.l.b16 %v874
    %v2133 = vunpack.c.h.b16 %v874
    %v2134 = vunpack.c.l.b16 %v875
    %v2135 = vunpack.c.h.b16 %v875
    %v2136 = vunpack.c.l.b16 %v876
    %v2137 = vunpack.c.h.b16 %v876
    %v2138 = vunpack.c.l.b16 %v877
    %v2139 = vunpack.c.h.b16 %v877
    %v2140 = vunpack.c.l.b16 %v878
    %v2141 = vunpack.c.h.b16 %v878
    %v2142 = vunpack.c.l.b16 %v879
    %v2143 = vunpack.c.h.b16 %v879
    %v2144 = vunpack.c.l.b16 %v880
    %v2145 = vunpack.c.h.b16 %v880
    %v2146 = vunpack.c.l.b16 %v881
    %v2147 = vunpack.c.h.b16 %v881
    %v2148 = vunpack.c.l.b16 %v882
    %v2149 = vunpack.c.h.b16 %v882
    %v2150 = vunpack.c.l.b16 %v883
    %v2151 = vunpack.c.h.b16 %v883
    %v2152 = vunpack.c.l.b16 %v884
    %v2153 = vunpack.c.h.b16 %v884
    %v2154 = vunpack.c.l.b16 %v885
    %v2155 = vunpack.c.h.b16 %v885
    %v2156 = vunpack.c.l.b16 %v886
    %v2157 = vunpack.c.h.b16 %v886
    %v2158 = vunpack.c.l.b16 %v887
    %v2159 = vunpack.c.h.b16 %v887
    %v2160 = vunpack.c.l.b16 %v888
    %v2161 = vunpack.c.h.b16 %v888
    %v2162 = vunpack.c.l.b16 %v889
    %v2163 = vunpack.c.h.b16 %v889
    %v2164 = vunpack.c.l.b16 %v890
    %v2165 = vunpack.c.h.b16 %v890
    %v2166 = vunpack.c.l.b16 %v891
    %v2167 = vunpack.c.h.b16 %v891
    %v2168 = vunpack.c.l.b16 %v892
    %v2169 = vunpack.c.h.b16 %v892
    %v2170 = vunpack.c.l.b16 %v893
    %v2171 = vunpack.c.h.b16 %v893
    %v2172 = vunpack.c.l.b16 %v894
    %v2173 = vunpack.c.h.b16 %v894
    %v2174 = vunpack.c.l.b16 %v895
    %v2175 = vunpack.c.h.b16 %v895
    %v2176 = vunpack.c.l.b16 %v896
    %v2177 = vunpack.c.h.b16 %v896
    %v2178 = vunpack.c.l.b16 %v897
    %v2179 = vunpack.c.h.b16 %v897
    %v2180 = vunpack.c.l.b16 %v898
    %v2181 = vunpack.c.h.b16 %v898
    %v2182 = vunpack.c.l.b16 %v899
    %v2183 = vunpack.c.h.b16 %v899
    %v2184 = vunpack.c.l.b16 %v900
    %v2185 = vunpack.c.h.b16 %v900
    %v2186 = vunpack.c.l.b16 %v901
    %v2187 = vunpack.c.h.b16 %v901
    %v2188 = vunpack.c.l.b16 %v902
    %v2189 = vunpack.c.h.b16 %v902
    %v2190 = vunpack.c.l.b16 %v903
    %v2191 = vunpack.c.h.b16 %v903
    %v2192 = vunpack.c.l.b16 %v904
    %v2193 = vunpack.c.h.b16 %v904
    %v2194 = vunpack.c.l.b16 %v905
    %v2195 = vunpack.c.h.b16 %v905
    %v2196 = vunpack.c.l.b16 %v906
    %v2197 = vunpack.c.h.b16 %v906
    %v2198 = vunpack.c.l.b16 %v907
    %v2199 = vunpack.c.h.b16 %v907
    %v2200 = vunpack.c.l.b16 %v908
    %v2201 = vunpack.c.h.b16 %v908
    %v2202 = vunpack.c.l.b16 %v909
    %v2203 = vunpack.c.h.b16 %v909
    %v2204 = vunpack.c.l.b16 %v910
    %v2205 = vunpack.c.h.b16 %v910
    %v2206 = vunpack.c.l.b16 %v911
    %v2207 = vunpack.c.h.b16 %v911
    %v2208 = vunpack.c.l.b16 %v912
    %v2209 = vunpack.c.h.b16 %v912
    %v2210 = vunpack.c.l.b16 %v913
    %v2211 = vunpack.c.h.b16 %v913
    %v2212 = vunpack.c.l.b16 %v914
    %v2213 = vunpack.c.h.b16 %v914
    %v2214 = vunpack.c.l.b16 %v915
    %v2215 = vunpack.c.h.b16 %v915
    %v2216 = vunpack.c.l.b16 %v916
    %v2217 = vunpack.c.h.b16 %v916
    %v2218 = vunpack.c.l.b16 %v917
    %v2219 = vunpack.c.h.b16 %v917
    %v2220 = vunpack.c.l.b16 %v918
    %v2221 = vunpack.c.h.b16 %v918
    %v2222 = vunpack.c.l.b16 %v919
    %v2223 = vunpack.c.h.b16 %v919
    %v2224 = vunpack.c.l.b16 %v920
    %v2225 = vunpack.c.h.b16 %v920
    %v2226 = vunpack.c.l.b16 %v921
    %v2227 = vunpack.c.h.b16 %v921
    %v2228 = vunpack.c.l.b16 %v922
    %v2229 = vunpack.c.h.b16 %v922
    %v2230 = vunpack.c.l.b16 %v923
    %v2231 = vunpack.c.h.b16 %v923
    %v2232 = vunpack.c.l.b16 %v924
    %v2233 = vunpack.c.h.b16 %v924
    %v2234 = vunpack.c.l.b16 %v925
    %v2235 = vunpack.c.h.b16 %v925
    %v2236 = vunpack.c.l.b16 %v926
    %v2237 = vunpack.c.h.b16 %v926
    %v2238 = vunpack.c.l.b16 %v927
    %v2239 = vunpack.c.h.b16 %v927
    %v2240 = vunpack.c.l.b16 %v928
    %v2241 = vunpack.c.h.b16 %v928
    %v2242 = vunpack.c.l.b16 %v929
    %v2243 = vunpack.c.h.b16 %v929
    %v2244 = vunpack.c.l.b16 %v930
    %v2245 = vunpack.c.h.b16 %v930
    %v2246 = vunpack.c.l.b16 %v931
    %v2247 = vunpack.c.h.b16 %v931
    %v2248 = vunpack.c.l.b16 %v932
    %v2249 = vunpack.c.h.b16 %v932
    %v2250 = vunpack.c.l.b16 %v933
    %v2251 = vunpack.c.h.b16 %v933
    %v2252 = vunpack.c.l.b16 %v934
    %v2253 = vunpack.c.h.b16 %v934
    %v2254 = vunpack.c.l.b16 %v935
    %v2255 = vunpack.c.h.b16 %v935
    %v2256 = vunpack.c.l.b16 %v936
    %v2257 = vunpack.c.h.b16 %v936
    %v2258 = vunpack.c.l.b16 %v937
    %v2259 = vunpack.c.h.b16 %v937
    %v2260 = vunpack.c.l.b16 %v938
    %v2261 = vunpack.c.h.b16 %v938
    %v2262 = vunpack.c.l.b16 %v939
    %v2263 = vunpack.c.h.b16 %v939
    %v2264 = vunpack.c.l.b16 %v940
    %v2265 = vunpack.c.h.b16 %v940
    %v2266 = vunpack.c.l.b16 %v941
    %v2267 = vunpack.c.h.b16 %v941
    %v2268 = vunpack.c.l.b16 %v942
    %v2269 = vunpack.c.h.b16 %v942
    %v2270 = vunpack.c.l.b16 %v943
    %v2271 = vunpack.c.h.b16 %v943
    %v2272 = vunpack.c.l.b16 %v944
    %v2273 = vunpack.c.h.b16 %v944
    %v2274 = vunpack.c.l.b16 %v945
    %v2275 = vunpack.c.h.b16 %v945
    %v2276 = vunpack.c.l.b16 %v946
    %v2277 = vunpack.c.h.b16 %v946
    %v2278 = vunpack.c.l.b16 %v947
    %v2279 = vunpack.c.h.b16 %v947
    %v2280 = vunpack.c.l.b16 %v948
    %v2281 = vunpack.c.h.b16 %v948
    %v2282 = vunpack.c.l.b16 %v949
    %v2283 = vunpack.c.h.b16 %v949
    %v2284 = vunpack.c.l.b16 %v950
    %v2285 = vunpack.c.h.b16 %v950
    %v2286 = vunpack.c.l.b16 %v951
    %v2287 = vunpack.c.h.b16 %v951
    %v2288 = vunpack.c.l.b16 %v952
    %v2289 = vunpack.c.h.b16 %v952
    %v2290 = vunpack.c.l.b16 %v953
    %v2291 = vunpack.c.h.b16 %v953
    %v2292 = vunpack.c.l.b16 %v954
    %v2293 = vunpack.c.h.b16 %v954
    %v2294 = vunpack.c.l.b16 %v955
    %v2295 = vunpack.c.h.b16 %v955
    %v2296 = vunpack.c.l.b16 %v956
    %v2297 = vunpack.c.h.b16 %v956
    %v2298 = vunpack.c.l.b16 %v957
    %v2299 = vunpack.c.h.b16 %v957
    %v2300 = vunpack.c.l.b16 %v958
    %v2301 = vunpack.c.h.b16 %v958
    %v2302 = vunpack.c.l.b16 %v959
    %v2303 = vunpack.c.h.b16 %v959
    %v2304 = vunpack.c.l.b16 %v960
    %v2305 = vunpack.c.h.b16 %v960
    %v2306 = vunpack.c.l.b16 %v961
    %v2307 = vunpack.c.h.b16 %v961
    %v2308 = vunpack.c.l.b16 %v962
    %v2309 = vunpack.c.h.b16 %v962
    %v2310 = vunpack.c.l.b16 %v963
    %v2311 = vunpack.c.h.b16 %v963
    %v2312 = vunpack.c.l.b16 %v964
    %v2313 = vunpack.c.h.b16 %v964
    %v2314 = vunpack.c.l.b16 %v965
    %v2315 = vunpack.c.h.b16 %v965
    %v2316 = vunpack.c.l.b16 %v966
    %v2317 = vunpack.c.h.b16 %v966
    %v2318 = vunpack.c.l.b16 %v967
    %v2319 = vunpack.c.h.b16 %v967
    %v2320 = vunpack.c.l.b16 %v968
    %v2321 = vunpack.c.h.b16 %v968
    %v2322 = vunpack.c.l.b16 %v969
    %v2323 = vunpack.c.h.b16 %v969
    %v2324 = vunpack.c.l.b16 %v970
    %v2325 = vunpack.c.h.b16 %v970
    %v2326 = vunpack.c.l.b16 %v971
    %v2327 = vunpack.c.h.b16 %v971
    %v2328 = vunpack.c.l.b16 %v972
    %v2329 = vunpack.c.h.b16 %v972
    %v2330 = vunpack.c.l.b16 %v973
    %v2331 = vunpack.c.h.b16 %v973
    %v2332 = vunpack.c.l.b16 %v974
    %v2333 = vunpack.c.h.b16 %v974
    %v2334 = vunpack.c.l.b16 %v975
    %v2335 = vunpack.c.h.b16 %v975
    %v2336 = vunpack.c.l.b16 %v976
    %v2337 = vunpack.c.h.b16 %v976
    %v2338 = vunpack.c.l.b16 %v977
    %v2339 = vunpack.c.h.b16 %v977
    %v2340 = vunpack.c.l.b16 %v978
    %v2341 = vunpack.c.h.b16 %v978
    %v2342 = vunpack.c.l.b16 %v979
    %v2343 = vunpack.c.h.b16 %v979
    %v2344 = vunpack.c.l.b16 %v980
    %v2345 = vunpack.c.h.b16 %v980
    %v2346 = vunpack.c.l.b16 %v981
    %v2347 = vunpack.c.h.b16 %v981
    %v2348 = vunpack.c.l.b16 %v982
    %v2349 = vunpack.c.h.b16 %v982
    %v2350 = vunpack.c.l.b16 %v983
    %v2351 = vunpack.c.h.b16 %v983
    %v2352 = vunpack.c.l.b16 %v984
    %v2353 = vunpack.c.h.b16 %v984
    %v2354 = vunpack.c.l.b16 %v985
    %v2355 = vunpack.c.h.b16 %v985
    %v2356 = vunpack.c.l.b16 %v986
    %v2357 = vunpack.c.h.b16 %v986
    %v2358 = vunpack.c.l.b16 %v987
    %v2359 = vunpack.c.h.b16 %v987
    %v2360 = vunpack.c.l.b16 %v988
    %v2361 = vunpack.c.h.b16 %v988
    %v2362 = vunpack.c.l.b16 %v989
    %v2363 = vunpack.c.h.b16 %v989
    %v2364 = vunpack.c.l.b16 %v990
    %v2365 = vunpack.c.h.b16 %v990
    %v2366 = vunpack.c.l.b16 %v991
    %v2367 = vunpack.c.h.b16 %v991
    %v2368 = vunpack.c.l.b16 %v992
    %v2369 = vunpack.c.h.b16 %v992
    %v2370 = vunpack.c.l.b16 %v993
    %v2371 = vunpack.c.h.b16 %v993
    %v2372 = vunpack.c.l.b16 %v994
    %v2373 = vunpack.c.h.b16 %v994
    %v2374 = vunpack.c.l.b16 %v995
    %v2375 = vunpack.c.h.b16 %v995
    %v2376 = vunpack.c.l.b16 %v996
    %v2377 = vunpack.c.h.b16 %v996
    %v2378 = vunpack.c.l.b16 %v997
    %v2379 = vunpack.c.h.b16 %v997
    %v2380 = vunpack.c.l.b16 %v998
    %v2381 = vunpack.c.h.b16 %v998
    %v2382 = vunpack.c.l.b16 %v999
    %v2383 = vunpack.c.h.b16 %v999
    %v2384 = vunpack.c.l.b16 %v1000
    %v2385 = vunpack.c.h.b16 %v1000
    %v2386 = vunpack.c.l.b16 %v1001
    %v2387 = vunpack.c.h.b16 %v1001
    %v2388 = vunpack.c.l.b16 %v1002
    %v2389 = vunpack.c.h.b16 %v1002
    %v2390 = vunpack.c.l.b16 %v1003
    %v2391 = vunpack.c.h.b16 %v1003
    %v2392 = vunpack.c.l.b16 %v1004
    %v2393 = vunpack.c.h.b16 %v1004
    %v2394 = vunpack.c.l.b16 %v1005
    %v2395 = vunpack.c.h.b16 %v1005
    %v2396 = vunpack.c.l.b16 %v1006
    %v2397 = vunpack.c.h.b16 %v1006
    %v2398 = vunpack.c.l.b16 %v1007
    %v2399 = vunpack.c.h.b16 %v1007
    %v2400 = vunpack.c.l.b16 %v1008
    %v2401 = vunpack.c.h.b16 %v1008
    %v2402 = vunpack.c.l.b16 %v1009
    %v2403 = vunpack.c.h.b16 %v1009
    %v2404 = vunpack.c.l.b16 %v1010
    %v2405 = vunpack.c.h.b16 %v1010
    %v2406 = vunpack.c.l.b16 %v1011
    %v2407 = vunpack.c.h.b16 %v1011
    %v2408 = vunpack.c.l.b16 %v1012
    %v2409 = vunpack.c.h.b16 %v1012
    %v2410 = vunpack.c.l.b16 %v1013
    %v2411 = vunpack.c.h.b16 %v1013
    %v2412 = vunpack.c.l.b16 %v1014
    %v2413 = vunpack.c.h.b16 %v1014
    %v2414 = vunpack.c.l.b16 %v1015
    %v2415 = vunpack.c.h.b16 %v1015
    %v2416 = vunpack.c.l.b16 %v1016
    %v2417 = vunpack.c.h.b16 %v1016
    %v2418 = vunpack.c.l.b16 %v1017
    %v2419 = vunpack.c.h.b16 %v1017
    %v2420 = vunpack.c.l.b16 %v1018
    %v2421 = vunpack.c.h.b16 %v1018
    %v2422 = vunpack.c.l.b16 %v1019
    %v2423 = vunpack.c.h.b16 %v1019
    %v2424 = vunpack.c.l.b16 %v1020
    %v2425 = vunpack.c.h.b16 %v1020
    %v2426 = vunpack.c.l.b16 %v1021
    %v2427 = vunpack.c.h.b16 %v1021
    %v2428 = vunpack.c.l.b16 %v1022
    %v2429 = vunpack.c.h.b16 %v1022
    %v2430 = vunpack.c.l.b16 %v1023
    %v2431 = vunpack.c.h.b16 %v1023
    %v2432 = vunpack.c.l.b16 %v1024
    %v2433 = vunpack.c.h.b16 %v1024
    %v2434 = vunpack.c.l.b16 %v1025
    %v2435 = vunpack.c.h.b16 %v1025
    %v2436 = vunpack.c.l.b16 %v1026
    %v2437 = vunpack.c.h.b16 %v1026
    %v2438 = vunpack.c.l.b16 %v1027
    %v2439 = vunpack.c.h.b16 %v1027
    %v2440 = vunpack.c.l.b16 %v1028
    %v2441 = vunpack.c.h.b16 %v1028
    %v2442 = vunpack.c.l.b16 %v1029
    %v2443 = vunpack.c.h.b16 %v1029
    %v2444 = vunpack.c.l.b16 %v1030
    %v2445 = vunpack.c.h.b16 %v1030
    %v2446 = vunpack.c.l.b16 %v1031
    %v2447 = vunpack.c.h.b16 %v1031
    %v2448 = vunpack.c.l.b16 %v1032
    %v2449 = vunpack.c.h.b16 %v1032
    %v2450 = vunpack.c.l.b16 %v1033
    %v2451 = vunpack.c.h.b16 %v1033
    %v2452 = vunpack.c.l.b16 %v1034
    %v2453 = vunpack.c.h.b16 %v1034
    %v2454 = vunpack.c.l.b16 %v1035
    %v2455 = vunpack.c.h.b16 %v1035
    %v2456 = vunpack.c.l.b16 %v1036
    %v2457 = vunpack.c.h.b16 %v1036
    %v2458 = vunpack.c.l.b16 %v1037
    %v2459 = vunpack.c.h.b16 %v1037
    %v2460 = vunpack.c.l.b16 %v1038
    %v2461 = vunpack.c.h.b16 %v1038
    %v2462 = vunpack.c.l.b16 %v1039
    %v2463 = vunpack.c.h.b16 %v1039
    %v2464 = vunpack.c.l.b16 %v1040
    %v2465 = vunpack.c.h.b16 %v1040
    %v2466 = vunpack.c.l.b16 %v1041
    %v2467 = vunpack.c.h.b16 %v1041
    %v2468 = vunpack.c.l.b16 %v1042
    %v2469 = vunpack.c.h.b16 %v1042
    %v2470 = vunpack.c.l.b16 %v1043
    %v2471 = vunpack.c.h.b16 %v1043
    %v2472 = vunpack.c.l.b16 %v1044
    %v2473 = vunpack.c.h.b16 %v1044
    %v2474 = vunpack.c.l.b16 %v1045
    %v2475 = vunpack.c.h.b16 %v1045
    %v2476 = vunpack.c.l.b16 %v1046
    %v2477 = vunpack.c.h.b16 %v1046
    %v2478 = vunpack.c.l.b16 %v1047
    %v2479 = vunpack.c.h.b16 %v1047
    %v2480 = vunpack.c.l.b16 %v1048
    %v2481 = vunpack.c.h.b16 %v1048
    %v2482 = vunpack.c.l.b16 %v1049
    %v2483 = vunpack.c.h.b16 %v1049
    %v2484 = vunpack.c.l.b16 %v1050
    %v2485 = vunpack.c.h.b16 %v1050
    %v2486 = vunpack.c.l.b16 %v1051
    %v2487 = vunpack.c.h.b16 %v1051
    %v2488 = vunpack.c.l.b16 %v1052
    %v2489 = vunpack.c.h.b16 %v1052
    %v2490 = vunpack.c.l.b16 %v1053
    %v2491 = vunpack.c.h.b16 %v1053
    %v2492 = vunpack.c.l.b16 %v1054
    %v2493 = vunpack.c.h.b16 %v1054
    %v2494 = vunpack.c.l.b16 %v1055
    %v2495 = vunpack.c.h.b16 %v1055
    %v2496 = vunpack.c.l.b16 %v1056
    %v2497 = vunpack.c.h.b16 %v1056
    %v2498 = vunpack.c.l.b16 %v1057
    %v2499 = vunpack.c.h.b16 %v1057
    %v2500 = vunpack.c.l.b16 %v1058
    %v2501 = vunpack.c.h.b16 %v1058
    %v2502 = vunpack.c.l.b16 %v1059
    %v2503 = vunpack.c.h.b16 %v1059
    %v2504 = vunpack.c.l.b16 %v1060
    %v2505 = vunpack.c.h.b16 %v1060
    %v2506 = vunpack.c.l.b16 %v1061
    %v2507 = vunpack.c.h.b16 %v1061
    %v2508 = vunpack.c.l.b16 %v1062
    %v2509 = vunpack.c.h.b16 %v1062
    %v2510 = vunpack.c.l.b16 %v1063
    %v2511 = vunpack.c.h.b16 %v1063
    %v2512 = vunpack.c.l.b16 %v1064
    %v2513 = vunpack.c.h.b16 %v1064
    %v2514 = vunpack.c.l.b16 %v1065
    %v2515 = vunpack.c.h.b16 %v1065
    %v2516 = vunpack.c.l.b16 %v1066
    %v2517 = vunpack.c.h.b16 %v1066
    %v2518 = vunpack.c.l.b16 %v1067
    %v2519 = vunpack.c.h.b16 %v1067
    %v2520 = vunpack.c.l.b16 %v1068
    %v2521 = vunpack.c.h.b16 %v1068
    %v2522 = vunpack.c.l.b16 %v1069
    %v2523 = vunpack.c.h.b16 %v1069
    %v2524 = vunpack.c.l.b16 %v1070
    %v2525 = vunpack.c.h.b16 %v1070
    %v2526 = vunpack.c.l.b16 %v1071
    %v2527 = vunpack.c.h.b16 %v1071
    %v2528 = vunpack.c.l.b16 %v1072
    %v2529 = vunpack.c.h.b16 %v1072
    %v2530 = vunpack.c.l.b16 %v1073
    %v2531 = vunpack.c.h.b16 %v1073
    %v2532 = vunpack.c.l.b16 %v1074
    %v2533 = vunpack.c.h.b16 %v1074
    %v2534 = vunpack.c.l.b16 %v1075
    %v2535 = vunpack.c.h.b16 %v1075
    %v2536 = vunpack.c.l.b16 %v1076
    %v2537 = vunpack.c.h.b16 %v1076
    %v2538 = vunpack.c.l.b16 %v1077
    %v2539 = vunpack.c.h.b16 %v1077
    %v2540 = vunpack.c.l.b16 %v1078
    %v2541 = vunpack.c.h.b16 %v1078
    %v2542 = vunpack.c.l.b16 %v1079
    %v2543 = vunpack.c.h.b16 %v1079
    %v2544 = vunpack.c.l.b16 %v1080
    %v2545 = vunpack.c.h.b16 %v1080
    %v2546 = vunpack.c.l.b16 %v1081
    %v2547 = vunpack.c.h.b16 %v1081
    %v2548 = vunpack.c.l.b16 %v1082
    %v2549 = vunpack.c.h.b16 %v1082
    %v2550 = vunpack.c.l.b16 %v1083
    %v2551 = vunpack.c.h.b16 %v1083
    %v2552 = vunpack.c.l.b16 %v1084
    %v2553 = vunpack.c.h.b16 %v1084
    %v2554 = vunpack.c.l.b16 %v1085
    %v2555 = vunpack.c.h.b16 %v1085
    %v2556 = vunpack.c.l.b16 %v1086
    %v2557 = vunpack.c.h.b16 %v1086
    %v2558 = vunpack.c.l.b16 %v1087
    %v2559 = vunpack.c.h.b16 %v1087
    %v2560 = vunpack.c.l.b16 %v1088
    %v2561 = vunpack.c.h.b16 %v1088
    %v2562 = vunpack.c.l.b16 %v1089
    %v2563 = vunpack.c.h.b16 %v1089
    %v2564 = vunpack.c.l.b16 %v1090
    %v2565 = vunpack.c.h.b16 %v1090
    %v2566 = vunpack.c.l.b16 %v1091
    %v2567 = vunpack.c.h.b16 %v1091
    %v2568 = vunpack.c.l.b16 %v1092
    %v2569 = vunpack.c.h.b16 %v1092
    %v2570 = vunpack.c.l.b16 %v1093
    %v2571 = vunpack.c.h.b16 %v1093
    %v2572 = vunpack.c.l.b16 %v1094
    %v2573 = vunpack.c.h.b16 %v1094
    %v2574 = vunpack.c.l.b16 %v1095
    %v2575 = vunpack.c.h.b16 %v1095
    %v2576 = vunpack.c.l.b16 %v1096
    %v2577 = vunpack.c.h.b16 %v1096
    %v2578 = vunpack.c.l.b16 %v1097
    %v2579 = vunpack.c.h.b16 %v1097
    %v2580 = vunpack.c.l.b16 %v1098
    %v2581 = vunpack.c.h.b16 %v1098
    %v2582 = vunpack.c.l.b16 %v1099
    %v2583 = vunpack.c.h.b16 %v1099
    %v2584 = vunpack.c.l.b16 %v1100
    %v2585 = vunpack.c.h.b16 %v1100
    %v2586 = vunpack.c.l.b16 %v1101
    %v2587 = vunpack.c.h.b16 %v1101
    %v2588 = vunpack.c.l.b16 %v1102
    %v2589 = vunpack.c.h.b16 %v1102
    %v2590 = vunpack.c.l.b16 %v1103
    %v2591 = vunpack.c.h.b16 %v1103
    %v2592 = vunpack.c.l.b16 %v1104
    %v2593 = vunpack.c.h.b16 %v1104
    %v2594 = vunpack.c.l.b16 %v1105
    %v2595 = vunpack.c.h.b16 %v1105
    %v2596 = vunpack.c.l.b16 %v1106
    %v2597 = vunpack.c.h.b16 %v1106
    %v2598 = vunpack.c.l.b16 %v1107
    %v2599 = vunpack.c.h.b16 %v1107
    %v2600 = vunpack.c.l.b16 %v1108
    %v2601 = vunpack.c.h.b16 %v1108
    %v2602 = vunpack.c.l.b16 %v1109
    %v2603 = vunpack.c.h.b16 %v1109
    %v2604 = vunpack.c.l.b16 %v1110
    %v2605 = vunpack.c.h.b16 %v1110
    %v2606 = vunpack.c.l.b16 %v1111
    %v2607 = vunpack.c.h.b16 %v1111
    %v2608 = vunpack.c.l.b16 %v1112
    %v2609 = vunpack.c.h.b16 %v1112
    %v2610 = vunpack.c.l.b16 %v1113
    %v2611 = vunpack.c.h.b16 %v1113
    %v2612 = vunpack.c.l.b16 %v1114
    %v2613 = vunpack.c.h.b16 %v1114
    %v2614 = vunpack.c.l.b16 %v1115
    %v2615 = vunpack.c.h.b16 %v1115
    %v2616 = vunpack.c.l.b16 %v1116
    %v2617 = vunpack.c.h.b16 %v1116
    %v2618 = vunpack.c.l.b16 %v1117
    %v2619 = vunpack.c.h.b16 %v1117
    %v2620 = vunpack.c.l.b16 %v1118
    %v2621 = vunpack.c.h.b16 %v1118
    %v2622 = vunpack.c.l.b16 %v1119
    %v2623 = vunpack.c.h.b16 %v1119
    %v2624 = vunpack.c.l.b16 %v1120
    %v2625 = vunpack.c.h.b16 %v1120
    %v2626 = vunpack.c.l.b16 %v1121
    %v2627 = vunpack.c.h.b16 %v1121
    %v2628 = vunpack.c.l.b16 %v1122
    %v2629 = vunpack.c.h.b16 %v1122
    %v2630 = vunpack.c.l.b16 %v1123
    %v2631 = vunpack.c.h.b16 %v1123
    %v2632 = vunpack.c.l.b16 %v1124
    %v2633 = vunpack.c.h.b16 %v1124
    %v2634 = vunpack.c.l.b16 %v1125
    %v2635 = vunpack.c.h.b16 %v1125
    %v2636 = vunpack.c.l.b16 %v1126
    %v2637 = vunpack.c.h.b16 %v1126
    %v2638 = vunpack.c.l.b16 %v1127
    %v2639 = vunpack.c.h.b16 %v1127
    %v2640 = vunpack.c.l.b16 %v1128
    %v2641 = vunpack.c.h.b16 %v1128
    %v2642 = vunpack.c.l.b16 %v1129
    %v2643 = vunpack.c.h.b16 %v1129
    %v2644 = vunpack.c.l.b16 %v1130
    %v2645 = vunpack.c.h.b16 %v1130
    %v2646 = vunpack.c.l.b16 %v1131
    %v2647 = vunpack.c.h.b16 %v1131
    %v2648 = vunpack.c.l.b16 %v1132
    %v2649 = vunpack.c.h.b16 %v1132
    %v2650 = vunpack.c.l.b16 %v1133
    %v2651 = vunpack.c.h.b16 %v1133
    %v2652 = vunpack.c.l.b16 %v1134
    %v2653 = vunpack.c.h.b16 %v1134
    %v2654 = vunpack.c.l.b16 %v1135
    %v2655 = vunpack.c.h.b16 %v1135
    %v2656 = vunpack.c.l.b16 %v1136
    %v2657 = vunpack.c.h.b16 %v1136
    %v2658 = vunpack.c.l.b16 %v1137
    %v2659 = vunpack.c.h.b16 %v1137
    %v2660 = vunpack.c.l.b16 %v1138
    %v2661 = vunpack.c.h.b16 %v1138
    %v2662 = vunpack.c.l.b16 %v1139
    %v2663 = vunpack.c.h.b16 %v1139
    %v2664 = vunpack.c.l.b16 %v1140
    %v2665 = vunpack.c.h.b16 %v1140
    %v2666 = vunpack.c.l.b16 %v1141
    %v2667 = vunpack.c.h.b16 %v1141
    %v2668 = vunpack.c.l.b16 %v1142
    %v2669 = vunpack.c.h.b16 %v1142
    %v2670 = vunpack.c.l.b16 %v1143
    %v2671 = vunpack.c.h.b16 %v1143
    %v2672 = vunpack.c.l.b16 %v1144
    %v2673 = vunpack.c.h.b16 %v1144
    %v2674 = vunpack.c.l.b16 %v1145
    %v2675 = vunpack.c.h.b16 %v1145
    %v2676 = vunpack.c.l.b16 %v1146
    %v2677 = vunpack.c.h.b16 %v1146
    %v2678 = vunpack.c.l.b16 %v1147
    %v2679 = vunpack.c.h.b16 %v1147
    %v2680 = vunpack.c.l.b16 %v1148
    %v2681 = vunpack.c.h.b16 %v1148
    %v2682 = vunpack.c.l.b16 %v1149
    %v2683 = vunpack.c.h.b16 %v1149
    %v2684 = vunpack.c.l.b16 %v1150
    %v2685 = vunpack.c.h.b16 %v1150
    %v2686 = vunpack.c.l.b16 %v1151
    %v2687 = vunpack.c.h.b16 %v1151
    %v2688 = vunpack.c.l.b16 %v1152
    %v2689 = vunpack.c.h.b16 %v1152
    %v2690 = vunpack.c.l.b16 %v1153
    %v2691 = vunpack.c.h.b16 %v1153
    %v2692 = vunpack.c.l.b16 %v1154
    %v2693 = vunpack.c.h.b16 %v1154
    %v2694 = vunpack.c.l.b16 %v1155
    %v2695 = vunpack.c.h.b16 %v1155
    %v2696 = vunpack.c.l.b16 %v1156
    %v2697 = vunpack.c.h.b16 %v1156
    %v2698 = vunpack.c.l.b16 %v1157
    %v2699 = vunpack.c.h.b16 %v1157
    %v2700 = vunpack.c.l.b16 %v1158
    %v2701 = vunpack.c.h.b16 %v1158
    %v2702 = vunpack.c.l.b16 %v1159
    %v2703 = vunpack.c.h.b16 %v1159
    %v2704 = vunpack.c.l.b16 %v1160
    %v2705 = vunpack.c.h.b16 %v1160
    %v2706 = vunpack.c.l.b16 %v1161
    %v2707 = vunpack.c.h.b16 %v1161
    %v2708 = vunpack.c.l.b16 %v1162
    %v2709 = vunpack.c.h.b16 %v1162
    %v2710 = vunpack.c.l.b16 %v1163
    %v2711 = vunpack.c.h.b16 %v1163
    %v2712 = vunpack.c.l.b16 %v1164
    %v2713 = vunpack.c.h.b16 %v1164
    %v2714 = vunpack.c.l.b16 %v1165
    %v2715 = vunpack.c.h.b16 %v1165
    %v2716 = vunpack.c.l.b16 %v1166
    %v2717 = vunpack.c.h.b16 %v1166
    %v2718 = vunpack.c.l.b16 %v1167
    %v2719 = vunpack.c.h.b16 %v1167
    %v2720 = vunpack.c.l.b16 %v1168
    %v2721 = vunpack.c.h.b16 %v1168
    %v2722 = vunpack.c.l.b16 %v1169
    %v2723 = vunpack.c.h.b16 %v1169
    %v2724 = vunpack.c.l.b16 %v1170
    %v2725 = vunpack.c.h.b16 %v1170
    %v2726 = vunpack.c.l.b16 %v1171
    %v2727 = vunpack.c.h.b16 %v1171
    %v2728 = vunpack.c.l.b16 %v1172
    %v2729 = vunpack.c.h.b16 %v1172
    %v2730 = vunpack.c.l.b16 %v1173
    %v2731 = vunpack.c.h.b16 %v1173
    %v2732 = vpack.c.b16 %v1712, %v1708
    %v2733 = vpack.c.b16 %v1713, %v1709
    %v2734 = vpack.c.b16 %v1714, %v1710
    %v2735 = vpack.c.b16 %v1715, %v1711
    %v2736 = vpack.c.b16 %v1720, %v1716
    %v2737 = vpack.c.b16 %v1721, %v1717
    %v2738 = vpack.c.b16 %v1722, %v1718
    %v2739 = vpack.c.b16 %v1723, %v1719
    %v2740 = vpack.c.b16 %v1728, %v1724
    %v2741 = vpack.c.b16 %v1729, %v1725
    %v2742 = vpack.c.b16 %v1730, %v1726
    %v2743 = vpack.c.b16 %v1731, %v1727
    %v2744 = vpack.c.b16 %v1736, %v1732
    %v2745 = vpack.c.b16 %v1737, %v1733
    %v2746 = vpack.c.b16 %v1738, %v1734
    %v2747 = vpack.c.b16 %v1739, %v1735
    %v2748 = vpack.c.b16 %v1744, %v1740
    %v2749 = vpack.c.b16 %v1745, %v1741
    %v2750 = vpack.c.b16 %v1746, %v1742
    %v2751 = vpack.c.b16 %v1747, %v1743
    %v2752 = vpack.c.b16 %v1752, %v1748
    %v2753 = vpack.c.b16 %v1753, %v1749
    %v2754 = vpack.c.b16 %v1754, %v1750
    %v2755 = vpack.c.b16 %v1755, %v1751
    %v2756 = vpack.c.b16 %v1760, %v1756
    %v2757 = vpack.c.b16 %v1761, %v1757
    %v2758 = vpack.c.b16 %v1762, %v1758
    %v2759 = vpack.c.b16 %v1763, %v1759
    %v2760 = vpack.c.b16 %v1768, %v1764
    %v2761 = vpack.c.b16 %v1769, %v1765
    %v2762 = vpack.c.b16 %v1770, %v1766
    %v2763 = vpack.c.b16 %v1771, %v1767
    %v2764 = vpack.c.b16 %v1776, %v1772
    %v2765 = vpack.c.b16 %v1777, %v1773
    %v2766 = vpack.c.b16 %v1778, %v1774
    %v2767 = vpack.c.b16 %v1779, %v1775
    %v2768 = vpack.c.b16 %v1784, %v1780
    %v2769 = vpack.c.b16 %v1785, %v1781
    %v2770 = vpack.c.b16 %v1786, %v1782
    %v2771 = vpack.c.b16 %v1787, %v1783
    %v2772 = vpack.c.b16 %v1792, %v1788
    %v2773 = vpack.c.b16 %v1793, %v1789
    %v2774 = vpack.c.b16 %v1794, %v1790
    %v2775 = vpack.c.b16 %v1795, %v1791
    %v2776 = vpack.c.b16 %v1800, %v1796
    %v2777 = vpack.c.b16 %v1801, %v1797
    %v2778 = vpack.c.b16 %v1802, %v1798
    %v2779 = vpack.c.b16 %v1803, %v1799
    %v2780 = vpack.c.b16 %v1808, %v1804
    %v2781 = vpack.c.b16 %v1809, %v1805
    %v2782 = vpack.c.b16 %v1810, %v1806
    %v2783 = vpack.c.b16 %v1811, %v1807
    %v2784 = vpack.c.b16 %v1816, %v1812
    %v2785 = vpack.c.b16 %v1817, %v1813
    %v2786 = vpack.c.b16 %v1818, %v1814
    %v2787 = vpack.c.b16 %v1819, %v1815
    %v2788 = vpack.c.b16 %v1824, %v1820
    %v2789 = vpack.c.b16 %v1825, %v1821
    %v2790 = vpack.c.b16 %v1826, %v1822
    %v2791 = vpack.c.b16 %v1827, %v1823
    %v2792 = vpack.c.b16 %v1832, %v1828
    %v2793 = vpack.c.b16 %v1833, %v1829
    %v2794 = vpack.c.b16 %v1834, %v1830
    %v2795 = vpack.c.b16 %v1835, %v1831
    %v2796 = vpack.c.b16 %v1840, %v1836
    %v2797 = vpack.c.b16 %v1841, %v1837
    %v2798 = vpack.c.b16 %v1842, %v1838
    %v2799 = vpack.c.b16 %v1843, %v1839
    %v2800 = vpack.c.b16 %v1848, %v1844
    %v2801 = vpack.c.b16 %v1849, %v1845
    %v2802 = vpack.c.b16 %v1850, %v1846
    %v2803 = vpack.c.b16 %v1851, %v1847
    %v2804 = vpack.c.b16 %v1856, %v1852
    %v2805 = vpack.c.b16 %v1857, %v1853
    %v2806 = vpack.c.b16 %v1858, %v1854
    %v2807 = vpack.c.b16 %v1859, %v1855
    %v2808 = vpack.c.b16 %v1864, %v1860
    %v2809 = vpack.c.b16 %v1865, %v1861
    %v2810 = vpack.c.b16 %v1866, %v1862
    %v2811 = vpack.c.b16 %v1867, %v1863
    %v2812 = vpack.c.b16 %v1872, %v1868
    %v2813 = vpack.c.b16 %v1873, %v1869
    %v2814 = vpack.c.b16 %v1874, %v1870
    %v2815 = vpack.c.b16 %v1875, %v1871
    %v2816 = vpack.c.b16 %v1880, %v1876
    %v2817 = vpack.c.b16 %v1881, %v1877
    %v2818 = vpack.c.b16 %v1882, %v1878
    %v2819 = vpack.c.b16 %v1883, %v1879
    %v2820 = vpack.c.b16 %v1888, %v1884
    %v2821 = vpack.c.b16 %v1889, %v1885
    %v2822 = vpack.c.b16 %v1890, %v1886
    %v2823 = vpack.c.b16 %v1891, %v1887
    %v2824 = vpack.c.b16 %v1896, %v1892
    %v2825 = vpack.c.b16 %v1897, %v1893
    %v2826 = vpack.c.b16 %v1898, %v1894
    %v2827 = vpack.c.b16 %v1899, %v1895
    %v2828 = vpack.c.b16 %v1904, %v1900
    %v2829 = vpack.c.b16 %v1905, %v1901
    %v2830 = vpack.c.b16 %v1906, %v1902
    %v2831 = vpack.c.b16 %v1907, %v1903
    %v2832 = vpack.c.b16 %v1912, %v1908
    %v2833 = vpack.c.b16 %v1913, %v1909
    %v2834 = vpack.c.b16 %v1914, %v1910
    %v2835 = vpack.c.b16 %v1915, %v1911
    %v2836 = vpack.c.b16 %v1920, %v1916
    %v2837 = vpack.c.b16 %v1921, %v1917
    %v2838 = vpack.c.b16 %v1922, %v1918
    %v2839 = vpack.c.b16 %v1923, %v1919
    %v2840 = vpack.c.b16 %v1928, %v1924
    %v2841 = vpack.c.b16 %v1929, %v1925
    %v2842 = vpack.c.b16 %v1930, %v1926
    %v2843 = vpack.c.b16 %v1931, %v1927
    %v2844 = vpack.c.b16 %v1936, %v1932
    %v2845 = vpack.c.b16 %v1937, %v1933
    %v2846 = vpack.c.b16 %v1938, %v1934
    %v2847 = vpack.c.b16 %v1939, %v1935
    %v2848 = vpack.c.b16 %v1944, %v1940
    %v2849 = vpack.c.b16 %v1945, %v1941
    %v2850 = vpack.c.b16 %v1946, %v1942
    %v2851 = vpack.c.b16 %v1947, %v1943
    %v2852 = vpack.c.b16 %v1952, %v1948
    %v2853 = vpack.c.b16 %v1953, %v1949
    %v2854 = vpack.c.b16 %v1954, %v1950
    %v2855 = vpack.c.b16 %v1955, %v1951
    %v2856 = vpack.c.b16 %v1960, %v1956
    %v2857 = vpack.c.b16 %v1961, %v1957
    %v2858 = vpack.c.b16 %v1962, %v1958
    %v2859 = vpack.c.b16 %v1963, %v1959
    %v2860 = vpack.c.b16 %v1968, %v1964
    %v2861 = vpack.c.b16 %v1969, %v1965
    %v2862 = vpack.c.b16 %v1970, %v1966
    %v2863 = vpack.c.b16 %v1971, %v1967
    %v2864 = vpack.c.b16 %v1976, %v1972
    %v2865 = vpack.c.b16 %v1977, %v1973
    %v2866 = vpack.c.b16 %v1978, %v1974
    %v2867 = vpack.c.b16 %v1979, %v1975
    %v2868 = vpack.c.b16 %v1984, %v1980
    %v2869 = vpack.c.b16 %v1985, %v1981
    %v2870 = vpack.c.b16 %v1986, %v1982
    %v2871 = vpack.c.b16 %v1987, %v1983
    %v2872 = vpack.c.b16 %v1992, %v1988
    %v2873 = vpack.c.b16 %v1993, %v1989
    %v2874 = vpack.c.b16 %v1994, %v1990
    %v2875 = vpack.c.b16 %v1995, %v1991
    %v2876 = vpack.c.b16 %v2000, %v1996
    %v2877 = vpack.c.b16 %v2001, %v1997
    %v2878 = vpack.c.b16 %v2002, %v1998
    %v2879 = vpack.c.b16 %v2003, %v1999
    %v2880 = vpack.c.b16 %v2008, %v2004
    %v2881 = vpack.c.b16 %v2009, %v2005
    %v2882 = vpack.c.b16 %v2010, %v2006
    %v2883 = vpack.c.b16 %v2011, %v2007
    %v2884 = vpack.c.b16 %v2016, %v2012
    %v2885 = vpack.c.b16 %v2017, %v2013
    %v2886 = vpack.c.b16 %v2018, %v2014
    %v2887 = vpack.c.b16 %v2019, %v2015
    %v2888 = vpack.c.b16 %v2024, %v2020
    %v2889 = vpack.c.b16 %v2025, %v2021
    %v2890 = vpack.c.b16 %v2026, %v2022
    %v2891 = vpack.c.b16 %v2027, %v2023
    %v2892 = vpack.c.b16 %v2032, %v2028
    %v2893 = vpack.c.b16 %v2033, %v2029
    %v2894 = vpack.c.b16 %v2034, %v2030
    %v2895 = vpack.c.b16 %v2035, %v2031
    %v2896 = vpack.c.b16 %v2040, %v2036
    %v2897 = vpack.c.b16 %v2041, %v2037
    %v2898 = vpack.c.b16 %v2042, %v2038
    %v2899 = vpack.c.b16 %v2043, %v2039
    %v2900 = vpack.c.b16 %v2048, %v2044
    %v2901 = vpack.c.b16 %v2049, %v2045
    %v2902 = vpack.c.b16 %v2050, %v2046
    %v2903 = vpack.c.b16 %v2051, %v2047
    %v2904 = vpack.c.b16 %v2056, %v2052
    %v2905 = vpack.c.b16 %v2057, %v2053
    %v2906 = vpack.c.b16 %v2058, %v2054
    %v2907 = vpack.c.b16 %v2059, %v2055
    %v2908 = vpack.c.b16 %v2064, %v2060
    %v2909 = vpack.c.b16 %v2065, %v2061
    %v2910 = vpack.c.b16 %v2066, %v2062
    %v2911 = vpack.c.b16 %v2067, %v2063
    %v2912 = vpack.c.b16 %v2072, %v2068
    %v2913 = vpack.c.b16 %v2073, %v2069
    %v2914 = vpack.c.b16 %v2074, %v2070
    %v2915 = vpack.c.b16 %v2075, %v2071
    %v2916 = vpack.c.b16 %v2080, %v2076
    %v2917 = vpack.c.b16 %v2081, %v2077
    %v2918 = vpack.c.b16 %v2082, %v2078
    %v2919 = vpack.c.b16 %v2083, %v2079
    %v2920 = vpack.c.b16 %v2088, %v2084
    %v2921 = vpack.c.b16 %v2089, %v2085
    %v2922 = vpack.c.b16 %v2090, %v2086
    %v2923 = vpack.c.b16 %v2091, %v2087
    %v2924 = vpack.c.b16 %v2096, %v2092
    %v2925 = vpack.c.b16 %v2097, %v2093
    %v2926 = vpack.c.b16 %v2098, %v2094
    %v2927 = vpack.c.b16 %v2099, %v2095
    %v2928 = vpack.c.b16 %v2104, %v2100
    %v2929 = vpack.c.b16 %v2105, %v2101
    %v2930 = vpack.c.b16 %v2106, %v2102
    %v2931 = vpack.c.b16 %v2107, %v2103
    %v2932 = vpack.c.b16 %v2112, %v2108
    %v2933 = vpack.c.b16 %v2113, %v2109
    %v2934 = vpack.c.b16 %v2114, %v2110
    %v2935 = vpack.c.b16 %v2115, %v2111
    %v2936 = vpack.c.b16 %v2120, %v2116
    %v2937 = vpack.c.b16 %v2121, %v2117
    %v2938 = vpack.c.b16 %v2122, %v2118
    %v2939 = vpack.c.b16 %v2123, %v2119
    %v2940 = vpack.c.b16 %v2128, %v2124
    %v2941 = vpack.c.b16 %v2129, %v2125
    %v2942 = vpack.c.b16 %v2130, %v2126
    %v2943 = vpack.c.b16 %v2131, %v2127
    %v2944 = vpack.c.b16 %v2136, %v2132
    %v2945 = vpack.c.b16 %v2137, %v2133
    %v2946 = vpack.c.b16 %v2138, %v2134
    %v2947 = vpack.c.b16 %v2139, %v2135
    %v2948 = vpack.c.b16 %v2144, %v2140
    %v2949 = vpack.c.b16 %v2145, %v2141
    %v2950 = vpack.c.b16 %v2146, %v2142
    %v2951 = vpack.c.b16 %v2147, %v2143
    %v2952 = vpack.c.b16 %v2152, %v2148
    %v2953 = vpack.c.b16 %v2153, %v2149
    %v2954 = vpack.c.b16 %v2154, %v2150
    %v2955 = vpack.c.b16 %v2155, %v2151
    %v2956 = vpack.c.b16 %v2160, %v2156
    %v2957 = vpack.c.b16 %v2161, %v2157
    %v2958 = vpack.c.b16 %v2162, %v2158
    %v2959 = vpack.c.b16 %v2163, %v2159
    %v2960 = vpack.c.b16 %v2168, %v2164
    %v2961 = vpack.c.b16 %v2169, %v2165
    %v2962 = vpack.c.b16 %v2170, %v2166
    %v2963 = vpack.c.b16 %v2171, %v2167
    %v2964 = vpack.c.b16 %v2176, %v2172
    %v2965 = vpack.c.b16 %v2177, %v2173
    %v2966 = vpack.c.b16 %v2178, %v2174
    %v2967 = vpack.c.b16 %v2179, %v2175
    %v2968 = vpack.c.b16 %v2184, %v2180
    %v2969 = vpack.c.b16 %v2185, %v2181
    %v2970 = vpack.c.b16 %v2186, %v2182
    %v2971 = vpack.c.b16 %v2187, %v2183
    %v2972 = vpack.c.b16 %v2192, %v2188
    %v2973 = vpack.c.b16 %v2193, %v2189
    %v2974 = vpack.c.b16 %v2194, %v2190
    %v2975 = vpack.c.b16 %v2195, %v2191
    %v2976 = vpack.c.b16 %v2200, %v2196
    %v2977 = vpack.c.b16 %v2201, %v2197
    %v2978 = vpack.c.b16 %v2202, %v2198
    %v2979 = vpack.c.b16 %v2203, %v2199
    %v2980 = vpack.c.b16 %v2208, %v2204
    %v2981 = vpack.c.b16 %v2209, %v2205
    %v2982 = vpack.c.b16 %v2210, %v2206
    %v2983 = vpack.c.b16 %v2211, %v2207
    %v2984 = vpack.c.b16 %v2216, %v2212
    %v2985 = vpack.c.b16 %v2217, %v2213
    %v2986 = vpack.c.b16 %v2218, %v2214
    %v2987 = vpack.c.b16 %v2219, %v2215
    %v2988 = vpack.c.b16 %v2224, %v2220
    %v2989 = vpack.c.b16 %v2225, %v2221
    %v2990 = vpack.c.b16 %v2226, %v2222
    %v2991 = vpack.c.b16 %v2227, %v2223
    %v2992 = vpack.c.b16 %v2232, %v2228
    %v2993 = vpack.c.b16 %v2233, %v2229
    %v2994 = vpack.c.b16 %v2234, %v2230
    %v2995 = vpack.c.b16 %v2235, %v2231
    %v2996 = vpack.c.b16 %v2240, %v2236
    %v2997 = vpack.c.b16 %v2241, %v2237
    %v2998 = vpack.c.b16 %v2242, %v2238
    %v2999 = vpack.c.b16 %v2243, %v2239
    %v3000 = vpack.c.b16 %v2248, %v2244
    %v3001 = vpack.c.b16 %v2249, %v2245
    %v3002 = vpack.c.b16 %v2250, %v2246
    %v3003 = vpack.c.b16 %v2251, %v2247
    %v3004 = vpack.c.b16 %v2256, %v2252
    %v3005 = vpack.c.b16 %v2257, %v2253
    %v3006 = vpack.c.b16 %v2258, %v2254
    %v3007 = vpack.c.b16 %v2259, %v2255
    %v3008 = vpack.c.b16 %v2264, %v2260
    %v3009 = vpack.c.b16 %v2265, %v2261
    %v3010 = vpack.c.b16 %v2266, %v2262
    %v3011 = vpack.c.b16 %v2267, %v2263
    %v3012 = vpack.c.b16 %v2272, %v2268
    %v3013 = vpack.c.b16 %v2273, %v2269
    %v3014 = vpack.c.b16 %v2274, %v2270
    %v3015 = vpack.c.b16 %v2275, %v2271
    %v3016 = vpack.c.b16 %v2280, %v2276
    %v3017 = vpack.c.b16 %v2281, %v2277
    %v3018 = vpack.c.b16 %v2282, %v2278
    %v3019 = vpack.c.b16 %v2283, %v2279
    %v3020 = vpack.c.b16 %v2288, %v2284
    %v3021 = vpack.c.b16 %v2289, %v2285
    %v3022 = vpack.c.b16 %v2290, %v2286
    %v3023 = vpack.c.b16 %v2291, %v2287
    %v3024 = vpack.c.b16 %v2296, %v2292
    %v3025 = vpack.c.b16 %v2297, %v2293
    %v3026 = vpack.c.b16 %v2298, %v2294
    %v3027 = vpack.c.b16 %v2299, %v2295
    %v3028 = vpack.c.b16 %v2304, %v2300
    %v3029 = vpack.c.b16 %v2305, %v2301
    %v3030 = vpack.c.b16 %v2306, %v2302
    %v3031 = vpack.c.b16 %v2307, %v2303
    %v3032 = vpack.c.b16 %v2312, %v2308
    %v3033 = vpack.c.b16 %v2313, %v2309
    %v3034 = vpack.c.b16 %v2314, %v2310
    %v3035 = vpack.c.b16 %v2315, %v2311
    %v3036 = vpack.c.b16 %v2320, %v2316
    %v3037 = vpack.c.b16 %v2321, %v2317
    %v3038 = vpack.c.b16 %v2322, %v2318
    %v3039 = vpack.c.b16 %v2323, %v2319
    %v3040 = vpack.c.b16 %v2328, %v2324
    %v3041 = vpack.c.b16 %v2329, %v2325
    %v3042 = vpack.c.b16 %v2330, %v2326
    %v3043 = vpack.c.b16 %v2331, %v2327
    %v3044 = vpack.c.b16 %v2336, %v2332
    %v3045 = vpack.c.b16 %v2337, %v2333
    %v3046 = vpack.c.b16 %v2338, %v2334
    %v3047 = vpack.c.b16 %v2339, %v2335
    %v3048 = vpack.c.b16 %v2344, %v2340
    %v3049 = vpack.c.b16 %v2345, %v2341
    %v3050 = vpack.c.b16 %v2346, %v2342
    %v3051 = vpack.c.b16 %v2347, %v2343
    %v3052 = vpack.c.b16 %v2352, %v2348
    %v3053 = vpack.c.b16 %v2353, %v2349
    %v3054 = vpack.c.b16 %v2354, %v2350
    %v3055 = vpack.c.b16 %v2355, %v2351
    %v3056 = vpack.c.b16 %v2360, %v2356
    %v3057 = vpack.c.b16 %v2361, %v2357
    %v3058 = vpack.c.b16 %v2362, %v2358
    %v3059 = vpack.c.b16 %v2363, %v2359
    %v3060 = vpack.c.b16 %v2368, %v2364
    %v3061 = vpack.c.b16 %v2369, %v2365
    %v3062 = vpack.c.b16 %v2370, %v2366
    %v3063 = vpack.c.b16 %v2371, %v2367
    %v3064 = vpack.c.b16 %v2376, %v2372
    %v3065 = vpack.c.b16 %v2377, %v2373
    %v3066 = vpack.c.b16 %v2378, %v2374
    %v3067 = vpack.c.b16 %v2379, %v2375
    %v3068 = vpack.c.b16 %v2384, %v2380
    %v3069 = vpack.c.b16 %v2385, %v2381
    %v3070 = vpack.c.b16 %v2386, %v2382
    %v3071 = vpack.c.b16 %v2387, %v2383
    %v3072 = vpack.c.b16 %v2392, %v2388
    %v3073 = vpack.c.b16 %v2393, %v2389
    %v3074 = vpack.c.b16 %v2394, %v2390
    %v3075 = vpack.c.b16 %v2395, %v2391
    %v3076 = vpack.c.b16 %v2400, %v2396
    %v3077 = vpack.c.b16 %v2401, %v2397
    %v3078 = vpack.c.b16 %v2402, %v2398
    %v3079 = vpack.c.b16 %v2403, %v2399
    %v3080 = vpack.c.b16 %v2408, %v2404
    %v3081 = vpack.c.b16 %v2409, %v2405
    %v3082 = vpack.c.b16 %v2410, %v2406
    %v3083 = vpack.c.b16 %v2411, %v2407
    %v3084 = vpack.c.b16 %v2416, %v2412
    %v3085 = vpack.c.b16 %v2417, %v2413
    %v3086 = vpack.c.b16 %v2418, %v2414
    %v3087 = vpack.c.b16 %v2419, %v2415
    %v3088 = vpack.c.b16 %v2424, %v2420
    %v3089 = vpack.c.b16 %v2425, %v2421
    %v3090 = vpack.c.b16 %v2426, %v2422
    %v3091 = vpack.c.b16 %v2427, %v2423
    %v3092 = vpack.c.b16 %v2432, %v2428
    %v3093 = vpack.c.b16 %v2433, %v2429
    %v3094 = vpack.c.b16 %v2434, %v2430
    %v3095 = vpack.c.b16 %v2435, %v2431
    %v3096 = vpack.c.b16 %v2440, %v2436
    %v3097 = vpack.c.b16 %v2441, %v2437
    %v3098 = vpack.c.b16 %v2442, %v2438
    %v3099 = vpack.c.b16 %v2443, %v2439
    %v3100 = vpack.c.b16 %v2448, %v2444
    %v3101 = vpack.c.b16 %v2449, %v2445
    %v3102 = vpack.c.b16 %v2450, %v2446
    %v3103 = vpack.c.b16 %v2451, %v2447
    %v3104 = vpack.c.b16 %v2456, %v2452
    %v3105 = vpack.c.b16 %v2457, %v2453
    %v3106 = vpack.c.b16 %v2458, %v2454
    %v3107 = vpack.c.b16 %v2459, %v2455
    %v3108 = vpack.c.b16 %v2464, %v2460
    %v3109 = vpack.c.b16 %v2465, %v2461
    %v3110 = vpack.c.b16 %v2466, %v2462
    %v3111 = vpack.c.b16 %v2467, %v2463
    %v3112 = vpack.c.b16 %v2472, %v2468
    %v3113 = vpack.c.b16 %v2473, %v2469
    %v3114 = vpack.c.b16 %v2474, %v2470
    %v3115 = vpack.c.b16 %v2475, %v2471
    %v3116 = vpack.c.b16 %v2480, %v2476
    %v3117 = vpack.c.b16 %v2481, %v2477
    %v3118 = vpack.c.b16 %v2482, %v2478
    %v3119 = vpack.c.b16 %v2483, %v2479
    %v3120 = vpack.c.b16 %v2488, %v2484
    %v3121 = vpack.c.b16 %v2489, %v2485
    %v3122 = vpack.c.b16 %v2490, %v2486
    %v3123 = vpack.c.b16 %v2491, %v2487
    %v3124 = vpack.c.b16 %v2496, %v2492
    %v3125 = vpack.c.b16 %v2497, %v2493
    %v3126 = vpack.c.b16 %v2498, %v2494
    %v3127 = vpack.c.b16 %v2499, %v2495
    %v3128 = vpack.c.b16 %v2504, %v2500
    %v3129 = vpack.c.b16 %v2505, %v2501
    %v3130 = vpack.c.b16 %v2506, %v2502
    %v3131 = vpack.c.b16 %v2507, %v2503
    %v3132 = vpack.c.b16 %v2512, %v2508
    %v3133 = vpack.c.b16 %v2513, %v2509
    %v3134 = vpack.c.b16 %v2514, %v2510
    %v3135 = vpack.c.b16 %v2515, %v2511
    %v3136 = vpack.c.b16 %v2520, %v2516
    %v3137 = vpack.c.b16 %v2521, %v2517
    %v3138 = vpack.c.b16 %v2522, %v2518
    %v3139 = vpack.c.b16 %v2523, %v2519
    %v3140 = vpack.c.b16 %v2528, %v2524
    %v3141 = vpack.c.b16 %v2529, %v2525
    %v3142 = vpack.c.b16 %v2530, %v2526
    %v3143 = vpack.c.b16 %v2531, %v2527
    %v3144 = vpack.c.b16 %v2536, %v2532
    %v3145 = vpack.c.b16 %v2537, %v2533
    %v3146 = vpack.c.b16 %v2538, %v2534
    %v3147 = vpack.c.b16 %v2539, %v2535
    %v3148 = vpack.c.b16 %v2544, %v2540
    %v3149 = vpack.c.b16 %v2545, %v2541
    %v3150 = vpack.c.b16 %v2546, %v2542
    %v3151 = vpack.c.b16 %v2547, %v2543
    %v3152 = vpack.c.b16 %v2552, %v2548
    %v3153 = vpack.c.b16 %v2553, %v2549
    %v3154 = vpack.c.b16 %v2554, %v2550
    %v3155 = vpack.c.b16 %v2555, %v2551
    %v3156 = vpack.c.b16 %v2560, %v2556
    %v3157 = vpack.c.b16 %v2561, %v2557
    %v3158 = vpack.c.b16 %v2562, %v2558
    %v3159 = vpack.c.b16 %v2563, %v2559
    %v3160 = vpack.c.b16 %v2568, %v2564
    %v3161 = vpack.c.b16 %v2569, %v2565
    %v3162 = vpack.c.b16 %v2570, %v2566
    %v3163 = vpack.c.b16 %v2571, %v2567
    %v3164 = vpack.c.b16 %v2576, %v2572
    %v3165 = vpack.c.b16 %v2577, %v2573
    %v3166 = vpack.c.b16 %v2578, %v2574
    %v3167 = vpack.c.b16 %v2579, %v2575
    %v3168 = vpack.c.b16 %v2584, %v2580
    %v3169 = vpack.c.b16 %v2585, %v2581
    %v3170 = vpack.c.b16 %v2586, %v2582
    %v3171 = vpack.c.b16 %v2587, %v2583
    %v3172 = vpack.c.b16 %v2592, %v2588
    %v3173 = vpack.c.b16 %v2593, %v2589
    %v3174 = vpack.c.b16 %v2594, %v2590
    %v3175 = vpack.c.b16 %v2595, %v2591
    %v3176 = vpack.c.b16 %v2600, %v2596
    %v3177 = vpack.c.b16 %v2601, %v2597
    %v3178 = vpack.c.b16 %v2602, %v2598
    %v3179 = vpack.c.b16 %v2603, %v2599
    %v3180 = vpack.c.b16 %v2608, %v2604
    %v3181 = vpack.c.b16 %v2609, %v2605
    %v3182 = vpack.c.b16 %v2610, %v2606
    %v3183 = vpack.c.b16 %v2611, %v2607
    %v3184 = vpack.c.b16 %v2616, %v2612
    %v3185 = vpack.c.b16 %v2617, %v2613
    %v3186 = vpack.c.b16 %v2618, %v2614
    %v3187 = vpack.c.b16 %v2619, %v2615
    %v3188 = vpack.c.b16 %v2624, %v2620
    %v3189 = vpack.c.b16 %v2625, %v2621
    %v3190 = vpack.c.b16 %v2626, %v2622
    %v3191 = vpack.c.b16 %v2627, %v2623
    %v3192 = vpack.c.b16 %v2632, %v2628
    %v3193 = vpack.c.b16 %v2633, %v2629
    %v3194 = vpack.c.b16 %v2634, %v2630
    %v3195 = vpack.c.b16 %v2635, %v2631
    %v3196 = vpack.c.b16 %v2640, %v2636
    %v3197 = vpack.c.b16 %v2641, %v2637
    %v3198 = vpack.c.b16 %v2642, %v2638
    %v3199 = vpack.c.b16 %v2643, %v2639
    %v3200 = vpack.c.b16 %v2648, %v2644
    %v3201 = vpack.c.b16 %v2649, %v2645
    %v3202 = vpack.c.b16 %v2650, %v2646
    %v3203 = vpack.c.b16 %v2651, %v2647
    %v3204 = vpack.c.b16 %v2656, %v2652
    %v3205 = vpack.c.b16 %v2657, %v2653
    %v3206 = vpack.c.b16 %v2658, %v2654
    %v3207 = vpack.c.b16 %v2659, %v2655
    %v3208 = vpack.c.b16 %v2664, %v2660
    %v3209 = vpack.c.b16 %v2665, %v2661
    %v3210 = vpack.c.b16 %v2666, %v2662
    %v3211 = vpack.c.b16 %v2667, %v2663
    %v3212 = vpack.c.b16 %v2672, %v2668
    %v3213 = vpack.c.b16 %v2673, %v2669
    %v3214 = vpack.c.b16 %v2674, %v2670
    %v3215 = vpack.c.b16 %v2675, %v2671
    %v3216 = vpack.c.b16 %v2680, %v2676
    %v3217 = vpack.c.b16 %v2681, %v2677
    %v3218 = vpack.c.b16 %v2682, %v2678
    %v3219 = vpack.c.b16 %v2683, %v2679
    %v3220 = vpack.c.b16 %v2688, %v2684
    %v3221 = vpack.c.b16 %v2689, %v2685
    %v3222 = vpack.c.b16 %v2690, %v2686
    %v3223 = vpack.c.b16 %v2691, %v2687
    %v3224 = vpack.c.b16 %v2696, %v2692
    %v3225 = vpack.c.b16 %v2697, %v2693
    %v3226 = vpack.c.b16 %v2698, %v2694
    %v3227 = vpack.c.b16 %v2699, %v2695
    %v3228 = vpack.c.b16 %v2704, %v2700
    %v3229 = vpack.c.b16 %v2705, %v2701
    %v3230 = vpack.c.b16 %v2706, %v2702
    %v3231 = vpack.c.b16 %v2707, %v2703
    %v3232 = vpack.c.b16 %v2712, %v2708
    %v3233 = vpack.c.b16 %v2713, %v2709
    %v3234 = vpack.c.b16 %v2714, %v2710
    %v3235 = vpack.c.b16 %v2715, %v2711
    %v3236 = vpack.c.b16 %v2720, %v2716
    %v3237 = vpack.c.b16 %v2721, %v2717
    %v3238 = vpack.c.b16 %v2722, %v2718
    %v3239 = vpack.c.b16 %v2723, %v2719
    %v3240 = vpack.c.b16 %v2728, %v2724
    %v3241 = vpack.c.b16 %v2729, %v2725
    %v3242 = vpack.c.b16 %v2730, %v2726
    %v3243 = vpack.c.b16 %v2731, %v2727
    %3756 = vmatprep.subr.bf16.mxu0 %v2733
    %3757 = vmatpush1.bf16.msra.mxu0 %v2732
    %3758 = vmatprep.subr.bf16.mxu0 %v2737
    %3759 = vmatpush1.bf16.msra.mxu0 %v2736
    %3760 = vmatprep.subr.bf16.mxu0 %v2741
    %3761 = vmatpush1.bf16.msra.mxu0 %v2740
    %3762 = vmatprep.subr.bf16.mxu0 %v2745
    %3763 = vmatpush1.bf16.msra.mxu0 %v2744
    %3764 = vmatprep.subr.bf16.mxu0 %v2749
    %3765 = vmatpush1.bf16.msra.mxu0 %v2748
    %3766 = vmatprep.subr.bf16.mxu0 %v2753
    %3767 = vmatpush1.bf16.msra.mxu0 %v2752
    %3768 = vmatprep.subr.bf16.mxu0 %v2757
    %3769 = vmatpush1.bf16.msra.mxu0 %v2756
    %3770 = vmatprep.subr.bf16.mxu0 %v2761
    %3771 = vmatpush1.bf16.msra.mxu0 %v2760
    %3772 = vmatprep.subr.bf16.mxu0 %v2765
    %3773 = vmatpush1.bf16.msra.mxu0 %v2764
    %3774 = vmatprep.subr.bf16.mxu0 %v2769
    %3775 = vmatpush1.bf16.msra.mxu0 %v2768
    %3776 = vmatprep.subr.bf16.mxu0 %v2773
    %3777 = vmatpush1.bf16.msra.mxu0 %v2772
    %3778 = vmatprep.subr.bf16.mxu0 %v2777
    %3779 = vmatpush1.bf16.msra.mxu0 %v2776
    %3780 = vmatprep.subr.bf16.mxu0 %v2781
    %3781 = vmatpush1.bf16.msra.mxu0 %v2780
    %3782 = vmatprep.subr.bf16.mxu0 %v2785
    %3783 = vmatpush1.bf16.msra.mxu0 %v2784
    %3784 = vmatprep.subr.bf16.mxu0 %v2789
    %3785 = vmatpush1.bf16.msra.mxu0 %v2788
    %3786 = vmatprep.subr.bf16.mxu0 %v2793
    %3787 = vmatpush1.bf16.msra.mxu0 %v2792
    %3788 = vmatprep.mubr.bf16.mxu0 %v455
    %3789 = vmatmul.mubr.bf16.gmra.mrb[0].mxu0 %v454
    %v3790 = vpop.f32.mrb[0].mxu0
    %v3791 = vadd.f32 %v1179, %v3790
    %v3792 = vpop.f32.mrb[0].mxu0
    %v3793 = vadd.f32 %v1183, %v3792
    %v3794 = vpop.f32.mrb[0].mxu0
    %v3795 = vadd.f32 %v1179, %v3794
    %v3796 = vpop.f32.mrb[0].mxu0
    %v3797 = vadd.f32 %v1183, %v3796
    %3798 = vmatprep.mubr.bf16.mxu0 %v471
    %3799 = vmatmul.mubr.bf16.gmra.mrb[0].mxu0 %v470
    %v3800 = vpop.f32.mrb[0].mxu0
    %v3801 = vadd.f32 %v1179, %v3800
    %v3802 = vpop.f32.mrb[0].mxu0
    %v3803 = vadd.f32 %v1183, %v3802
    %v3804 = vpop.f32.mrb[0].mxu0
    %v3805 = vadd.f32 %v1179, %v3804
    %v3806 = vpop.f32.mrb[0].mxu0
    %v3807 = vadd.f32 %v1183, %v3806
    %3808 = vmatprep.mubr.bf16.mxu0 %v487
    %3809 = vmatmul.mubr.bf16.gmra.mrb[0].mxu0 %v486
    %v3810 = vpop.f32.mrb[0].mxu0
    %v3811 = vadd.f32 %v1179, %v3810
    %v3812 = vpop.f32.mrb[0].mxu0
    %v3813 = vadd.f32 %v1183, %v3812
    %v3814 = vpop.f32.mrb[0].mxu0
    %v3815 = vadd.f32 %v1179, %v3814
    %v3816 = vpop.f32.mrb[0].mxu0
    %v3817 = vadd.f32 %v1183, %v3816
    %3818 = vmatprep.mubr.bf16.mxu0 %v503
    %3819 = vmatmul.mubr.bf16.gmra.mrb[0].mxu0 %v502
    %v3820 = vpop.f32.mrb[0].mxu0
    %v3821 = vadd.f32 %v1179, %v3820
    %v3822 = vpop.f32.mrb[0].mxu0
    %v3823 = vadd.f32 %v1183, %v3822
    %v3824 = vpop.f32.mrb[0].mxu0
    %v3825 = vadd.f32 %v1179, %v3824
    %v3826 = vpop.f32.mrb[0].mxu0
    %v3827 = vadd.f32 %v1183, %v3826
    %3828 = vmatprep.mubr.bf16.mxu0 %v519
    %3829 = vmatmul.mubr.bf16.gmra.mrb[0].mxu0 %v518
    %v3830 = vpop.f32.mrb[0].mxu0
    %v3831 = vadd.f32 %v1179, %v3830
    %v3832 = vpop.f32.mrb[0].mxu0
    %v3833 = vadd.f32 %v1183, %v3832
    %v3834 = vpop.f32.mrb[0].mxu0
    %v3835 = vadd.f32 %v1179, %v3834
    %v3836 = vpop.f32.mrb[0].mxu0
    %v3837 = vadd.f32 %v1183, %v3836
    %3838 = vmatprep.mubr.bf16.mxu0 %v535
    %3839 = vmatmul.mubr.bf16.gmra.mrb[0].mxu0 %v534
    %v3840 = vpop.f32.mrb[0].mxu0
    %v3841 = vadd.f32 %v1179, %v3840
    %v3842 = vpop.f32.mrb[0].mxu0
    %v3843 = vadd.f32 %v1183, %v3842
    %v3844 = vpop.f32.mrb[0].mxu0
    %v3845 = vadd.f32 %v1179, %v3844
    %v3846 = vpop.f32.mrb[0].mxu0
    %v3847 = vadd.f32 %v1183, %v3846
    %3848 = vmatprep.mubr.bf16.mxu0 %v551
    %3849 = vmatmul.mubr.bf16.gmra.mrb[0].mxu0 %v550
    %v3850 = vpop.f32.mrb[0].mxu0
    %v3851 = vadd.f32 %v1179, %v3850
    %v3852 = vpop.f32.mrb[0].mxu0
    %v3853 = vadd.f32 %v1183, %v3852
    %v3854 = vpop.f32.mrb[0].mxu0
    %v3855 = vadd.f32 %v1179, %v3854
    %v3856 = vpop.f32.mrb[0].mxu0
    %v3857 = vadd.f32 %v1183, %v3856
    %3858 = vmatprep.mubr.bf16.mxu0 %v567
    %3859 = vmatmul.mubr.bf16.gmra.mrb[0].mxu0 %v566
    %v3860 = vpop.f32.mrb[0].mxu0
    %v3861 = vadd.f32 %v1179, %v3860
    %v3862 = vpop.f32.mrb[0].mxu0
    %v3863 = vadd.f32 %v1183, %v3862
    %v3864 = vpop.f32.mrb[0].mxu0
    %v3865 = vadd.f32 %v1179, %v3864
    %v3866 = vpop.f32.mrb[0].mxu0
    %v3867 = vadd.f32 %v1183, %v3866
    %3868 = vmatprep.mubr.bf16.mxu0 %v583
    %3869 = vmatmul.mubr.bf16.gmra.mrb[0].mxu0 %v582
    %v3870 = vpop.f32.mrb[0].mxu0
    %v3871 = vadd.f32 %v1179, %v3870
    %v3872 = vpop.f32.mrb[0].mxu0
    %v3873 = vadd.f32 %v1183, %v3872
    %v3874 = vpop.f32.mrb[0].mxu0
    %v3875 = vadd.f32 %v1179, %v3874
    %v3876 = vpop.f32.mrb[0].mxu0
    %v3877 = vadd.f32 %v1183, %v3876
    %3878 = vmatprep.mubr.bf16.mxu0 %v599
    %3879 = vmatmul.mubr.bf16.gmra.mrb[0].mxu0 %v598
    %v3880 = vpop.f32.mrb[0].mxu0
    %v3881 = vadd.f32 %v1179, %v3880
    %v3882 = vpop.f32.mrb[0].mxu0
    %v3883 = vadd.f32 %v1183, %v3882
    %v3884 = vpop.f32.mrb[0].mxu0
    %v3885 = vadd.f32 %v1179, %v3884
    %v3886 = vpop.f32.mrb[0].mxu0
    %v3887 = vadd.f32 %v1183, %v3886
    %3888 = vmatprep.mubr.bf16.mxu0 %v615
    %3889 = vmatmul.mubr.bf16.gmra.mrb[0].mxu0 %v614
    %v3890 = vpop.f32.mrb[0].mxu0
    %v3891 = vadd.f32 %v1179, %v3890
    %v3892 = vpop.f32.mrb[0].mxu0
    %v3893 = vadd.f32 %v1183, %v3892
    %v3894 = vpop.f32.mrb[0].mxu0
    %v3895 = vadd.f32 %v1179, %v3894
    %v3896 = vpop.f32.mrb[0].mxu0
    %v3897 = vadd.f32 %v1183, %v3896
    %3898 = vmatprep.mubr.bf16.mxu0 %v631
    %3899 = vmatmul.mubr.bf16.gmra.mrb[0].mxu0 %v630
    %v3900 = vpop.f32.mrb[0].mxu0
    %v3901 = vadd.f32 %v1179, %v3900
    %v3902 = vpop.f32.mrb[0].mxu0
    %v3903 = vadd.f32 %v1183, %v3902
    %v3904 = vpop.f32.mrb[0].mxu0
    %v3905 = vadd.f32 %v1179, %v3904
    %v3906 = vpop.f32.mrb[0].mxu0
    %v3907 = vadd.f32 %v1183, %v3906
    %3908 = vmatprep.mubr.bf16.mxu0 %v647
    %3909 = vmatmul.mubr.bf16.gmra.mrb[0].mxu0 %v646
    %v3910 = vpop.f32.mrb[0].mxu0
    %v3911 = vadd.f32 %v1179, %v3910
    %v3912 = vpop.f32.mrb[0].mxu0
    %v3913 = vadd.f32 %v1183, %v3912
    %v3914 = vpop.f32.mrb[0].mxu0
    %v3915 = vpop.f32.mrb[0].mxu0
    %3916 = vdwg.mxu0
    %3917 = vmatprep.subr.bf16.mxu0 %v2797
    %3918 = vmatpush1.bf16.msra.mxu0 %v2796
    %3919 = vmatprep.subr.bf16.mxu0 %v2801
    %3920 = vmatpush1.bf16.msra.mxu0 %v2800
    %3921 = vmatprep.subr.bf16.mxu0 %v2805
    %3922 = vmatpush1.bf16.msra.mxu0 %v2804
    %3923 = vmatprep.subr.bf16.mxu0 %v2809
    %3924 = vmatpush1.bf16.msra.mxu0 %v2808
    %3925 = vmatprep.subr.bf16.mxu0 %v2813
    %3926 = vmatpush1.bf16.msra.mxu0 %v2812
    %3927 = vmatprep.subr.bf16.mxu0 %v2817
    %3928 = vmatpush1.bf16.msra.mxu0 %v2816
    %3929 = vmatprep.subr.bf16.mxu0 %v2821
    %3930 = vmatpush1.bf16.msra.mxu0 %v2820
    %3931 = vmatprep.subr.bf16.mxu0 %v2825
    %3932 = vmatpush1.bf16.msra.mxu0 %v2824
    %3933 = vmatprep.subr.bf16.mxu0 %v2829
    %3934 = vmatpush1.bf16.msra.mxu0 %v2828
    %3935 = vmatprep.subr.bf16.mxu0 %v2833
    %3936 = vmatpush1.bf16.msra.mxu0 %v2832
    %3937 = vmatprep.subr.bf16.mxu0 %v2837
    %3938 = vmatpush1.bf16.msra.mxu0 %v2836
    %3939 = vmatprep.subr.bf16.mxu0 %v2841
    %3940 = vmatpush1.bf16.msra.mxu0 %v2840
    %3941 = vmatprep.subr.bf16.mxu0 %v2845
    %3942 = vmatpush1.bf16.msra.mxu0 %v2844
    %3943 = vmatprep.subr.bf16.mxu0 %v2849
    %3944 = vmatpush1.bf16.msra.mxu0 %v2848
    %3945 = vmatprep.subr.bf16.mxu0 %v2853
    %3946 = vmatpush1.bf16.msra.mxu0 %v2852
    %3947 = vmatprep.subr.bf16.mxu0 %v2857
    %3948 = vmatpush1.bf16.msra.mxu0 %v2856
    %3949 = vmatprep.mubr.bf16.mxu0 %v457
    %3950 = vmatmul.mubr.bf16.gmra.mrb[0].mxu0 %v456
    %v3951 = vpop.f32.mrb[0].mxu0
    %v3952 = vadd.f32 %v3791, %v3951
    %v3953 = vpop.f32.mrb[0].mxu0
    %v3954 = vadd.f32 %v3793, %v3953
    %v3955 = vpop.f32.mrb[0].mxu0
    %v3956 = vadd.f32 %v3795, %v3955
    %v3957 = vpop.f32.mrb[0].mxu0
    %v3958 = vadd.f32 %v3797, %v3957
    %3959 = vmatprep.mubr.bf16.mxu0 %v473
    %3960 = vmatmul.mubr.bf16.gmra.mrb[0].mxu0 %v472
    %v3961 = vpop.f32.mrb[0].mxu0
    %v3962 = vadd.f32 %v3801, %v3961
    %v3963 = vpop.f32.mrb[0].mxu0
    %v3964 = vadd.f32 %v3803, %v3963
    %v3965 = vpop.f32.mrb[0].mxu0
    %v3966 = vadd.f32 %v3805, %v3965
    %v3967 = vpop.f32.mrb[0].mxu0
    %v3968 = vadd.f32 %v3807, %v3967
    %3969 = vmatprep.mubr.bf16.mxu0 %v489
    %3970 = vmatmul.mubr.bf16.gmra.mrb[0].mxu0 %v488
    %v3971 = vpop.f32.mrb[0].mxu0
    %v3972 = vadd.f32 %v3811, %v3971
    %v3973 = vpop.f32.mrb[0].mxu0
    %v3974 = vadd.f32 %v3813, %v3973
    %v3975 = vpop.f32.mrb[0].mxu0
    %v3976 = vadd.f32 %v3815, %v3975
    %v3977 = vpop.f32.mrb[0].mxu0
    %v3978 = vadd.f32 %v3817, %v3977
    %3979 = vmatprep.mubr.bf16.mxu0 %v505
    %3980 = vmatmul.mubr.bf16.gmra.mrb[0].mxu0 %v504
    %v3981 = vpop.f32.mrb[0].mxu0
    %v3982 = vadd.f32 %v3821, %v3981
    %v3983 = vpop.f32.mrb[0].mxu0
    %v3984 = vadd.f32 %v3823, %v3983
    %v3985 = vpop.f32.mrb[0].mxu0
    %v3986 = vadd.f32 %v3825, %v3985
    %v3987 = vpop.f32.mrb[0].mxu0
    %v3988 = vadd.f32 %v3827, %v3987
    %3989 = vmatprep.mubr.bf16.mxu0 %v521
    %3990 = vmatmul.mubr.bf16.gmra.mrb[0].mxu0 %v520
    %v3991 = vpop.f32.mrb[0].mxu0
    %v3992 = vadd.f32 %v3831, %v3991
    %v3993 = vpop.f32.mrb[0].mxu0
    %v3994 = vadd.f32 %v3833, %v3993
    %v3995 = vpop.f32.mrb[0].mxu0
    %v3996 = vadd.f32 %v3835, %v3995
    %v3997 = vpop.f32.mrb[0].mxu0
    %v3998 = vadd.f32 %v3837, %v3997
    %3999 = vmatprep.mubr.bf16.mxu0 %v537
    %4000 = vmatmul.mubr.bf16.gmra.mrb[0].mxu0 %v536
    %v4001 = vpop.f32.mrb[0].mxu0
    %v4002 = vadd.f32 %v3841, %v4001
    %v4003 = vpop.f32.mrb[0].mxu0
    %v4004 = vadd.f32 %v3843, %v4003
    %v4005 = vpop.f32.mrb[0].mxu0
    %v4006 = vadd.f32 %v3845, %v4005
    %v4007 = vpop.f32.mrb[0].mxu0
    %v4008 = vadd.f32 %v3847, %v4007
    %4009 = vmatprep.mubr.bf16.mxu0 %v553
    %4010 = vmatmul.mubr.bf16.gmra.mrb[0].mxu0 %v552
    %v4011 = vpop.f32.mrb[0].mxu0
    %v4012 = vadd.f32 %v3851, %v4011
    %v4013 = vpop.f32.mrb[0].mxu0
    %v4014 = vadd.f32 %v3853, %v4013
    %v4015 = vpop.f32.mrb[0].mxu0
    %v4016 = vadd.f32 %v3855, %v4015
    %v4017 = vpop.f32.mrb[0].mxu0
    %v4018 = vadd.f32 %v3857, %v4017
    %4019 = vmatprep.mubr.bf16.mxu0 %v569
    %4020 = vmatmul.mubr.bf16.gmra.mrb[0].mxu0 %v568
    %v4021 = vpop.f32.mrb[0].mxu0
    %v4022 = vadd.f32 %v3861, %v4021
    %v4023 = vpop.f32.mrb[0].mxu0
    %v4024 = vadd.f32 %v3863, %v4023
    %v4025 = vpop.f32.mrb[0].mxu0
    %v4026 = vadd.f32 %v3865, %v4025
    %v4027 = vpop.f32.mrb[0].mxu0
    %v4028 = vadd.f32 %v3867, %v4027
    %4029 = vmatprep.mubr.bf16.mxu0 %v585
    %4030 = vmatmul.mubr.bf16.gmra.mrb[0].mxu0 %v584
    %v4031 = vpop.f32.mrb[0].mxu0
    %v4032 = vadd.f32 %v3871, %v4031
    %v4033 = vpop.f32.mrb[0].mxu0
    %v4034 = vadd.f32 %v3873, %v4033
    %v4035 = vpop.f32.mrb[0].mxu0
    %v4036 = vadd.f32 %v3875, %v4035
    %v4037 = vpop.f32.mrb[0].mxu0
    %v4038 = vadd.f32 %v3877, %v4037
    %4039 = vmatprep.mubr.bf16.mxu0 %v601
    %4040 = vmatmul.mubr.bf16.gmra.mrb[0].mxu0 %v600
    %v4041 = vpop.f32.mrb[0].mxu0
    %v4042 = vadd.f32 %v3881, %v4041
    %v4043 = vpop.f32.mrb[0].mxu0
    %v4044 = vadd.f32 %v3883, %v4043
    %v4045 = vpop.f32.mrb[0].mxu0
    %v4046 = vadd.f32 %v3885, %v4045
    %v4047 = vpop.f32.mrb[0].mxu0
    %v4048 = vadd.f32 %v3887, %v4047
    %4049 = vmatprep.mubr.bf16.mxu0 %v617
    %4050 = vmatmul.mubr.bf16.gmra.mrb[0].mxu0 %v616
    %v4051 = vpop.f32.mrb[0].mxu0
    %v4052 = vadd.f32 %v3891, %v4051
    %v4053 = vpop.f32.mrb[0].mxu0
    %v4054 = vadd.f32 %v3893, %v4053
    %v4055 = vpop.f32.mrb[0].mxu0
    %v4056 = vadd.f32 %v3895, %v4055
    %v4057 = vpop.f32.mrb[0].mxu0
    %v4058 = vadd.f32 %v3897, %v4057
    %4059 = vmatprep.mubr.bf16.mxu0 %v633
    %4060 = vmatmul.mubr.bf16.gmra.mrb[0].mxu0 %v632
    %v4061 = vpop.f32.mrb[0].mxu0
    %v4062 = vadd.f32 %v3901, %v4061
    %v4063 = vpop.f32.mrb[0].mxu0
    %v4064 = vadd.f32 %v3903, %v4063
    %v4065 = vpop.f32.mrb[0].mxu0
    %v4066 = vadd.f32 %v3905, %v4065
    %v4067 = vpop.f32.mrb[0].mxu0
    %v4068 = vadd.f32 %v3907, %v4067
    %4069 = vmatprep.mubr.bf16.mxu0 %v649
    %4070 = vmatmul.mubr.bf16.gmra.mrb[0].mxu0 %v648
    %v4071 = vpop.f32.mrb[0].mxu0
    %v4072 = vadd.f32 %v3911, %v4071
    %v4073 = vpop.f32.mrb[0].mxu0
    %v4074 = vadd.f32 %v3913, %v4073
    %v4075 = vpop.f32.mrb[0].mxu0
    %v4076 = vpop.f32.mrb[0].mxu0
    %4077 = vdwg.mxu0
    %4078 = vmatprep.subr.bf16.mxu0 %v2861
    %4079 = vmatpush1.bf16.msra.mxu0 %v2860
    %4080 = vmatprep.subr.bf16.mxu0 %v2865
    %4081 = vmatpush1.bf16.msra.mxu0 %v2864
    %4082 = vmatprep.subr.bf16.mxu0 %v2869
    %4083 = vmatpush1.bf16.msra.mxu0 %v2868
    %4084 = vmatprep.subr.bf16.mxu0 %v2873
    %4085 = vmatpush1.bf16.msra.mxu0 %v2872
    %4086 = vmatprep.subr.bf16.mxu0 %v2877
    %4087 = vmatpush1.bf16.msra.mxu0 %v2876
    %4088 = vmatprep.subr.bf16.mxu0 %v2881
    %4089 = vmatpush1.bf16.msra.mxu0 %v2880
    %4090 = vmatprep.subr.bf16.mxu0 %v2885
    %4091 = vmatpush1.bf16.msra.mxu0 %v2884
    %4092 = vmatprep.subr.bf16.mxu0 %v2889
    %4093 = vmatpush1.bf16.msra.mxu0 %v2888
    %4094 = vmatprep.subr.bf16.mxu0 %v2893
    %4095 = vmatpush1.bf16.msra.mxu0 %v2892
    %4096 = vmatprep.subr.bf16.mxu0 %v2897
    %4097 = vmatpush1.bf16.msra.mxu0 %v2896
    %4098 = vmatprep.subr.bf16.mxu0 %v2901
    %4099 = vmatpush1.bf16.msra.mxu0 %v2900
    %4100 = vmatprep.subr.bf16.mxu0 %v2905
    %4101 = vmatpush1.bf16.msra.mxu0 %v2904
    %4102 = vmatprep.subr.bf16.mxu0 %v2909
    %4103 = vmatpush1.bf16.msra.mxu0 %v2908
    %4104 = vmatprep.subr.bf16.mxu0 %v2913
    %4105 = vmatpush1.bf16.msra.mxu0 %v2912
    %4106 = vmatprep.subr.bf16.mxu0 %v2917
    %4107 = vmatpush1.bf16.msra.mxu0 %v2916
    %4108 = vmatprep.subr.bf16.mxu0 %v2921
    %4109 = vmatpush1.bf16.msra.mxu0 %v2920
    %4110 = vmatprep.mubr.bf16.mxu0 %v459
    %4111 = vmatmul.mubr.bf16.gmra.mrb[0].mxu0 %v458
    %v4112 = vpop.f32.mrb[0].mxu0
    %v4113 = vadd.f32 %v3952, %v4112
    %v4114 = vpop.f32.mrb[0].mxu0
    %v4115 = vadd.f32 %v3954, %v4114
    %v4116 = vpop.f32.mrb[0].mxu0
    %v4117 = vadd.f32 %v3956, %v4116
    %v4118 = vpop.f32.mrb[0].mxu0
    %v4119 = vadd.f32 %v3958, %v4118
    %4120 = vmatprep.mubr.bf16.mxu0 %v475
    %4121 = vmatmul.mubr.bf16.gmra.mrb[0].mxu0 %v474
    %v4122 = vpop.f32.mrb[0].mxu0
    %v4123 = vadd.f32 %v3962, %v4122
    %v4124 = vpop.f32.mrb[0].mxu0
    %v4125 = vadd.f32 %v3964, %v4124
    %v4126 = vpop.f32.mrb[0].mxu0
    %v4127 = vadd.f32 %v3966, %v4126
    %v4128 = vpop.f32.mrb[0].mxu0
    %v4129 = vadd.f32 %v3968, %v4128
    %4130 = vmatprep.mubr.bf16.mxu0 %v491
    %4131 = vmatmul.mubr.bf16.gmra.mrb[0].mxu0 %v490
    %v4132 = vpop.f32.mrb[0].mxu0
    %v4133 = vadd.f32 %v3972, %v4132
    %v4134 = vpop.f32.mrb[0].mxu0
    %v4135 = vadd.f32 %v3974, %v4134
    %v4136 = vpop.f32.mrb[0].mxu0
    %v4137 = vadd.f32 %v3976, %v4136
    %v4138 = vpop.f32.mrb[0].mxu0
    %v4139 = vadd.f32 %v3978, %v4138
    %4140 = vmatprep.mubr.bf16.mxu0 %v507
    %4141 = vmatmul.mubr.bf16.gmra.mrb[0].mxu0 %v506
    %v4142 = vpop.f32.mrb[0].mxu0
    %v4143 = vadd.f32 %v3982, %v4142
    %v4144 = vpop.f32.mrb[0].mxu0
    %v4145 = vadd.f32 %v3984, %v4144
    %v4146 = vpop.f32.mrb[0].mxu0
    %v4147 = vadd.f32 %v3986, %v4146
    %v4148 = vpop.f32.mrb[0].mxu0
    %v4149 = vadd.f32 %v3988, %v4148
    %4150 = vmatprep.mubr.bf16.mxu0 %v523
    %4151 = vmatmul.mubr.bf16.gmra.mrb[0].mxu0 %v522
    %v4152 = vpop.f32.mrb[0].mxu0
    %v4153 = vadd.f32 %v3992, %v4152
    %v4154 = vpop.f32.mrb[0].mxu0
    %v4155 = vadd.f32 %v3994, %v4154
    %v4156 = vpop.f32.mrb[0].mxu0
    %v4157 = vadd.f32 %v3996, %v4156
    %v4158 = vpop.f32.mrb[0].mxu0
    %v4159 = vadd.f32 %v3998, %v4158
    %4160 = vmatprep.mubr.bf16.mxu0 %v539
    %4161 = vmatmul.mubr.bf16.gmra.mrb[0].mxu0 %v538
    %v4162 = vpop.f32.mrb[0].mxu0
    %v4163 = vadd.f32 %v4002, %v4162
    %v4164 = vpop.f32.mrb[0].mxu0
    %v4165 = vadd.f32 %v4004, %v4164
    %v4166 = vpop.f32.mrb[0].mxu0
    %v4167 = vadd.f32 %v4006, %v4166
    %v4168 = vpop.f32.mrb[0].mxu0
    %v4169 = vadd.f32 %v4008, %v4168
    %4170 = vmatprep.mubr.bf16.mxu0 %v555
    %4171 = vmatmul.mubr.bf16.gmra.mrb[0].mxu0 %v554
    %v4172 = vpop.f32.mrb[0].mxu0
    %v4173 = vadd.f32 %v4012, %v4172
    %v4174 = vpop.f32.mrb[0].mxu0
    %v4175 = vadd.f32 %v4014, %v4174
    %v4176 = vpop.f32.mrb[0].mxu0
    %v4177 = vadd.f32 %v4016, %v4176
    %v4178 = vpop.f32.mrb[0].mxu0
    %v4179 = vadd.f32 %v4018, %v4178
    %4180 = vmatprep.mubr.bf16.mxu0 %v571
    %4181 = vmatmul.mubr.bf16.gmra.mrb[0].mxu0 %v570
    %v4182 = vpop.f32.mrb[0].mxu0
    %v4183 = vadd.f32 %v4022, %v4182
    %v4184 = vpop.f32.mrb[0].mxu0
    %v4185 = vadd.f32 %v4024, %v4184
    %v4186 = vpop.f32.mrb[0].mxu0
    %v4187 = vadd.f32 %v4026, %v4186
    %v4188 = vpop.f32.mrb[0].mxu0
    %v4189 = vadd.f32 %v4028, %v4188
    %4190 = vmatprep.mubr.bf16.mxu0 %v587
    %4191 = vmatmul.mubr.bf16.gmra.mrb[0].mxu0 %v586
    %v4192 = vpop.f32.mrb[0].mxu0
    %v4193 = vadd.f32 %v4032, %v4192
    %v4194 = vpop.f32.mrb[0].mxu0
    %v4195 = vadd.f32 %v4034, %v4194
    %v4196 = vpop.f32.mrb[0].mxu0
    %v4197 = vadd.f32 %v4036, %v4196
    %v4198 = vpop.f32.mrb[0].mxu0
    %v4199 = vadd.f32 %v4038, %v4198
    %4200 = vmatprep.mubr.bf16.mxu0 %v603
    %4201 = vmatmul.mubr.bf16.gmra.mrb[0].mxu0 %v602
    %v4202 = vpop.f32.mrb[0].mxu0
    %v4203 = vadd.f32 %v4042, %v4202
    %v4204 = vpop.f32.mrb[0].mxu0
    %v4205 = vadd.f32 %v4044, %v4204
    %v4206 = vpop.f32.mrb[0].mxu0
    %v4207 = vadd.f32 %v4046, %v4206
    %v4208 = vpop.f32.mrb[0].mxu0
    %v4209 = vadd.f32 %v4048, %v4208
    %4210 = vmatprep.mubr.bf16.mxu0 %v619
    %4211 = vmatmul.mubr.bf16.gmra.mrb[0].mxu0 %v618
    %v4212 = vpop.f32.mrb[0].mxu0
    %v4213 = vadd.f32 %v4052, %v4212
    %v4214 = vpop.f32.mrb[0].mxu0
    %v4215 = vadd.f32 %v4054, %v4214
    %v4216 = vpop.f32.mrb[0].mxu0
    %v4217 = vadd.f32 %v4056, %v4216
    %v4218 = vpop.f32.mrb[0].mxu0
    %v4219 = vadd.f32 %v4058, %v4218
    %4220 = vmatprep.mubr.bf16.mxu0 %v635
    %4221 = vmatmul.mubr.bf16.gmra.mrb[0].mxu0 %v634
    %v4222 = vpop.f32.mrb[0].mxu0
    %v4223 = vadd.f32 %v4062, %v4222
    %v4224 = vpop.f32.mrb[0].mxu0
    %v4225 = vadd.f32 %v4064, %v4224
    %v4226 = vpop.f32.mrb[0].mxu0
    %v4227 = vadd.f32 %v4066, %v4226
    %v4228 = vpop.f32.mrb[0].mxu0
    %v4229 = vadd.f32 %v4068, %v4228
    %4230 = vmatprep.mubr.bf16.mxu0 %v651
    %4231 = vmatmul.mubr.bf16.gmra.mrb[0].mxu0 %v650
    %v4232 = vpop.f32.mrb[0].mxu0
    %v4233 = vadd.f32 %v4072, %v4232
    %v4234 = vpop.f32.mrb[0].mxu0
    %v4235 = vadd.f32 %v4074, %v4234
    %v4236 = vpop.f32.mrb[0].mxu0
    %v4237 = vpop.f32.mrb[0].mxu0
    %4238 = vdwg.mxu0
    %4239 = vmatprep.subr.bf16.mxu0 %v2925
    %4240 = vmatpush1.bf16.msra.mxu0 %v2924
    %4241 = vmatprep.subr.bf16.mxu0 %v2929
    %4242 = vmatpush1.bf16.msra.mxu0 %v2928
    %4243 = vmatprep.subr.bf16.mxu0 %v2933
    %4244 = vmatpush1.bf16.msra.mxu0 %v2932
    %4245 = vmatprep.subr.bf16.mxu0 %v2937
    %4246 = vmatpush1.bf16.msra.mxu0 %v2936
    %4247 = vmatprep.subr.bf16.mxu0 %v2941
    %4248 = vmatpush1.bf16.msra.mxu0 %v2940
    %4249 = vmatprep.subr.bf16.mxu0 %v2945
    %4250 = vmatpush1.bf16.msra.mxu0 %v2944
    %4251 = vmatprep.subr.bf16.mxu0 %v2949
    %4252 = vmatpush1.bf16.msra.mxu0 %v2948
    %4253 = vmatprep.subr.bf16.mxu0 %v2953
    %4254 = vmatpush1.bf16.msra.mxu0 %v2952
    %4255 = vmatprep.subr.bf16.mxu0 %v2957
    %4256 = vmatpush1.bf16.msra.mxu0 %v2956
    %4257 = vmatprep.subr.bf16.mxu0 %v2961
    %4258 = vmatpush1.bf16.msra.mxu0 %v2960
    %4259 = vmatprep.subr.bf16.mxu0 %v2965
    %4260 = vmatpush1.bf16.msra.mxu0 %v2964
    %4261 = vmatprep.subr.bf16.mxu0 %v2969
    %4262 = vmatpush1.bf16.msra.mxu0 %v2968
    %4263 = vmatprep.subr.bf16.mxu0 %v2973
    %4264 = vmatpush1.bf16.msra.mxu0 %v2972
    %4265 = vmatprep.subr.bf16.mxu0 %v2977
    %4266 = vmatpush1.bf16.msra.mxu0 %v2976
    %4267 = vmatprep.subr.bf16.mxu0 %v2981
    %4268 = vmatpush1.bf16.msra.mxu0 %v2980
    %4269 = vmatprep.subr.bf16.mxu0 %v2985
    %4270 = vmatpush1.bf16.msra.mxu0 %v2984
    %4271 = vmatprep.mubr.bf16.mxu0 %v461
    %4272 = vmatmul.mubr.bf16.gmra.mrb[0].mxu0 %v460
    %v4273 = vpop.f32.mrb[0].mxu0
    %v4274 = vadd.f32 %v4113, %v4273
    %v4275 = vpop.f32.mrb[0].mxu0
    %v4276 = vadd.f32 %v4115, %v4275
    %v4277 = vpop.f32.mrb[0].mxu0
    %v4278 = vadd.f32 %v4117, %v4277
    %v4279 = vpop.f32.mrb[0].mxu0
    %v4280 = vadd.f32 %v4119, %v4279
    %4281 = vmatprep.mubr.bf16.mxu0 %v477
    %4282 = vmatmul.mubr.bf16.gmra.mrb[0].mxu0 %v476
    %v4283 = vpop.f32.mrb[0].mxu0
    %v4284 = vadd.f32 %v4123, %v4283
    %v4285 = vpop.f32.mrb[0].mxu0
    %v4286 = vadd.f32 %v4125, %v4285
    %v4287 = vpop.f32.mrb[0].mxu0
    %v4288 = vadd.f32 %v4127, %v4287
    %v4289 = vpop.f32.mrb[0].mxu0
    %v4290 = vadd.f32 %v4129, %v4289
    %4291 = vmatprep.mubr.bf16.mxu0 %v493
    %4292 = vmatmul.mubr.bf16.gmra.mrb[0].mxu0 %v492
    %v4293 = vpop.f32.mrb[0].mxu0
    %v4294 = vadd.f32 %v4133, %v4293
    %v4295 = vpop.f32.mrb[0].mxu0
    %v4296 = vadd.f32 %v4135, %v4295
    %v4297 = vpop.f32.mrb[0].mxu0
    %v4298 = vadd.f32 %v4137, %v4297
    %v4299 = vpop.f32.mrb[0].mxu0
    %v4300 = vadd.f32 %v4139, %v4299
    %4301 = vmatprep.mubr.bf16.mxu0 %v509
    %4302 = vmatmul.mubr.bf16.gmra.mrb[0].mxu0 %v508
    %v4303 = vpop.f32.mrb[0].mxu0
    %v4304 = vadd.f32 %v4143, %v4303
    %v4305 = vpop.f32.mrb[0].mxu0
    %v4306 = vadd.f32 %v4145, %v4305
    %v4307 = vpop.f32.mrb[0].mxu0
    %v4308 = vadd.f32 %v4147, %v4307
    %v4309 = vpop.f32.mrb[0].mxu0
    %v4310 = vadd.f32 %v4149, %v4309
    %4311 = vmatprep.mubr.bf16.mxu0 %v525
    %4312 = vmatmul.mubr.bf16.gmra.mrb[0].mxu0 %v524
    %v4313 = vpop.f32.mrb[0].mxu0
    %v4314 = vadd.f32 %v4153, %v4313
    %v4315 = vpop.f32.mrb[0].mxu0
    %v4316 = vadd.f32 %v4155, %v4315
    %v4317 = vpop.f32.mrb[0].mxu0
    %v4318 = vadd.f32 %v4157, %v4317
    %v4319 = vpop.f32.mrb[0].mxu0
    %v4320 = vadd.f32 %v4159, %v4319
    %4321 = vmatprep.mubr.bf16.mxu0 %v541
    %4322 = vmatmul.mubr.bf16.gmra.mrb[0].mxu0 %v540
    %v4323 = vpop.f32.mrb[0].mxu0
    %v4324 = vadd.f32 %v4163, %v4323
    %v4325 = vpop.f32.mrb[0].mxu0
    %v4326 = vadd.f32 %v4165, %v4325
    %v4327 = vpop.f32.mrb[0].mxu0
    %v4328 = vadd.f32 %v4167, %v4327
    %v4329 = vpop.f32.mrb[0].mxu0
    %v4330 = vadd.f32 %v4169, %v4329
    %4331 = vmatprep.mubr.bf16.mxu0 %v557
    %4332 = vmatmul.mubr.bf16.gmra.mrb[0].mxu0 %v556
    %v4333 = vpop.f32.mrb[0].mxu0
    %v4334 = vadd.f32 %v4173, %v4333
    %v4335 = vpop.f32.mrb[0].mxu0
    %v4336 = vadd.f32 %v4175, %v4335
    %v4337 = vpop.f32.mrb[0].mxu0
    %v4338 = vadd.f32 %v4177, %v4337
    %v4339 = vpop.f32.mrb[0].mxu0
    %v4340 = vadd.f32 %v4179, %v4339
    %4341 = vmatprep.mubr.bf16.mxu0 %v573
    %4342 = vmatmul.mubr.bf16.gmra.mrb[0].mxu0 %v572
    %v4343 = vpop.f32.mrb[0].mxu0
    %v4344 = vadd.f32 %v4183, %v4343
    %v4345 = vpop.f32.mrb[0].mxu0
    %v4346 = vadd.f32 %v4185, %v4345
    %v4347 = vpop.f32.mrb[0].mxu0
    %v4348 = vadd.f32 %v4187, %v4347
    %v4349 = vpop.f32.mrb[0].mxu0
    %v4350 = vadd.f32 %v4189, %v4349
    %4351 = vmatprep.mubr.bf16.mxu0 %v589
    %4352 = vmatmul.mubr.bf16.gmra.mrb[0].mxu0 %v588
    %v4353 = vpop.f32.mrb[0].mxu0
    %v4354 = vadd.f32 %v4193, %v4353
    %v4355 = vpop.f32.mrb[0].mxu0
    %v4356 = vadd.f32 %v4195, %v4355
    %v4357 = vpop.f32.mrb[0].mxu0
    %v4358 = vadd.f32 %v4197, %v4357
    %v4359 = vpop.f32.mrb[0].mxu0
    %v4360 = vadd.f32 %v4199, %v4359
    %4361 = vmatprep.mubr.bf16.mxu0 %v605
    %4362 = vmatmul.mubr.bf16.gmra.mrb[0].mxu0 %v604
    %v4363 = vpop.f32.mrb[0].mxu0
    %v4364 = vadd.f32 %v4203, %v4363
    %v4365 = vpop.f32.mrb[0].mxu0
    %v4366 = vadd.f32 %v4205, %v4365
    %v4367 = vpop.f32.mrb[0].mxu0
    %v4368 = vadd.f32 %v4207, %v4367
    %v4369 = vpop.f32.mrb[0].mxu0
    %v4370 = vadd.f32 %v4209, %v4369
    %4371 = vmatprep.mubr.bf16.mxu0 %v621
    %4372 = vmatmul.mubr.bf16.gmra.mrb[0].mxu0 %v620
    %v4373 = vpop.f32.mrb[0].mxu0
    %v4374 = vadd.f32 %v4213, %v4373
    %v4375 = vpop.f32.mrb[0].mxu0
    %v4376 = vadd.f32 %v4215, %v4375
    %v4377 = vpop.f32.mrb[0].mxu0
    %v4378 = vadd.f32 %v4217, %v4377
    %v4379 = vpop.f32.mrb[0].mxu0
    %v4380 = vadd.f32 %v4219, %v4379
    %4381 = vmatprep.mubr.bf16.mxu0 %v637
    %4382 = vmatmul.mubr.bf16.gmra.mrb[0].mxu0 %v636
    %v4383 = vpop.f32.mrb[0].mxu0
    %v4384 = vadd.f32 %v4223, %v4383
    %v4385 = vpop.f32.mrb[0].mxu0
    %v4386 = vadd.f32 %v4225, %v4385
    %v4387 = vpop.f32.mrb[0].mxu0
    %v4388 = vadd.f32 %v4227, %v4387
    %v4389 = vpop.f32.mrb[0].mxu0
    %v4390 = vadd.f32 %v4229, %v4389
    %4391 = vmatprep.mubr.bf16.mxu0 %v653
    %4392 = vmatmul.mubr.bf16.gmra.mrb[0].mxu0 %v652
    %v4393 = vpop.f32.mrb[0].mxu0
    %v4394 = vadd.f32 %v4233, %v4393
    %v4395 = vpop.f32.mrb[0].mxu0
    %v4396 = vadd.f32 %v4235, %v4395
    %v4397 = vpop.f32.mrb[0].mxu0
    %v4398 = vpop.f32.mrb[0].mxu0
    %4399 = vdwg.mxu0
    %4400 = vmatprep.subr.bf16.mxu0 %v2989
    %4401 = vmatpush1.bf16.msra.mxu0 %v2988
    %4402 = vmatprep.subr.bf16.mxu0 %v2993
    %4403 = vmatpush1.bf16.msra.mxu0 %v2992
    %4404 = vmatprep.subr.bf16.mxu0 %v2997
    %4405 = vmatpush1.bf16.msra.mxu0 %v2996
    %4406 = vmatprep.subr.bf16.mxu0 %v3001
    %4407 = vmatpush1.bf16.msra.mxu0 %v3000
    %4408 = vmatprep.subr.bf16.mxu0 %v3005
    %4409 = vmatpush1.bf16.msra.mxu0 %v3004
    %4410 = vmatprep.subr.bf16.mxu0 %v3009
    %4411 = vmatpush1.bf16.msra.mxu0 %v3008
    %4412 = vmatprep.subr.bf16.mxu0 %v3013
    %4413 = vmatpush1.bf16.msra.mxu0 %v3012
    %4414 = vmatprep.subr.bf16.mxu0 %v3017
    %4415 = vmatpush1.bf16.msra.mxu0 %v3016
    %4416 = vmatprep.subr.bf16.mxu0 %v3021
    %4417 = vmatpush1.bf16.msra.mxu0 %v3020
    %4418 = vmatprep.subr.bf16.mxu0 %v3025
    %4419 = vmatpush1.bf16.msra.mxu0 %v3024
    %4420 = vmatprep.subr.bf16.mxu0 %v3029
    %4421 = vmatpush1.bf16.msra.mxu0 %v3028
    %4422 = vmatprep.subr.bf16.mxu0 %v3033
    %4423 = vmatpush1.bf16.msra.mxu0 %v3032
    %4424 = vmatprep.subr.bf16.mxu0 %v3037
    %4425 = vmatpush1.bf16.msra.mxu0 %v3036
    %4426 = vmatprep.subr.bf16.mxu0 %v3041
    %4427 = vmatpush1.bf16.msra.mxu0 %v3040
    %4428 = vmatprep.subr.bf16.mxu0 %v3045
    %4429 = vmatpush1.bf16.msra.mxu0 %v3044
    %4430 = vmatprep.subr.bf16.mxu0 %v3049
    %4431 = vmatpush1.bf16.msra.mxu0 %v3048
    %4432 = vmatprep.mubr.bf16.mxu0 %v463
    %4433 = vmatmul.mubr.bf16.gmra.mrb[0].mxu0 %v462
    %v4434 = vpop.f32.mrb[0].mxu0
    %v4435 = vadd.f32 %v4274, %v4434
    %v4436 = vpop.f32.mrb[0].mxu0
    %v4437 = vadd.f32 %v4276, %v4436
    %v4438 = vpop.f32.mrb[0].mxu0
    %v4439 = vadd.f32 %v4278, %v4438
    %v4440 = vpop.f32.mrb[0].mxu0
    %v4441 = vadd.f32 %v4280, %v4440
    %4442 = vmatprep.mubr.bf16.mxu0 %v479
    %4443 = vmatmul.mubr.bf16.gmra.mrb[0].mxu0 %v478
    %v4444 = vpop.f32.mrb[0].mxu0
    %v4445 = vadd.f32 %v4284, %v4444
    %v4446 = vpop.f32.mrb[0].mxu0
    %v4447 = vadd.f32 %v4286, %v4446
    %v4448 = vpop.f32.mrb[0].mxu0
    %v4449 = vadd.f32 %v4288, %v4448
    %v4450 = vpop.f32.mrb[0].mxu0
    %v4451 = vadd.f32 %v4290, %v4450
    %4452 = vmatprep.mubr.bf16.mxu0 %v495
    %4453 = vmatmul.mubr.bf16.gmra.mrb[0].mxu0 %v494
    %v4454 = vpop.f32.mrb[0].mxu0
    %v4455 = vadd.f32 %v4294, %v4454
    %v4456 = vpop.f32.mrb[0].mxu0
    %v4457 = vadd.f32 %v4296, %v4456
    %v4458 = vpop.f32.mrb[0].mxu0
    %v4459 = vadd.f32 %v4298, %v4458
    %v4460 = vpop.f32.mrb[0].mxu0
    %v4461 = vadd.f32 %v4300, %v4460
    %4462 = vmatprep.mubr.bf16.mxu0 %v511
    %4463 = vmatmul.mubr.bf16.gmra.mrb[0].mxu0 %v510
    %v4464 = vpop.f32.mrb[0].mxu0
    %v4465 = vadd.f32 %v4304, %v4464
    %v4466 = vpop.f32.mrb[0].mxu0
    %v4467 = vadd.f32 %v4306, %v4466
    %v4468 = vpop.f32.mrb[0].mxu0
    %v4469 = vadd.f32 %v4308, %v4468
    %v4470 = vpop.f32.mrb[0].mxu0
    %v4471 = vadd.f32 %v4310, %v4470
    %4472 = vmatprep.mubr.bf16.mxu0 %v527
    %4473 = vmatmul.mubr.bf16.gmra.mrb[0].mxu0 %v526
    %v4474 = vpop.f32.mrb[0].mxu0
    %v4475 = vadd.f32 %v4314, %v4474
    %v4476 = vpop.f32.mrb[0].mxu0
    %v4477 = vadd.f32 %v4316, %v4476
    %v4478 = vpop.f32.mrb[0].mxu0
    %v4479 = vadd.f32 %v4318, %v4478
    %v4480 = vpop.f32.mrb[0].mxu0
    %v4481 = vadd.f32 %v4320, %v4480
    %4482 = vmatprep.mubr.bf16.mxu0 %v543
    %4483 = vmatmul.mubr.bf16.gmra.mrb[0].mxu0 %v542
    %v4484 = vpop.f32.mrb[0].mxu0
    %v4485 = vadd.f32 %v4324, %v4484
    %v4486 = vpop.f32.mrb[0].mxu0
    %v4487 = vadd.f32 %v4326, %v4486
    %v4488 = vpop.f32.mrb[0].mxu0
    %v4489 = vadd.f32 %v4328, %v4488
    %v4490 = vpop.f32.mrb[0].mxu0
    %v4491 = vadd.f32 %v4330, %v4490
    %4492 = vmatprep.mubr.bf16.mxu0 %v559
    %4493 = vmatmul.mubr.bf16.gmra.mrb[0].mxu0 %v558
    %v4494 = vpop.f32.mrb[0].mxu0
    %v4495 = vadd.f32 %v4334, %v4494
    %v4496 = vpop.f32.mrb[0].mxu0
    %v4497 = vadd.f32 %v4336, %v4496
    %v4498 = vpop.f32.mrb[0].mxu0
    %v4499 = vadd.f32 %v4338, %v4498
    %v4500 = vpop.f32.mrb[0].mxu0
    %v4501 = vadd.f32 %v4340, %v4500
    %4502 = vmatprep.mubr.bf16.mxu0 %v575
    %4503 = vmatmul.mubr.bf16.gmra.mrb[0].mxu0 %v574
    %v4504 = vpop.f32.mrb[0].mxu0
    %v4505 = vadd.f32 %v4344, %v4504
    %v4506 = vpop.f32.mrb[0].mxu0
    %v4507 = vadd.f32 %v4346, %v4506
    %v4508 = vpop.f32.mrb[0].mxu0
    %v4509 = vadd.f32 %v4348, %v4508
    %v4510 = vpop.f32.mrb[0].mxu0
    %v4511 = vadd.f32 %v4350, %v4510
    %4512 = vmatprep.mubr.bf16.mxu0 %v591
    %4513 = vmatmul.mubr.bf16.gmra.mrb[0].mxu0 %v590
    %v4514 = vpop.f32.mrb[0].mxu0
    %v4515 = vadd.f32 %v4354, %v4514
    %v4516 = vpop.f32.mrb[0].mxu0
    %v4517 = vadd.f32 %v4356, %v4516
    %v4518 = vpop.f32.mrb[0].mxu0
    %v4519 = vadd.f32 %v4358, %v4518
    %v4520 = vpop.f32.mrb[0].mxu0
    %v4521 = vadd.f32 %v4360, %v4520
    %4522 = vmatprep.mubr.bf16.mxu0 %v607
    %4523 = vmatmul.mubr.bf16.gmra.mrb[0].mxu0 %v606
    %v4524 = vpop.f32.mrb[0].mxu0
    %v4525 = vadd.f32 %v4364, %v4524
    %v4526 = vpop.f32.mrb[0].mxu0
    %v4527 = vadd.f32 %v4366, %v4526
    %v4528 = vpop.f32.mrb[0].mxu0
    %v4529 = vadd.f32 %v4368, %v4528
    %v4530 = vpop.f32.mrb[0].mxu0
    %v4531 = vadd.f32 %v4370, %v4530
    %4532 = vmatprep.mubr.bf16.mxu0 %v623
    %4533 = vmatmul.mubr.bf16.gmra.mrb[0].mxu0 %v622
    %v4534 = vpop.f32.mrb[0].mxu0
    %v4535 = vadd.f32 %v4374, %v4534
    %v4536 = vpop.f32.mrb[0].mxu0
    %v4537 = vadd.f32 %v4376, %v4536
    %v4538 = vpop.f32.mrb[0].mxu0
    %v4539 = vadd.f32 %v4378, %v4538
    %v4540 = vpop.f32.mrb[0].mxu0
    %v4541 = vadd.f32 %v4380, %v4540
    %4542 = vmatprep.mubr.bf16.mxu0 %v639
    %4543 = vmatmul.mubr.bf16.gmra.mrb[0].mxu0 %v638
    %v4544 = vpop.f32.mrb[0].mxu0
    %v4545 = vadd.f32 %v4384, %v4544
    %v4546 = vpop.f32.mrb[0].mxu0
    %v4547 = vadd.f32 %v4386, %v4546
    %v4548 = vpop.f32.mrb[0].mxu0
    %v4549 = vadd.f32 %v4388, %v4548
    %v4550 = vpop.f32.mrb[0].mxu0
    %v4551 = vadd.f32 %v4390, %v4550
    %4552 = vmatprep.mubr.bf16.mxu0 %v655
    %4553 = vmatmul.mubr.bf16.gmra.mrb[0].mxu0 %v654
    %v4554 = vpop.f32.mrb[0].mxu0
    %v4555 = vadd.f32 %v4394, %v4554
    %v4556 = vpop.f32.mrb[0].mxu0
    %v4557 = vadd.f32 %v4396, %v4556
    %v4558 = vpop.f32.mrb[0].mxu0
    %v4559 = vpop.f32.mrb[0].mxu0
    %4560 = vdwg.mxu0
    %4561 = vmatprep.subr.bf16.mxu0 %v3053
    %4562 = vmatpush1.bf16.msra.mxu0 %v3052
    %4563 = vmatprep.subr.bf16.mxu0 %v3057
    %4564 = vmatpush1.bf16.msra.mxu0 %v3056
    %4565 = vmatprep.subr.bf16.mxu0 %v3061
    %4566 = vmatpush1.bf16.msra.mxu0 %v3060
    %4567 = vmatprep.subr.bf16.mxu0 %v3065
    %4568 = vmatpush1.bf16.msra.mxu0 %v3064
    %4569 = vmatprep.subr.bf16.mxu0 %v3069
    %4570 = vmatpush1.bf16.msra.mxu0 %v3068
    %4571 = vmatprep.subr.bf16.mxu0 %v3073
    %4572 = vmatpush1.bf16.msra.mxu0 %v3072
    %4573 = vmatprep.subr.bf16.mxu0 %v3077
    %4574 = vmatpush1.bf16.msra.mxu0 %v3076
    %4575 = vmatprep.subr.bf16.mxu0 %v3081
    %4576 = vmatpush1.bf16.msra.mxu0 %v3080
    %4577 = vmatprep.subr.bf16.mxu0 %v3085
    %4578 = vmatpush1.bf16.msra.mxu0 %v3084
    %4579 = vmatprep.subr.bf16.mxu0 %v3089
    %4580 = vmatpush1.bf16.msra.mxu0 %v3088
    %4581 = vmatprep.subr.bf16.mxu0 %v3093
    %4582 = vmatpush1.bf16.msra.mxu0 %v3092
    %4583 = vmatprep.subr.bf16.mxu0 %v3097
    %4584 = vmatpush1.bf16.msra.mxu0 %v3096
    %4585 = vmatprep.subr.bf16.mxu0 %v3101
    %4586 = vmatpush1.bf16.msra.mxu0 %v3100
    %4587 = vmatprep.subr.bf16.mxu0 %v3105
    %4588 = vmatpush1.bf16.msra.mxu0 %v3104
    %4589 = vmatprep.subr.bf16.mxu0 %v3109
    %4590 = vmatpush1.bf16.msra.mxu0 %v3108
    %4591 = vmatprep.subr.bf16.mxu0 %v3113
    %4592 = vmatpush1.bf16.msra.mxu0 %v3112
    %4593 = vmatprep.mubr.bf16.mxu0 %v465
    %4594 = vmatmul.mubr.bf16.gmra.mrb[0].mxu0 %v464
    %v4595 = vpop.f32.mrb[0].mxu0
    %v4596 = vadd.f32 %v4435, %v4595
    %v4597 = vpop.f32.mrb[0].mxu0
    %v4598 = vadd.f32 %v4437, %v4597
    %v4599 = vpop.f32.mrb[0].mxu0
    %v4600 = vadd.f32 %v4439, %v4599
    %v4601 = vpop.f32.mrb[0].mxu0
    %v4602 = vadd.f32 %v4441, %v4601
    %4603 = vmatprep.mubr.bf16.mxu0 %v481
    %4604 = vmatmul.mubr.bf16.gmra.mrb[0].mxu0 %v480
    %v4605 = vpop.f32.mrb[0].mxu0
    %v4606 = vadd.f32 %v4445, %v4605
    %v4607 = vpop.f32.mrb[0].mxu0
    %v4608 = vadd.f32 %v4447, %v4607
    %v4609 = vpop.f32.mrb[0].mxu0
    %v4610 = vadd.f32 %v4449, %v4609
    %v4611 = vpop.f32.mrb[0].mxu0
    %v4612 = vadd.f32 %v4451, %v4611
    %4613 = vmatprep.mubr.bf16.mxu0 %v497
    %4614 = vmatmul.mubr.bf16.gmra.mrb[0].mxu0 %v496
    %v4615 = vpop.f32.mrb[0].mxu0
    %v4616 = vadd.f32 %v4455, %v4615
    %v4617 = vpop.f32.mrb[0].mxu0
    %v4618 = vadd.f32 %v4457, %v4617
    %v4619 = vpop.f32.mrb[0].mxu0
    %v4620 = vadd.f32 %v4459, %v4619
    %v4621 = vpop.f32.mrb[0].mxu0
    %v4622 = vadd.f32 %v4461, %v4621
    %4623 = vmatprep.mubr.bf16.mxu0 %v513
    %4624 = vmatmul.mubr.bf16.gmra.mrb[0].mxu0 %v512
    %v4625 = vpop.f32.mrb[0].mxu0
    %v4626 = vadd.f32 %v4465, %v4625
    %v4627 = vpop.f32.mrb[0].mxu0
    %v4628 = vadd.f32 %v4467, %v4627
    %v4629 = vpop.f32.mrb[0].mxu0
    %v4630 = vadd.f32 %v4469, %v4629
    %v4631 = vpop.f32.mrb[0].mxu0
    %v4632 = vadd.f32 %v4471, %v4631
    %4633 = vmatprep.mubr.bf16.mxu0 %v529
    %4634 = vmatmul.mubr.bf16.gmra.mrb[0].mxu0 %v528
    %v4635 = vpop.f32.mrb[0].mxu0
    %v4636 = vadd.f32 %v4475, %v4635
    %v4637 = vpop.f32.mrb[0].mxu0
    %v4638 = vadd.f32 %v4477, %v4637
    %v4639 = vpop.f32.mrb[0].mxu0
    %v4640 = vadd.f32 %v4479, %v4639
    %v4641 = vpop.f32.mrb[0].mxu0
    %v4642 = vadd.f32 %v4481, %v4641
    %4643 = vmatprep.mubr.bf16.mxu0 %v545
    %4644 = vmatmul.mubr.bf16.gmra.mrb[0].mxu0 %v544
    %v4645 = vpop.f32.mrb[0].mxu0
    %v4646 = vadd.f32 %v4485, %v4645
    %v4647 = vpop.f32.mrb[0].mxu0
    %v4648 = vadd.f32 %v4487, %v4647
    %v4649 = vpop.f32.mrb[0].mxu0
    %v4650 = vadd.f32 %v4489, %v4649
    %v4651 = vpop.f32.mrb[0].mxu0
    %v4652 = vadd.f32 %v4491, %v4651
    %4653 = vmatprep.mubr.bf16.mxu0 %v561
    %4654 = vmatmul.mubr.bf16.gmra.mrb[0].mxu0 %v560
    %v4655 = vpop.f32.mrb[0].mxu0
    %v4656 = vadd.f32 %v4495, %v4655
    %v4657 = vpop.f32.mrb[0].mxu0
    %v4658 = vadd.f32 %v4497, %v4657
    %v4659 = vpop.f32.mrb[0].mxu0
    %v4660 = vadd.f32 %v4499, %v4659
    %v4661 = vpop.f32.mrb[0].mxu0
    %v4662 = vadd.f32 %v4501, %v4661
    %4663 = vmatprep.mubr.bf16.mxu0 %v577
    %4664 = vmatmul.mubr.bf16.gmra.mrb[0].mxu0 %v576
    %v4665 = vpop.f32.mrb[0].mxu0
    %v4666 = vadd.f32 %v4505, %v4665
    %v4667 = vpop.f32.mrb[0].mxu0
    %v4668 = vadd.f32 %v4507, %v4667
    %v4669 = vpop.f32.mrb[0].mxu0
    %v4670 = vadd.f32 %v4509, %v4669
    %v4671 = vpop.f32.mrb[0].mxu0
    %v4672 = vadd.f32 %v4511, %v4671
    %4673 = vmatprep.mubr.bf16.mxu0 %v593
    %4674 = vmatmul.mubr.bf16.gmra.mrb[0].mxu0 %v592
    %v4675 = vpop.f32.mrb[0].mxu0
    %v4676 = vadd.f32 %v4515, %v4675
    %v4677 = vpop.f32.mrb[0].mxu0
    %v4678 = vadd.f32 %v4517, %v4677
    %v4679 = vpop.f32.mrb[0].mxu0
    %v4680 = vadd.f32 %v4519, %v4679
    %v4681 = vpop.f32.mrb[0].mxu0
    %v4682 = vadd.f32 %v4521, %v4681
    %4683 = vmatprep.mubr.bf16.mxu0 %v609
    %4684 = vmatmul.mubr.bf16.gmra.mrb[0].mxu0 %v608
    %v4685 = vpop.f32.mrb[0].mxu0
    %v4686 = vadd.f32 %v4525, %v4685
    %v4687 = vpop.f32.mrb[0].mxu0
    %v4688 = vadd.f32 %v4527, %v4687
    %v4689 = vpop.f32.mrb[0].mxu0
    %v4690 = vadd.f32 %v4529, %v4689
    %v4691 = vpop.f32.mrb[0].mxu0
    %v4692 = vadd.f32 %v4531, %v4691
    %4693 = vmatprep.mubr.bf16.mxu0 %v625
    %4694 = vmatmul.mubr.bf16.gmra.mrb[0].mxu0 %v624
    %v4695 = vpop.f32.mrb[0].mxu0
    %v4696 = vadd.f32 %v4535, %v4695
    %v4697 = vpop.f32.mrb[0].mxu0
    %v4698 = vadd.f32 %v4537, %v4697
    %v4699 = vpop.f32.mrb[0].mxu0
    %v4700 = vadd.f32 %v4539, %v4699
    %v4701 = vpop.f32.mrb[0].mxu0
    %v4702 = vadd.f32 %v4541, %v4701
    %4703 = vmatprep.mubr.bf16.mxu0 %v641
    %4704 = vmatmul.mubr.bf16.gmra.mrb[0].mxu0 %v640
    %v4705 = vpop.f32.mrb[0].mxu0
    %v4706 = vadd.f32 %v4545, %v4705
    %v4707 = vpop.f32.mrb[0].mxu0
    %v4708 = vadd.f32 %v4547, %v4707
    %v4709 = vpop.f32.mrb[0].mxu0
    %v4710 = vadd.f32 %v4549, %v4709
    %v4711 = vpop.f32.mrb[0].mxu0
    %v4712 = vadd.f32 %v4551, %v4711
    %4713 = vmatprep.mubr.bf16.mxu0 %v657
    %4714 = vmatmul.mubr.bf16.gmra.mrb[0].mxu0 %v656
    %v4715 = vpop.f32.mrb[0].mxu0
    %v4716 = vadd.f32 %v4555, %v4715
    %v4717 = vpop.f32.mrb[0].mxu0
    %v4718 = vadd.f32 %v4557, %v4717
    %v4719 = vpop.f32.mrb[0].mxu0
    %v4720 = vpop.f32.mrb[0].mxu0
    %4721 = vdwg.mxu0
    %4722 = vmatprep.subr.bf16.mxu0 %v3117
    %4723 = vmatpush1.bf16.msra.mxu0 %v3116
    %4724 = vmatprep.subr.bf16.mxu0 %v3121
    %4725 = vmatpush1.bf16.msra.mxu0 %v3120
    %4726 = vmatprep.subr.bf16.mxu0 %v3125
    %4727 = vmatpush1.bf16.msra.mxu0 %v3124
    %4728 = vmatprep.subr.bf16.mxu0 %v3129
    %4729 = vmatpush1.bf16.msra.mxu0 %v3128
    %4730 = vmatprep.subr.bf16.mxu0 %v3133
    %4731 = vmatpush1.bf16.msra.mxu0 %v3132
    %4732 = vmatprep.subr.bf16.mxu0 %v3137
    %4733 = vmatpush1.bf16.msra.mxu0 %v3136
    %4734 = vmatprep.subr.bf16.mxu0 %v3141
    %4735 = vmatpush1.bf16.msra.mxu0 %v3140
    %4736 = vmatprep.subr.bf16.mxu0 %v3145
    %4737 = vmatpush1.bf16.msra.mxu0 %v3144
    %4738 = vmatprep.subr.bf16.mxu0 %v3149
    %4739 = vmatpush1.bf16.msra.mxu0 %v3148
    %4740 = vmatprep.subr.bf16.mxu0 %v3153
    %4741 = vmatpush1.bf16.msra.mxu0 %v3152
    %4742 = vmatprep.subr.bf16.mxu0 %v3157
    %4743 = vmatpush1.bf16.msra.mxu0 %v3156
    %4744 = vmatprep.subr.bf16.mxu0 %v3161
    %4745 = vmatpush1.bf16.msra.mxu0 %v3160
    %4746 = vmatprep.subr.bf16.mxu0 %v3165
    %4747 = vmatpush1.bf16.msra.mxu0 %v3164
    %4748 = vmatprep.subr.bf16.mxu0 %v3169
    %4749 = vmatpush1.bf16.msra.mxu0 %v3168
    %4750 = vmatprep.subr.bf16.mxu0 %v3173
    %4751 = vmatpush1.bf16.msra.mxu0 %v3172
    %4752 = vmatprep.subr.bf16.mxu0 %v3177
    %4753 = vmatpush1.bf16.msra.mxu0 %v3176
    %4754 = vmatprep.mubr.bf16.mxu0 %v467
    %4755 = vmatmul.mubr.bf16.gmra.mrb[0].mxu0 %v466
    %v4756 = vpop.f32.mrb[0].mxu0
    %v4757 = vadd.f32 %v4596, %v4756
    %v4758 = vpop.f32.mrb[0].mxu0
    %v4759 = vadd.f32 %v4598, %v4758
    %v4760 = vpop.f32.mrb[0].mxu0
    %v4761 = vadd.f32 %v4600, %v4760
    %v4762 = vpop.f32.mrb[0].mxu0
    %v4763 = vadd.f32 %v4602, %v4762
    %4764 = vmatprep.mubr.bf16.mxu0 %v483
    %4765 = vmatmul.mubr.bf16.gmra.mrb[0].mxu0 %v482
    %v4766 = vpop.f32.mrb[0].mxu0
    %v4767 = vadd.f32 %v4606, %v4766
    %v4768 = vpop.f32.mrb[0].mxu0
    %v4769 = vadd.f32 %v4608, %v4768
    %v4770 = vpop.f32.mrb[0].mxu0
    %v4771 = vadd.f32 %v4610, %v4770
    %v4772 = vpop.f32.mrb[0].mxu0
    %v4773 = vadd.f32 %v4612, %v4772
    %4774 = vmatprep.mubr.bf16.mxu0 %v499
    %4775 = vmatmul.mubr.bf16.gmra.mrb[0].mxu0 %v498
    %v4776 = vpop.f32.mrb[0].mxu0
    %v4777 = vadd.f32 %v4616, %v4776
    %v4778 = vpop.f32.mrb[0].mxu0
    %v4779 = vadd.f32 %v4618, %v4778
    %v4780 = vpop.f32.mrb[0].mxu0
    %v4781 = vadd.f32 %v4620, %v4780
    %v4782 = vpop.f32.mrb[0].mxu0
    %v4783 = vadd.f32 %v4622, %v4782
    %4784 = vmatprep.mubr.bf16.mxu0 %v515
    %4785 = vmatmul.mubr.bf16.gmra.mrb[0].mxu0 %v514
    %v4786 = vpop.f32.mrb[0].mxu0
    %v4787 = vadd.f32 %v4626, %v4786
    %v4788 = vpop.f32.mrb[0].mxu0
    %v4789 = vadd.f32 %v4628, %v4788
    %v4790 = vpop.f32.mrb[0].mxu0
    %v4791 = vadd.f32 %v4630, %v4790
    %v4792 = vpop.f32.mrb[0].mxu0
    %v4793 = vadd.f32 %v4632, %v4792
    %4794 = vmatprep.mubr.bf16.mxu0 %v531
    %4795 = vmatmul.mubr.bf16.gmra.mrb[0].mxu0 %v530
    %v4796 = vpop.f32.mrb[0].mxu0
    %v4797 = vadd.f32 %v4636, %v4796
    %v4798 = vpop.f32.mrb[0].mxu0
    %v4799 = vadd.f32 %v4638, %v4798
    %v4800 = vpop.f32.mrb[0].mxu0
    %v4801 = vadd.f32 %v4640, %v4800
    %v4802 = vpop.f32.mrb[0].mxu0
    %v4803 = vadd.f32 %v4642, %v4802
    %4804 = vmatprep.mubr.bf16.mxu0 %v547
    %4805 = vmatmul.mubr.bf16.gmra.mrb[0].mxu0 %v546
    %v4806 = vpop.f32.mrb[0].mxu0
    %v4807 = vadd.f32 %v4646, %v4806
    %v4808 = vpop.f32.mrb[0].mxu0
    %v4809 = vadd.f32 %v4648, %v4808
    %v4810 = vpop.f32.mrb[0].mxu0
    %v4811 = vadd.f32 %v4650, %v4810
    %v4812 = vpop.f32.mrb[0].mxu0
    %v4813 = vadd.f32 %v4652, %v4812
    %4814 = vmatprep.mubr.bf16.mxu0 %v563
    %4815 = vmatmul.mubr.bf16.gmra.mrb[0].mxu0 %v562
    %v4816 = vpop.f32.mrb[0].mxu0
    %v4817 = vadd.f32 %v4656, %v4816
    %v4818 = vpop.f32.mrb[0].mxu0
    %v4819 = vadd.f32 %v4658, %v4818
    %v4820 = vpop.f32.mrb[0].mxu0
    %v4821 = vadd.f32 %v4660, %v4820
    %v4822 = vpop.f32.mrb[0].mxu0
    %v4823 = vadd.f32 %v4662, %v4822
    %4824 = vmatprep.mubr.bf16.mxu0 %v579
    %4825 = vmatmul.mubr.bf16.gmra.mrb[0].mxu0 %v578
    %v4826 = vpop.f32.mrb[0].mxu0
    %v4827 = vadd.f32 %v4666, %v4826
    %v4828 = vpop.f32.mrb[0].mxu0
    %v4829 = vadd.f32 %v4668, %v4828
    %v4830 = vpop.f32.mrb[0].mxu0
    %v4831 = vadd.f32 %v4670, %v4830
    %v4832 = vpop.f32.mrb[0].mxu0
    %v4833 = vadd.f32 %v4672, %v4832
    %4834 = vmatprep.mubr.bf16.mxu0 %v595
    %4835 = vmatmul.mubr.bf16.gmra.mrb[0].mxu0 %v594
    %v4836 = vpop.f32.mrb[0].mxu0
    %v4837 = vadd.f32 %v4676, %v4836
    %v4838 = vpop.f32.mrb[0].mxu0
    %v4839 = vadd.f32 %v4678, %v4838
    %v4840 = vpop.f32.mrb[0].mxu0
    %v4841 = vadd.f32 %v4680, %v4840
    %v4842 = vpop.f32.mrb[0].mxu0
    %v4843 = vadd.f32 %v4682, %v4842
    %4844 = vmatprep.mubr.bf16.mxu0 %v611
    %4845 = vmatmul.mubr.bf16.gmra.mrb[0].mxu0 %v610
    %v4846 = vpop.f32.mrb[0].mxu0
    %v4847 = vadd.f32 %v4686, %v4846
    %v4848 = vpop.f32.mrb[0].mxu0
    %v4849 = vadd.f32 %v4688, %v4848
    %v4850 = vpop.f32.mrb[0].mxu0
    %v4851 = vadd.f32 %v4690, %v4850
    %v4852 = vpop.f32.mrb[0].mxu0
    %v4853 = vadd.f32 %v4692, %v4852
    %4854 = vmatprep.mubr.bf16.mxu0 %v627
    %4855 = vmatmul.mubr.bf16.gmra.mrb[0].mxu0 %v626
    %v4856 = vpop.f32.mrb[0].mxu0
    %v4857 = vadd.f32 %v4696, %v4856
    %v4858 = vpop.f32.mrb[0].mxu0
    %v4859 = vadd.f32 %v4698, %v4858
    %v4860 = vpop.f32.mrb[0].mxu0
    %v4861 = vadd.f32 %v4700, %v4860
    %v4862 = vpop.f32.mrb[0].mxu0
    %v4863 = vadd.f32 %v4702, %v4862
    %4864 = vmatprep.mubr.bf16.mxu0 %v643
    %4865 = vmatmul.mubr.bf16.gmra.mrb[0].mxu0 %v642
    %v4866 = vpop.f32.mrb[0].mxu0
    %v4867 = vadd.f32 %v4706, %v4866
    %v4868 = vpop.f32.mrb[0].mxu0
    %v4869 = vadd.f32 %v4708, %v4868
    %v4870 = vpop.f32.mrb[0].mxu0
    %v4871 = vadd.f32 %v4710, %v4870
    %v4872 = vpop.f32.mrb[0].mxu0
    %v4873 = vadd.f32 %v4712, %v4872
    %4874 = vmatprep.mubr.bf16.mxu0 %v659
    %4875 = vmatmul.mubr.bf16.gmra.mrb[0].mxu0 %v658
    %v4876 = vpop.f32.mrb[0].mxu0
    %v4877 = vadd.f32 %v4716, %v4876
    %v4878 = vpop.f32.mrb[0].mxu0
    %v4879 = vadd.f32 %v4718, %v4878
    %v4880 = vpop.f32.mrb[0].mxu0
    %v4881 = vpop.f32.mrb[0].mxu0
    %4882 = vdwg.mxu0
    %4883 = vmatprep.subr.bf16.mxu0 %v3181
    %4884 = vmatpush1.bf16.msra.mxu0 %v3180
    %4885 = vmatprep.subr.bf16.mxu0 %v3185
    %4886 = vmatpush1.bf16.msra.mxu0 %v3184
    %4887 = vmatprep.subr.bf16.mxu0 %v3189
    %4888 = vmatpush1.bf16.msra.mxu0 %v3188
    %4889 = vmatprep.subr.bf16.mxu0 %v3193
    %4890 = vmatpush1.bf16.msra.mxu0 %v3192
    %4891 = vmatprep.subr.bf16.mxu0 %v3197
    %4892 = vmatpush1.bf16.msra.mxu0 %v3196
    %4893 = vmatprep.subr.bf16.mxu0 %v3201
    %4894 = vmatpush1.bf16.msra.mxu0 %v3200
    %4895 = vmatprep.subr.bf16.mxu0 %v3205
    %4896 = vmatpush1.bf16.msra.mxu0 %v3204
    %4897 = vmatprep.subr.bf16.mxu0 %v3209
    %4898 = vmatpush1.bf16.msra.mxu0 %v3208
    %4899 = vmatprep.subr.bf16.mxu0 %v3213
    %4900 = vmatpush1.bf16.msra.mxu0 %v3212
    %4901 = vmatprep.subr.bf16.mxu0 %v3217
    %4902 = vmatpush1.bf16.msra.mxu0 %v3216
    %4903 = vmatprep.subr.bf16.mxu0 %v3221
    %4904 = vmatpush1.bf16.msra.mxu0 %v3220
    %4905 = vmatprep.subr.bf16.mxu0 %v3225
    %4906 = vmatpush1.bf16.msra.mxu0 %v3224
    %4907 = vmatprep.subr.bf16.mxu0 %v3229
    %4908 = vmatpush1.bf16.msra.mxu0 %v3228
    %4909 = vmatprep.subr.bf16.mxu0 %v3233
    %4910 = vmatpush1.bf16.msra.mxu0 %v3232
    %4911 = vmatprep.subr.bf16.mxu0 %v3237
    %4912 = vmatpush1.bf16.msra.mxu0 %v3236
    %4913 = vmatprep.subr.bf16.mxu0 %v3241
    %4914 = vmatpush1.bf16.msra.mxu0 %v3240
    %4915 = vmatprep.mubr.bf16.mxu0 %v469
    %4916 = vmatmul.mubr.bf16.gmra.mrb[0].mxu0 %v468
    %v4917 = vpop.f32.mrb[0].mxu0
    %v4918 = vadd.f32 %v4757, %v4917
    %v4919 = vpop.f32.mrb[0].mxu0
    %v4920 = vadd.f32 %v4759, %v4919
    %v4921 = vpop.f32.mrb[0].mxu0
    %v4922 = vadd.f32 %v4761, %v4921
    %v4923 = vpop.f32.mrb[0].mxu0
    %v4924 = vadd.f32 %v4763, %v4923
    %4925 = vmatprep.mubr.bf16.mxu0 %v485
    %4926 = vmatmul.mubr.bf16.gmra.mrb[0].mxu0 %v484
    %v4927 = vpop.f32.mrb[0].mxu0
    %v4928 = vadd.f32 %v4767, %v4927
    %v4929 = vpop.f32.mrb[0].mxu0
    %v4930 = vadd.f32 %v4769, %v4929
    %v4931 = vpop.f32.mrb[0].mxu0
    %v4932 = vadd.f32 %v4771, %v4931
    %v4933 = vpop.f32.mrb[0].mxu0
    %v4934 = vadd.f32 %v4773, %v4933
    %4935 = vmatprep.mubr.bf16.mxu0 %v501
    %4936 = vmatmul.mubr.bf16.gmra.mrb[0].mxu0 %v500
    %v4937 = vpop.f32.mrb[0].mxu0
    %v4938 = vadd.f32 %v4777, %v4937
    %v4939 = vpop.f32.mrb[0].mxu0
    %v4940 = vadd.f32 %v4779, %v4939
    %v4941 = vpop.f32.mrb[0].mxu0
    %v4942 = vadd.f32 %v4781, %v4941
    %v4943 = vpop.f32.mrb[0].mxu0
    %v4944 = vadd.f32 %v4783, %v4943
    %4945 = vmatprep.mubr.bf16.mxu0 %v517
    %4946 = vmatmul.mubr.bf16.gmra.mrb[0].mxu0 %v516
    %v4947 = vpop.f32.mrb[0].mxu0
    %v4948 = vadd.f32 %v4787, %v4947
    %v4949 = vpop.f32.mrb[0].mxu0
    %v4950 = vadd.f32 %v4789, %v4949
    %v4951 = vpop.f32.mrb[0].mxu0
    %v4952 = vadd.f32 %v4791, %v4951
    %v4953 = vpop.f32.mrb[0].mxu0
    %v4954 = vadd.f32 %v4793, %v4953
    %4955 = vmatprep.mubr.bf16.mxu0 %v533
    %4956 = vmatmul.mubr.bf16.gmra.mrb[0].mxu0 %v532
    %v4957 = vpop.f32.mrb[0].mxu0
    %v4958 = vadd.f32 %v4797, %v4957
    %v4959 = vpop.f32.mrb[0].mxu0
    %v4960 = vadd.f32 %v4799, %v4959
    %v4961 = vpop.f32.mrb[0].mxu0
    %v4962 = vadd.f32 %v4801, %v4961
    %v4963 = vpop.f32.mrb[0].mxu0
    %v4964 = vadd.f32 %v4803, %v4963
    %4965 = vmatprep.mubr.bf16.mxu0 %v549
    %4966 = vmatmul.mubr.bf16.gmra.mrb[0].mxu0 %v548
    %v4967 = vpop.f32.mrb[0].mxu0
    %v4968 = vadd.f32 %v4807, %v4967
    %v4969 = vpop.f32.mrb[0].mxu0
    %v4970 = vadd.f32 %v4809, %v4969
    %v4971 = vpop.f32.mrb[0].mxu0
    %v4972 = vadd.f32 %v4811, %v4971
    %v4973 = vpop.f32.mrb[0].mxu0
    %v4974 = vadd.f32 %v4813, %v4973
    %4975 = vmatprep.mubr.bf16.mxu0 %v565
    %4976 = vmatmul.mubr.bf16.gmra.mrb[0].mxu0 %v564
    %v4977 = vpop.f32.mrb[0].mxu0
    %v4978 = vadd.f32 %v4817, %v4977
    %v4979 = vpop.f32.mrb[0].mxu0
    %v4980 = vadd.f32 %v4819, %v4979
    %v4981 = vpop.f32.mrb[0].mxu0
    %v4982 = vadd.f32 %v4821, %v4981
    %v4983 = vpop.f32.mrb[0].mxu0
    %v4984 = vadd.f32 %v4823, %v4983
    %4985 = vmatprep.mubr.bf16.mxu0 %v581
    %4986 = vmatmul.mubr.bf16.gmra.mrb[0].mxu0 %v580
    %v4987 = vpop.f32.mrb[0].mxu0
    %v4988 = vadd.f32 %v4827, %v4987
    %v4989 = vpop.f32.mrb[0].mxu0
    %v4990 = vadd.f32 %v4829, %v4989
    %v4991 = vpop.f32.mrb[0].mxu0
    %v4992 = vadd.f32 %v4831, %v4991
    %v4993 = vpop.f32.mrb[0].mxu0
    %v4994 = vadd.f32 %v4833, %v4993
    %4995 = vmatprep.mubr.bf16.mxu0 %v597
    %4996 = vmatmul.mubr.bf16.gmra.mrb[0].mxu0 %v596
    %v4997 = vpop.f32.mrb[0].mxu0
    %v4998 = vadd.f32 %v4837, %v4997
    %v4999 = vpop.f32.mrb[0].mxu0
    %v5000 = vadd.f32 %v4839, %v4999
    %v5001 = vpop.f32.mrb[0].mxu0
    %v5002 = vadd.f32 %v4841, %v5001
    %v5003 = vpop.f32.mrb[0].mxu0
    %v5004 = vadd.f32 %v4843, %v5003
    %5005 = vmatprep.mubr.bf16.mxu0 %v613
    %5006 = vmatmul.mubr.bf16.gmra.mrb[0].mxu0 %v612
    %v5007 = vpop.f32.mrb[0].mxu0
    %v5008 = vadd.f32 %v4847, %v5007
    %v5009 = vpop.f32.mrb[0].mxu0
    %v5010 = vadd.f32 %v4849, %v5009
    %v5011 = vpop.f32.mrb[0].mxu0
    %v5012 = vadd.f32 %v4851, %v5011
    %v5013 = vpop.f32.mrb[0].mxu0
    %v5014 = vadd.f32 %v4853, %v5013
    %5015 = vmatprep.mubr.bf16.mxu0 %v629
    %5016 = vmatmul.mubr.bf16.gmra.mrb[0].mxu0 %v628
    %v5017 = vpop.f32.mrb[0].mxu0
    %v5018 = vadd.f32 %v4857, %v5017
    %v5019 = vpop.f32.mrb[0].mxu0
    %v5020 = vadd.f32 %v4859, %v5019
    %v5021 = vpop.f32.mrb[0].mxu0
    %v5022 = vadd.f32 %v4861, %v5021
    %v5023 = vpop.f32.mrb[0].mxu0
    %v5024 = vadd.f32 %v4863, %v5023
    %5025 = vmatprep.mubr.bf16.mxu0 %v645
    %5026 = vmatmul.mubr.bf16.gmra.mrb[0].mxu0 %v644
    %v5027 = vpop.f32.mrb[0].mxu0
    %v5028 = vadd.f32 %v4867, %v5027
    %v5029 = vpop.f32.mrb[0].mxu0
    %v5030 = vadd.f32 %v4869, %v5029
    %v5031 = vpop.f32.mrb[0].mxu0
    %v5032 = vadd.f32 %v4871, %v5031
    %v5033 = vpop.f32.mrb[0].mxu0
    %v5034 = vadd.f32 %v4873, %v5033
    %5035 = vmatprep.mubr.bf16.mxu0 %v661
    %5036 = vmatmul.mubr.bf16.gmra.mrb[0].mxu0 %v660
    %v5037 = vpop.f32.mrb[0].mxu0
    %v5038 = vadd.f32 %v4877, %v5037
    %v5039 = vpop.f32.mrb[0].mxu0
    %v5040 = vadd.f32 %v4879, %v5039
    %v5041 = vpop.f32.mrb[0].mxu0
    %v5042 = vpop.f32.mrb[0].mxu0
    %5043 = vdwg.mxu0
    %5044 = vmatprep.subr.bf16.mxu0 %v2735
    %5045 = vmatpush1.bf16.msra.mxu0 %v2734
    %5046 = vmatprep.subr.bf16.mxu0 %v2739
    %5047 = vmatpush1.bf16.msra.mxu0 %v2738
    %5048 = vmatprep.subr.bf16.mxu0 %v2743
    %5049 = vmatpush1.bf16.msra.mxu0 %v2742
    %5050 = vmatprep.subr.bf16.mxu0 %v2747
    %5051 = vmatpush1.bf16.msra.mxu0 %v2746
    %5052 = vmatprep.subr.bf16.mxu0 %v2751
    %5053 = vmatpush1.bf16.msra.mxu0 %v2750
    %5054 = vmatprep.subr.bf16.mxu0 %v2755
    %5055 = vmatpush1.bf16.msra.mxu0 %v2754
    %5056 = vmatprep.subr.bf16.mxu0 %v2759
    %5057 = vmatpush1.bf16.msra.mxu0 %v2758
    %5058 = vmatprep.subr.bf16.mxu0 %v2763
    %5059 = vmatpush1.bf16.msra.mxu0 %v2762
    %5060 = vmatprep.subr.bf16.mxu0 %v2767
    %5061 = vmatpush1.bf16.msra.mxu0 %v2766
    %5062 = vmatprep.subr.bf16.mxu0 %v2771
    %5063 = vmatpush1.bf16.msra.mxu0 %v2770
    %5064 = vmatprep.subr.bf16.mxu0 %v2775
    %5065 = vmatpush1.bf16.msra.mxu0 %v2774
    %5066 = vmatprep.subr.bf16.mxu0 %v2779
    %5067 = vmatpush1.bf16.msra.mxu0 %v2778
    %5068 = vmatprep.subr.bf16.mxu0 %v2783
    %5069 = vmatpush1.bf16.msra.mxu0 %v2782
    %5070 = vmatprep.subr.bf16.mxu0 %v2787
    %5071 = vmatpush1.bf16.msra.mxu0 %v2786
    %5072 = vmatprep.subr.bf16.mxu0 %v2791
    %5073 = vmatpush1.bf16.msra.mxu0 %v2790
    %5074 = vmatprep.subr.bf16.mxu0 %v2795
    %5075 = vmatpush1.bf16.msra.mxu0 %v2794
    %5076 = vmatprep.mubr.bf16.mxu0 %v455
    %5077 = vmatmul.mubr.bf16.gmra.mrb[0].mxu0 %v454
    %v5078 = vpop.f32.mrb[0].mxu0
    %v5079 = vadd.f32 %v1187, %v5078
    %v5080 = vpop.f32.mrb[0].mxu0
    %v5081 = vadd.f32 %v1191, %v5080
    %v5082 = vpop.f32.mrb[0].mxu0
    %v5083 = vadd.f32 %v1187, %v5082
    %v5084 = vpop.f32.mrb[0].mxu0
    %v5085 = vadd.f32 %v1191, %v5084
    %5086 = vmatprep.mubr.bf16.mxu0 %v471
    %5087 = vmatmul.mubr.bf16.gmra.mrb[0].mxu0 %v470
    %v5088 = vpop.f32.mrb[0].mxu0
    %v5089 = vadd.f32 %v1187, %v5088
    %v5090 = vpop.f32.mrb[0].mxu0
    %v5091 = vadd.f32 %v1191, %v5090
    %v5092 = vpop.f32.mrb[0].mxu0
    %v5093 = vadd.f32 %v1187, %v5092
    %v5094 = vpop.f32.mrb[0].mxu0
    %v5095 = vadd.f32 %v1191, %v5094
    %5096 = vmatprep.mubr.bf16.mxu0 %v487
    %5097 = vmatmul.mubr.bf16.gmra.mrb[0].mxu0 %v486
    %v5098 = vpop.f32.mrb[0].mxu0
    %v5099 = vadd.f32 %v1187, %v5098
    %v5100 = vpop.f32.mrb[0].mxu0
    %v5101 = vadd.f32 %v1191, %v5100
    %v5102 = vpop.f32.mrb[0].mxu0
    %v5103 = vadd.f32 %v1187, %v5102
    %v5104 = vpop.f32.mrb[0].mxu0
    %v5105 = vadd.f32 %v1191, %v5104
    %5106 = vmatprep.mubr.bf16.mxu0 %v503
    %5107 = vmatmul.mubr.bf16.gmra.mrb[0].mxu0 %v502
    %v5108 = vpop.f32.mrb[0].mxu0
    %v5109 = vadd.f32 %v1187, %v5108
    %v5110 = vpop.f32.mrb[0].mxu0
    %v5111 = vadd.f32 %v1191, %v5110
    %v5112 = vpop.f32.mrb[0].mxu0
    %v5113 = vadd.f32 %v1187, %v5112
    %v5114 = vpop.f32.mrb[0].mxu0
    %v5115 = vadd.f32 %v1191, %v5114
    %5116 = vmatprep.mubr.bf16.mxu0 %v519
    %5117 = vmatmul.mubr.bf16.gmra.mrb[0].mxu0 %v518
    %v5118 = vpop.f32.mrb[0].mxu0
    %v5119 = vadd.f32 %v1187, %v5118
    %v5120 = vpop.f32.mrb[0].mxu0
    %v5121 = vadd.f32 %v1191, %v5120
    %v5122 = vpop.f32.mrb[0].mxu0
    %v5123 = vadd.f32 %v1187, %v5122
    %v5124 = vpop.f32.mrb[0].mxu0
    %v5125 = vadd.f32 %v1191, %v5124
    %5126 = vmatprep.mubr.bf16.mxu0 %v535
    %5127 = vmatmul.mubr.bf16.gmra.mrb[0].mxu0 %v534
    %v5128 = vpop.f32.mrb[0].mxu0
    %v5129 = vadd.f32 %v1187, %v5128
    %v5130 = vpop.f32.mrb[0].mxu0
    %v5131 = vadd.f32 %v1191, %v5130
    %v5132 = vpop.f32.mrb[0].mxu0
    %v5133 = vadd.f32 %v1187, %v5132
    %v5134 = vpop.f32.mrb[0].mxu0
    %v5135 = vadd.f32 %v1191, %v5134
    %5136 = vmatprep.mubr.bf16.mxu0 %v551
    %5137 = vmatmul.mubr.bf16.gmra.mrb[0].mxu0 %v550
    %v5138 = vpop.f32.mrb[0].mxu0
    %v5139 = vadd.f32 %v1187, %v5138
    %v5140 = vpop.f32.mrb[0].mxu0
    %v5141 = vadd.f32 %v1191, %v5140
    %v5142 = vpop.f32.mrb[0].mxu0
    %v5143 = vadd.f32 %v1187, %v5142
    %v5144 = vpop.f32.mrb[0].mxu0
    %v5145 = vadd.f32 %v1191, %v5144
    %5146 = vmatprep.mubr.bf16.mxu0 %v567
    %5147 = vmatmul.mubr.bf16.gmra.mrb[0].mxu0 %v566
    %v5148 = vpop.f32.mrb[0].mxu0
    %v5149 = vadd.f32 %v1187, %v5148
    %v5150 = vpop.f32.mrb[0].mxu0
    %v5151 = vadd.f32 %v1191, %v5150
    %v5152 = vpop.f32.mrb[0].mxu0
    %v5153 = vadd.f32 %v1187, %v5152
    %v5154 = vpop.f32.mrb[0].mxu0
    %v5155 = vadd.f32 %v1191, %v5154
    %5156 = vmatprep.mubr.bf16.mxu0 %v583
    %5157 = vmatmul.mubr.bf16.gmra.mrb[0].mxu0 %v582
    %v5158 = vpop.f32.mrb[0].mxu0
    %v5159 = vadd.f32 %v1187, %v5158
    %v5160 = vpop.f32.mrb[0].mxu0
    %v5161 = vadd.f32 %v1191, %v5160
    %v5162 = vpop.f32.mrb[0].mxu0
    %v5163 = vadd.f32 %v1187, %v5162
    %v5164 = vpop.f32.mrb[0].mxu0
    %v5165 = vadd.f32 %v1191, %v5164
    %5166 = vmatprep.mubr.bf16.mxu0 %v599
    %5167 = vmatmul.mubr.bf16.gmra.mrb[0].mxu0 %v598
    %v5168 = vpop.f32.mrb[0].mxu0
    %v5169 = vadd.f32 %v1187, %v5168
    %v5170 = vpop.f32.mrb[0].mxu0
    %v5171 = vadd.f32 %v1191, %v5170
    %v5172 = vpop.f32.mrb[0].mxu0
    %v5173 = vadd.f32 %v1187, %v5172
    %v5174 = vpop.f32.mrb[0].mxu0
    %v5175 = vadd.f32 %v1191, %v5174
    %5176 = vmatprep.mubr.bf16.mxu0 %v615
    %5177 = vmatmul.mubr.bf16.gmra.mrb[0].mxu0 %v614
    %v5178 = vpop.f32.mrb[0].mxu0
    %v5179 = vadd.f32 %v1187, %v5178
    %v5180 = vpop.f32.mrb[0].mxu0
    %v5181 = vadd.f32 %v1191, %v5180
    %v5182 = vpop.f32.mrb[0].mxu0
    %v5183 = vadd.f32 %v1187, %v5182
    %v5184 = vpop.f32.mrb[0].mxu0
    %v5185 = vadd.f32 %v1191, %v5184
    %5186 = vmatprep.mubr.bf16.mxu0 %v631
    %5187 = vmatmul.mubr.bf16.gmra.mrb[0].mxu0 %v630
    %v5188 = vpop.f32.mrb[0].mxu0
    %v5189 = vadd.f32 %v1187, %v5188
    %v5190 = vpop.f32.mrb[0].mxu0
    %v5191 = vadd.f32 %v1191, %v5190
    %v5192 = vpop.f32.mrb[0].mxu0
    %v5193 = vadd.f32 %v1187, %v5192
    %v5194 = vpop.f32.mrb[0].mxu0
    %v5195 = vadd.f32 %v1191, %v5194
    %5196 = vmatprep.mubr.bf16.mxu0 %v647
    %5197 = vmatmul.mubr.bf16.gmra.mrb[0].mxu0 %v646
    %v5198 = vpop.f32.mrb[0].mxu0
    %v5199 = vadd.f32 %v1187, %v5198
    %v5200 = vpop.f32.mrb[0].mxu0
    %v5201 = vadd.f32 %v1191, %v5200
    %v5202 = vpop.f32.mrb[0].mxu0
    %v5203 = vpop.f32.mrb[0].mxu0
    %5204 = vdwg.mxu0
    %5205 = vmatprep.subr.bf16.mxu0 %v2799
    %5206 = vmatpush1.bf16.msra.mxu0 %v2798
    %5207 = vmatprep.subr.bf16.mxu0 %v2803
    %5208 = vmatpush1.bf16.msra.mxu0 %v2802
    %5209 = vmatprep.subr.bf16.mxu0 %v2807
    %5210 = vmatpush1.bf16.msra.mxu0 %v2806
    %5211 = vmatprep.subr.bf16.mxu0 %v2811
    %5212 = vmatpush1.bf16.msra.mxu0 %v2810
    %5213 = vmatprep.subr.bf16.mxu0 %v2815
    %5214 = vmatpush1.bf16.msra.mxu0 %v2814
    %5215 = vmatprep.subr.bf16.mxu0 %v2819
    %5216 = vmatpush1.bf16.msra.mxu0 %v2818
    %5217 = vmatprep.subr.bf16.mxu0 %v2823
    %5218 = vmatpush1.bf16.msra.mxu0 %v2822
    %5219 = vmatprep.subr.bf16.mxu0 %v2827
    %5220 = vmatpush1.bf16.msra.mxu0 %v2826
    %5221 = vmatprep.subr.bf16.mxu0 %v2831
    %5222 = vmatpush1.bf16.msra.mxu0 %v2830
    %5223 = vmatprep.subr.bf16.mxu0 %v2835
    %5224 = vmatpush1.bf16.msra.mxu0 %v2834
    %5225 = vmatprep.subr.bf16.mxu0 %v2839
    %5226 = vmatpush1.bf16.msra.mxu0 %v2838
    %5227 = vmatprep.subr.bf16.mxu0 %v2843
    %5228 = vmatpush1.bf16.msra.mxu0 %v2842
    %5229 = vmatprep.subr.bf16.mxu0 %v2847
    %5230 = vmatpush1.bf16.msra.mxu0 %v2846
    %5231 = vmatprep.subr.bf16.mxu0 %v2851
    %5232 = vmatpush1.bf16.msra.mxu0 %v2850
    %5233 = vmatprep.subr.bf16.mxu0 %v2855
    %5234 = vmatpush1.bf16.msra.mxu0 %v2854
    %5235 = vmatprep.subr.bf16.mxu0 %v2859
    %5236 = vmatpush1.bf16.msra.mxu0 %v2858
    %5237 = vmatprep.mubr.bf16.mxu0 %v457
    %5238 = vmatmul.mubr.bf16.gmra.mrb[0].mxu0 %v456
    %v5239 = vpop.f32.mrb[0].mxu0
    %v5240 = vadd.f32 %v5079, %v5239
    %v5241 = vpop.f32.mrb[0].mxu0
    %v5242 = vadd.f32 %v5081, %v5241
    %v5243 = vpop.f32.mrb[0].mxu0
    %v5244 = vadd.f32 %v5083, %v5243
    %v5245 = vpop.f32.mrb[0].mxu0
    %v5246 = vadd.f32 %v5085, %v5245
    %5247 = vmatprep.mubr.bf16.mxu0 %v473
    %5248 = vmatmul.mubr.bf16.gmra.mrb[0].mxu0 %v472
    %v5249 = vpop.f32.mrb[0].mxu0
    %v5250 = vadd.f32 %v5089, %v5249
    %v5251 = vpop.f32.mrb[0].mxu0
    %v5252 = vadd.f32 %v5091, %v5251
    %v5253 = vpop.f32.mrb[0].mxu0
    %v5254 = vadd.f32 %v5093, %v5253
    %v5255 = vpop.f32.mrb[0].mxu0
    %v5256 = vadd.f32 %v5095, %v5255
    %5257 = vmatprep.mubr.bf16.mxu0 %v489
    %5258 = vmatmul.mubr.bf16.gmra.mrb[0].mxu0 %v488
    %v5259 = vpop.f32.mrb[0].mxu0
    %v5260 = vadd.f32 %v5099, %v5259
    %v5261 = vpop.f32.mrb[0].mxu0
    %v5262 = vadd.f32 %v5101, %v5261
    %v5263 = vpop.f32.mrb[0].mxu0
    %v5264 = vadd.f32 %v5103, %v5263
    %v5265 = vpop.f32.mrb[0].mxu0
    %v5266 = vadd.f32 %v5105, %v5265
    %5267 = vmatprep.mubr.bf16.mxu0 %v505
    %5268 = vmatmul.mubr.bf16.gmra.mrb[0].mxu0 %v504
    %v5269 = vpop.f32.mrb[0].mxu0
    %v5270 = vadd.f32 %v5109, %v5269
    %v5271 = vpop.f32.mrb[0].mxu0
    %v5272 = vadd.f32 %v5111, %v5271
    %v5273 = vpop.f32.mrb[0].mxu0
    %v5274 = vadd.f32 %v5113, %v5273
    %v5275 = vpop.f32.mrb[0].mxu0
    %v5276 = vadd.f32 %v5115, %v5275
    %5277 = vmatprep.mubr.bf16.mxu0 %v521
    %5278 = vmatmul.mubr.bf16.gmra.mrb[0].mxu0 %v520
    %v5279 = vpop.f32.mrb[0].mxu0
    %v5280 = vadd.f32 %v5119, %v5279
    %v5281 = vpop.f32.mrb[0].mxu0
    %v5282 = vadd.f32 %v5121, %v5281
    %v5283 = vpop.f32.mrb[0].mxu0
    %v5284 = vadd.f32 %v5123, %v5283
    %v5285 = vpop.f32.mrb[0].mxu0
    %v5286 = vadd.f32 %v5125, %v5285
    %5287 = vmatprep.mubr.bf16.mxu0 %v537
    %5288 = vmatmul.mubr.bf16.gmra.mrb[0].mxu0 %v536
    %v5289 = vpop.f32.mrb[0].mxu0
    %v5290 = vadd.f32 %v5129, %v5289
    %v5291 = vpop.f32.mrb[0].mxu0
    %v5292 = vadd.f32 %v5131, %v5291
    %v5293 = vpop.f32.mrb[0].mxu0
    %v5294 = vadd.f32 %v5133, %v5293
    %v5295 = vpop.f32.mrb[0].mxu0
    %v5296 = vadd.f32 %v5135, %v5295
    %5297 = vmatprep.mubr.bf16.mxu0 %v553
    %5298 = vmatmul.mubr.bf16.gmra.mrb[0].mxu0 %v552
    %v5299 = vpop.f32.mrb[0].mxu0
    %v5300 = vadd.f32 %v5139, %v5299
    %v5301 = vpop.f32.mrb[0].mxu0
    %v5302 = vadd.f32 %v5141, %v5301
    %v5303 = vpop.f32.mrb[0].mxu0
    %v5304 = vadd.f32 %v5143, %v5303
    %v5305 = vpop.f32.mrb[0].mxu0
    %v5306 = vadd.f32 %v5145, %v5305
    %5307 = vmatprep.mubr.bf16.mxu0 %v569
    %5308 = vmatmul.mubr.bf16.gmra.mrb[0].mxu0 %v568
    %v5309 = vpop.f32.mrb[0].mxu0
    %v5310 = vadd.f32 %v5149, %v5309
    %v5311 = vpop.f32.mrb[0].mxu0
    %v5312 = vadd.f32 %v5151, %v5311
    %v5313 = vpop.f32.mrb[0].mxu0
    %v5314 = vadd.f32 %v5153, %v5313
    %v5315 = vpop.f32.mrb[0].mxu0
    %v5316 = vadd.f32 %v5155, %v5315
    %5317 = vmatprep.mubr.bf16.mxu0 %v585
    %5318 = vmatmul.mubr.bf16.gmra.mrb[0].mxu0 %v584
    %v5319 = vpop.f32.mrb[0].mxu0
    %v5320 = vadd.f32 %v5159, %v5319
    %v5321 = vpop.f32.mrb[0].mxu0
    %v5322 = vadd.f32 %v5161, %v5321
    %v5323 = vpop.f32.mrb[0].mxu0
    %v5324 = vadd.f32 %v5163, %v5323
    %v5325 = vpop.f32.mrb[0].mxu0
    %v5326 = vadd.f32 %v5165, %v5325
    %5327 = vmatprep.mubr.bf16.mxu0 %v601
    %5328 = vmatmul.mubr.bf16.gmra.mrb[0].mxu0 %v600
    %v5329 = vpop.f32.mrb[0].mxu0
    %v5330 = vadd.f32 %v5169, %v5329
    %v5331 = vpop.f32.mrb[0].mxu0
    %v5332 = vadd.f32 %v5171, %v5331
    %v5333 = vpop.f32.mrb[0].mxu0
    %v5334 = vadd.f32 %v5173, %v5333
    %v5335 = vpop.f32.mrb[0].mxu0
    %v5336 = vadd.f32 %v5175, %v5335
    %5337 = vmatprep.mubr.bf16.mxu0 %v617
    %5338 = vmatmul.mubr.bf16.gmra.mrb[0].mxu0 %v616
    %v5339 = vpop.f32.mrb[0].mxu0
    %v5340 = vadd.f32 %v5179, %v5339
    %v5341 = vpop.f32.mrb[0].mxu0
    %v5342 = vadd.f32 %v5181, %v5341
    %v5343 = vpop.f32.mrb[0].mxu0
    %v5344 = vadd.f32 %v5183, %v5343
    %v5345 = vpop.f32.mrb[0].mxu0
    %v5346 = vadd.f32 %v5185, %v5345
    %5347 = vmatprep.mubr.bf16.mxu0 %v633
    %5348 = vmatmul.mubr.bf16.gmra.mrb[0].mxu0 %v632
    %v5349 = vpop.f32.mrb[0].mxu0
    %v5350 = vadd.f32 %v5189, %v5349
    %v5351 = vpop.f32.mrb[0].mxu0
    %v5352 = vadd.f32 %v5191, %v5351
    %v5353 = vpop.f32.mrb[0].mxu0
    %v5354 = vadd.f32 %v5193, %v5353
    %v5355 = vpop.f32.mrb[0].mxu0
    %v5356 = vadd.f32 %v5195, %v5355
    %5357 = vmatprep.mubr.bf16.mxu0 %v649
    %5358 = vmatmul.mubr.bf16.gmra.mrb[0].mxu0 %v648
    %v5359 = vpop.f32.mrb[0].mxu0
    %v5360 = vadd.f32 %v5199, %v5359
    %v5361 = vpop.f32.mrb[0].mxu0
    %v5362 = vadd.f32 %v5201, %v5361
    %v5363 = vpop.f32.mrb[0].mxu0
    %v5364 = vpop.f32.mrb[0].mxu0
    %5365 = vdwg.mxu0
    %5366 = vmatprep.subr.bf16.mxu0 %v2863
    %5367 = vmatpush1.bf16.msra.mxu0 %v2862
    %5368 = vmatprep.subr.bf16.mxu0 %v2867
    %5369 = vmatpush1.bf16.msra.mxu0 %v2866
    %5370 = vmatprep.subr.bf16.mxu0 %v2871
    %5371 = vmatpush1.bf16.msra.mxu0 %v2870
    %5372 = vmatprep.subr.bf16.mxu0 %v2875
    %5373 = vmatpush1.bf16.msra.mxu0 %v2874
    %5374 = vmatprep.subr.bf16.mxu0 %v2879
    %5375 = vmatpush1.bf16.msra.mxu0 %v2878
    %5376 = vmatprep.subr.bf16.mxu0 %v2883
    %5377 = vmatpush1.bf16.msra.mxu0 %v2882
    %5378 = vmatprep.subr.bf16.mxu0 %v2887
    %5379 = vmatpush1.bf16.msra.mxu0 %v2886
    %5380 = vmatprep.subr.bf16.mxu0 %v2891
    %5381 = vmatpush1.bf16.msra.mxu0 %v2890
    %5382 = vmatprep.subr.bf16.mxu0 %v2895
    %5383 = vmatpush1.bf16.msra.mxu0 %v2894
    %5384 = vmatprep.subr.bf16.mxu0 %v2899
    %5385 = vmatpush1.bf16.msra.mxu0 %v2898
    %5386 = vmatprep.subr.bf16.mxu0 %v2903
    %5387 = vmatpush1.bf16.msra.mxu0 %v2902
    %5388 = vmatprep.subr.bf16.mxu0 %v2907
    %5389 = vmatpush1.bf16.msra.mxu0 %v2906
    %5390 = vmatprep.subr.bf16.mxu0 %v2911
    %5391 = vmatpush1.bf16.msra.mxu0 %v2910
    %5392 = vmatprep.subr.bf16.mxu0 %v2915
    %5393 = vmatpush1.bf16.msra.mxu0 %v2914
    %5394 = vmatprep.subr.bf16.mxu0 %v2919
    %5395 = vmatpush1.bf16.msra.mxu0 %v2918
    %5396 = vmatprep.subr.bf16.mxu0 %v2923
    %5397 = vmatpush1.bf16.msra.mxu0 %v2922
    %5398 = vmatprep.mubr.bf16.mxu0 %v459
    %5399 = vmatmul.mubr.bf16.gmra.mrb[0].mxu0 %v458
    %v5400 = vpop.f32.mrb[0].mxu0
    %v5401 = vadd.f32 %v5240, %v5400
    %v5402 = vpop.f32.mrb[0].mxu0
    %v5403 = vadd.f32 %v5242, %v5402
    %v5404 = vpop.f32.mrb[0].mxu0
    %v5405 = vadd.f32 %v5244, %v5404
    %v5406 = vpop.f32.mrb[0].mxu0
    %v5407 = vadd.f32 %v5246, %v5406
    %5408 = vmatprep.mubr.bf16.mxu0 %v475
    %5409 = vmatmul.mubr.bf16.gmra.mrb[0].mxu0 %v474
    %v5410 = vpop.f32.mrb[0].mxu0
    %v5411 = vadd.f32 %v5250, %v5410
    %v5412 = vpop.f32.mrb[0].mxu0
    %v5413 = vadd.f32 %v5252, %v5412
    %v5414 = vpop.f32.mrb[0].mxu0
    %v5415 = vadd.f32 %v5254, %v5414
    %v5416 = vpop.f32.mrb[0].mxu0
    %v5417 = vadd.f32 %v5256, %v5416
    %5418 = vmatprep.mubr.bf16.mxu0 %v491
    %5419 = vmatmul.mubr.bf16.gmra.mrb[0].mxu0 %v490
    %v5420 = vpop.f32.mrb[0].mxu0
    %v5421 = vadd.f32 %v5260, %v5420
    %v5422 = vpop.f32.mrb[0].mxu0
    %v5423 = vadd.f32 %v5262, %v5422
    %v5424 = vpop.f32.mrb[0].mxu0
    %v5425 = vadd.f32 %v5264, %v5424
    %v5426 = vpop.f32.mrb[0].mxu0
    %v5427 = vadd.f32 %v5266, %v5426
    %5428 = vmatprep.mubr.bf16.mxu0 %v507
    %5429 = vmatmul.mubr.bf16.gmra.mrb[0].mxu0 %v506
    %v5430 = vpop.f32.mrb[0].mxu0
    %v5431 = vadd.f32 %v5270, %v5430
    %v5432 = vpop.f32.mrb[0].mxu0
    %v5433 = vadd.f32 %v5272, %v5432
    %v5434 = vpop.f32.mrb[0].mxu0
    %v5435 = vadd.f32 %v5274, %v5434
    %v5436 = vpop.f32.mrb[0].mxu0
    %v5437 = vadd.f32 %v5276, %v5436
    %5438 = vmatprep.mubr.bf16.mxu0 %v523
    %5439 = vmatmul.mubr.bf16.gmra.mrb[0].mxu0 %v522
    %v5440 = vpop.f32.mrb[0].mxu0
    %v5441 = vadd.f32 %v5280, %v5440
    %v5442 = vpop.f32.mrb[0].mxu0
    %v5443 = vadd.f32 %v5282, %v5442
    %v5444 = vpop.f32.mrb[0].mxu0
    %v5445 = vadd.f32 %v5284, %v5444
    %v5446 = vpop.f32.mrb[0].mxu0
    %v5447 = vadd.f32 %v5286, %v5446
    %5448 = vmatprep.mubr.bf16.mxu0 %v539
    %5449 = vmatmul.mubr.bf16.gmra.mrb[0].mxu0 %v538
    %v5450 = vpop.f32.mrb[0].mxu0
    %v5451 = vadd.f32 %v5290, %v5450
    %v5452 = vpop.f32.mrb[0].mxu0
    %v5453 = vadd.f32 %v5292, %v5452
    %v5454 = vpop.f32.mrb[0].mxu0
    %v5455 = vadd.f32 %v5294, %v5454
    %v5456 = vpop.f32.mrb[0].mxu0
    %v5457 = vadd.f32 %v5296, %v5456
    %5458 = vmatprep.mubr.bf16.mxu0 %v555
    %5459 = vmatmul.mubr.bf16.gmra.mrb[0].mxu0 %v554
    %v5460 = vpop.f32.mrb[0].mxu0
    %v5461 = vadd.f32 %v5300, %v5460
    %v5462 = vpop.f32.mrb[0].mxu0
    %v5463 = vadd.f32 %v5302, %v5462
    %v5464 = vpop.f32.mrb[0].mxu0
    %v5465 = vadd.f32 %v5304, %v5464
    %v5466 = vpop.f32.mrb[0].mxu0
    %v5467 = vadd.f32 %v5306, %v5466
    %5468 = vmatprep.mubr.bf16.mxu0 %v571
    %5469 = vmatmul.mubr.bf16.gmra.mrb[0].mxu0 %v570
    %v5470 = vpop.f32.mrb[0].mxu0
    %v5471 = vadd.f32 %v5310, %v5470
    %v5472 = vpop.f32.mrb[0].mxu0
    %v5473 = vadd.f32 %v5312, %v5472
    %v5474 = vpop.f32.mrb[0].mxu0
    %v5475 = vadd.f32 %v5314, %v5474
    %v5476 = vpop.f32.mrb[0].mxu0
    %v5477 = vadd.f32 %v5316, %v5476
    %5478 = vmatprep.mubr.bf16.mxu0 %v587
    %5479 = vmatmul.mubr.bf16.gmra.mrb[0].mxu0 %v586
    %v5480 = vpop.f32.mrb[0].mxu0
    %v5481 = vadd.f32 %v5320, %v5480
    %v5482 = vpop.f32.mrb[0].mxu0
    %v5483 = vadd.f32 %v5322, %v5482
    %v5484 = vpop.f32.mrb[0].mxu0
    %v5485 = vadd.f32 %v5324, %v5484
    %v5486 = vpop.f32.mrb[0].mxu0
    %v5487 = vadd.f32 %v5326, %v5486
    %5488 = vmatprep.mubr.bf16.mxu0 %v603
    %5489 = vmatmul.mubr.bf16.gmra.mrb[0].mxu0 %v602
    %v5490 = vpop.f32.mrb[0].mxu0
    %v5491 = vadd.f32 %v5330, %v5490
    %v5492 = vpop.f32.mrb[0].mxu0
    %v5493 = vadd.f32 %v5332, %v5492
    %v5494 = vpop.f32.mrb[0].mxu0
    %v5495 = vadd.f32 %v5334, %v5494
    %v5496 = vpop.f32.mrb[0].mxu0
    %v5497 = vadd.f32 %v5336, %v5496
    %5498 = vmatprep.mubr.bf16.mxu0 %v619
    %5499 = vmatmul.mubr.bf16.gmra.mrb[0].mxu0 %v618
    %v5500 = vpop.f32.mrb[0].mxu0
    %v5501 = vadd.f32 %v5340, %v5500
    %v5502 = vpop.f32.mrb[0].mxu0
    %v5503 = vadd.f32 %v5342, %v5502
    %v5504 = vpop.f32.mrb[0].mxu0
    %v5505 = vadd.f32 %v5344, %v5504
    %v5506 = vpop.f32.mrb[0].mxu0
    %v5507 = vadd.f32 %v5346, %v5506
    %5508 = vmatprep.mubr.bf16.mxu0 %v635
    %5509 = vmatmul.mubr.bf16.gmra.mrb[0].mxu0 %v634
    %v5510 = vpop.f32.mrb[0].mxu0
    %v5511 = vadd.f32 %v5350, %v5510
    %v5512 = vpop.f32.mrb[0].mxu0
    %v5513 = vadd.f32 %v5352, %v5512
    %v5514 = vpop.f32.mrb[0].mxu0
    %v5515 = vadd.f32 %v5354, %v5514
    %v5516 = vpop.f32.mrb[0].mxu0
    %v5517 = vadd.f32 %v5356, %v5516
    %5518 = vmatprep.mubr.bf16.mxu0 %v651
    %5519 = vmatmul.mubr.bf16.gmra.mrb[0].mxu0 %v650
    %v5520 = vpop.f32.mrb[0].mxu0
    %v5521 = vadd.f32 %v5360, %v5520
    %v5522 = vpop.f32.mrb[0].mxu0
    %v5523 = vadd.f32 %v5362, %v5522
    %v5524 = vpop.f32.mrb[0].mxu0
    %v5525 = vpop.f32.mrb[0].mxu0
    %5526 = vdwg.mxu0
    %5527 = vmatprep.subr.bf16.mxu0 %v2927
    %5528 = vmatpush1.bf16.msra.mxu0 %v2926
    %5529 = vmatprep.subr.bf16.mxu0 %v2931
    %5530 = vmatpush1.bf16.msra.mxu0 %v2930
    %5531 = vmatprep.subr.bf16.mxu0 %v2935
    %5532 = vmatpush1.bf16.msra.mxu0 %v2934
    %5533 = vmatprep.subr.bf16.mxu0 %v2939
    %5534 = vmatpush1.bf16.msra.mxu0 %v2938
    %5535 = vmatprep.subr.bf16.mxu0 %v2943
    %5536 = vmatpush1.bf16.msra.mxu0 %v2942
    %5537 = vmatprep.subr.bf16.mxu0 %v2947
    %5538 = vmatpush1.bf16.msra.mxu0 %v2946
    %5539 = vmatprep.subr.bf16.mxu0 %v2951
    %5540 = vmatpush1.bf16.msra.mxu0 %v2950
    %5541 = vmatprep.subr.bf16.mxu0 %v2955
    %5542 = vmatpush1.bf16.msra.mxu0 %v2954
    %5543 = vmatprep.subr.bf16.mxu0 %v2959
    %5544 = vmatpush1.bf16.msra.mxu0 %v2958
    %5545 = vmatprep.subr.bf16.mxu0 %v2963
    %5546 = vmatpush1.bf16.msra.mxu0 %v2962
    %5547 = vmatprep.subr.bf16.mxu0 %v2967
    %5548 = vmatpush1.bf16.msra.mxu0 %v2966
    %5549 = vmatprep.subr.bf16.mxu0 %v2971
    %5550 = vmatpush1.bf16.msra.mxu0 %v2970
    %5551 = vmatprep.subr.bf16.mxu0 %v2975
    %5552 = vmatpush1.bf16.msra.mxu0 %v2974
    %5553 = vmatprep.subr.bf16.mxu0 %v2979
    %5554 = vmatpush1.bf16.msra.mxu0 %v2978
    %5555 = vmatprep.subr.bf16.mxu0 %v2983
    %5556 = vmatpush1.bf16.msra.mxu0 %v2982
    %5557 = vmatprep.subr.bf16.mxu0 %v2987
    %5558 = vmatpush1.bf16.msra.mxu0 %v2986
    %5559 = vmatprep.mubr.bf16.mxu0 %v461
    %5560 = vmatmul.mubr.bf16.gmra.mrb[0].mxu0 %v460
    %v5561 = vpop.f32.mrb[0].mxu0
    %v5562 = vadd.f32 %v5401, %v5561
    %v5563 = vpop.f32.mrb[0].mxu0
    %v5564 = vadd.f32 %v5403, %v5563
    %v5565 = vpop.f32.mrb[0].mxu0
    %v5566 = vadd.f32 %v5405, %v5565
    %v5567 = vpop.f32.mrb[0].mxu0
    %v5568 = vadd.f32 %v5407, %v5567
    %5569 = vmatprep.mubr.bf16.mxu0 %v477
    %5570 = vmatmul.mubr.bf16.gmra.mrb[0].mxu0 %v476
    %v5571 = vpop.f32.mrb[0].mxu0
    %v5572 = vadd.f32 %v5411, %v5571
    %v5573 = vpop.f32.mrb[0].mxu0
    %v5574 = vadd.f32 %v5413, %v5573
    %v5575 = vpop.f32.mrb[0].mxu0
    %v5576 = vadd.f32 %v5415, %v5575
    %v5577 = vpop.f32.mrb[0].mxu0
    %v5578 = vadd.f32 %v5417, %v5577
    %5579 = vmatprep.mubr.bf16.mxu0 %v493
    %5580 = vmatmul.mubr.bf16.gmra.mrb[0].mxu0 %v492
    %v5581 = vpop.f32.mrb[0].mxu0
    %v5582 = vadd.f32 %v5421, %v5581
    %v5583 = vpop.f32.mrb[0].mxu0
    %v5584 = vadd.f32 %v5423, %v5583
    %v5585 = vpop.f32.mrb[0].mxu0
    %v5586 = vadd.f32 %v5425, %v5585
    %v5587 = vpop.f32.mrb[0].mxu0
    %v5588 = vadd.f32 %v5427, %v5587
    %5589 = vmatprep.mubr.bf16.mxu0 %v509
    %5590 = vmatmul.mubr.bf16.gmra.mrb[0].mxu0 %v508
    %v5591 = vpop.f32.mrb[0].mxu0
    %v5592 = vadd.f32 %v5431, %v5591
    %v5593 = vpop.f32.mrb[0].mxu0
    %v5594 = vadd.f32 %v5433, %v5593
    %v5595 = vpop.f32.mrb[0].mxu0
    %v5596 = vadd.f32 %v5435, %v5595
    %v5597 = vpop.f32.mrb[0].mxu0
    %v5598 = vadd.f32 %v5437, %v5597
    %5599 = vmatprep.mubr.bf16.mxu0 %v525
    %5600 = vmatmul.mubr.bf16.gmra.mrb[0].mxu0 %v524
    %v5601 = vpop.f32.mrb[0].mxu0
    %v5602 = vadd.f32 %v5441, %v5601
    %v5603 = vpop.f32.mrb[0].mxu0
    %v5604 = vadd.f32 %v5443, %v5603
    %v5605 = vpop.f32.mrb[0].mxu0
    %v5606 = vadd.f32 %v5445, %v5605
    %v5607 = vpop.f32.mrb[0].mxu0
    %v5608 = vadd.f32 %v5447, %v5607
    %5609 = vmatprep.mubr.bf16.mxu0 %v541
    %5610 = vmatmul.mubr.bf16.gmra.mrb[0].mxu0 %v540
    %v5611 = vpop.f32.mrb[0].mxu0
    %v5612 = vadd.f32 %v5451, %v5611
    %v5613 = vpop.f32.mrb[0].mxu0
    %v5614 = vadd.f32 %v5453, %v5613
    %v5615 = vpop.f32.mrb[0].mxu0
    %v5616 = vadd.f32 %v5455, %v5615
    %v5617 = vpop.f32.mrb[0].mxu0
    %v5618 = vadd.f32 %v5457, %v5617
    %5619 = vmatprep.mubr.bf16.mxu0 %v557
    %5620 = vmatmul.mubr.bf16.gmra.mrb[0].mxu0 %v556
    %v5621 = vpop.f32.mrb[0].mxu0
    %v5622 = vadd.f32 %v5461, %v5621
    %v5623 = vpop.f32.mrb[0].mxu0
    %v5624 = vadd.f32 %v5463, %v5623
    %v5625 = vpop.f32.mrb[0].mxu0
    %v5626 = vadd.f32 %v5465, %v5625
    %v5627 = vpop.f32.mrb[0].mxu0
    %v5628 = vadd.f32 %v5467, %v5627
    %5629 = vmatprep.mubr.bf16.mxu0 %v573
    %5630 = vmatmul.mubr.bf16.gmra.mrb[0].mxu0 %v572
    %v5631 = vpop.f32.mrb[0].mxu0
    %v5632 = vadd.f32 %v5471, %v5631
    %v5633 = vpop.f32.mrb[0].mxu0
    %v5634 = vadd.f32 %v5473, %v5633
    %v5635 = vpop.f32.mrb[0].mxu0
    %v5636 = vadd.f32 %v5475, %v5635
    %v5637 = vpop.f32.mrb[0].mxu0
    %v5638 = vadd.f32 %v5477, %v5637
    %5639 = vmatprep.mubr.bf16.mxu0 %v589
    %5640 = vmatmul.mubr.bf16.gmra.mrb[0].mxu0 %v588
    %v5641 = vpop.f32.mrb[0].mxu0
    %v5642 = vadd.f32 %v5481, %v5641
    %v5643 = vpop.f32.mrb[0].mxu0
    %v5644 = vadd.f32 %v5483, %v5643
    %v5645 = vpop.f32.mrb[0].mxu0
    %v5646 = vadd.f32 %v5485, %v5645
    %v5647 = vpop.f32.mrb[0].mxu0
    %v5648 = vadd.f32 %v5487, %v5647
    %5649 = vmatprep.mubr.bf16.mxu0 %v605
    %5650 = vmatmul.mubr.bf16.gmra.mrb[0].mxu0 %v604
    %v5651 = vpop.f32.mrb[0].mxu0
    %v5652 = vadd.f32 %v5491, %v5651
    %v5653 = vpop.f32.mrb[0].mxu0
    %v5654 = vadd.f32 %v5493, %v5653
    %v5655 = vpop.f32.mrb[0].mxu0
    %v5656 = vadd.f32 %v5495, %v5655
    %v5657 = vpop.f32.mrb[0].mxu0
    %v5658 = vadd.f32 %v5497, %v5657
    %5659 = vmatprep.mubr.bf16.mxu0 %v621
    %5660 = vmatmul.mubr.bf16.gmra.mrb[0].mxu0 %v620
    %v5661 = vpop.f32.mrb[0].mxu0
    %v5662 = vadd.f32 %v5501, %v5661
    %v5663 = vpop.f32.mrb[0].mxu0
    %v5664 = vadd.f32 %v5503, %v5663
    %v5665 = vpop.f32.mrb[0].mxu0
    %v5666 = vadd.f32 %v5505, %v5665
    %v5667 = vpop.f32.mrb[0].mxu0
    %v5668 = vadd.f32 %v5507, %v5667
    %5669 = vmatprep.mubr.bf16.mxu0 %v637
    %5670 = vmatmul.mubr.bf16.gmra.mrb[0].mxu0 %v636
    %v5671 = vpop.f32.mrb[0].mxu0
    %v5672 = vadd.f32 %v5511, %v5671
    %v5673 = vpop.f32.mrb[0].mxu0
    %v5674 = vadd.f32 %v5513, %v5673
    %v5675 = vpop.f32.mrb[0].mxu0
    %v5676 = vadd.f32 %v5515, %v5675
    %v5677 = vpop.f32.mrb[0].mxu0
    %v5678 = vadd.f32 %v5517, %v5677
    %5679 = vmatprep.mubr.bf16.mxu0 %v653
    %5680 = vmatmul.mubr.bf16.gmra.mrb[0].mxu0 %v652
    %v5681 = vpop.f32.mrb[0].mxu0
    %v5682 = vadd.f32 %v5521, %v5681
    %v5683 = vpop.f32.mrb[0].mxu0
    %v5684 = vadd.f32 %v5523, %v5683
    %v5685 = vpop.f32.mrb[0].mxu0
    %v5686 = vpop.f32.mrb[0].mxu0
    %5687 = vdwg.mxu0
    %5688 = vmatprep.subr.bf16.mxu0 %v2991
    %5689 = vmatpush1.bf16.msra.mxu0 %v2990
    %5690 = vmatprep.subr.bf16.mxu0 %v2995
    %5691 = vmatpush1.bf16.msra.mxu0 %v2994
    %5692 = vmatprep.subr.bf16.mxu0 %v2999
    %5693 = vmatpush1.bf16.msra.mxu0 %v2998
    %5694 = vmatprep.subr.bf16.mxu0 %v3003
    %5695 = vmatpush1.bf16.msra.mxu0 %v3002
    %5696 = vmatprep.subr.bf16.mxu0 %v3007
    %5697 = vmatpush1.bf16.msra.mxu0 %v3006
    %5698 = vmatprep.subr.bf16.mxu0 %v3011
    %5699 = vmatpush1.bf16.msra.mxu0 %v3010
    %5700 = vmatprep.subr.bf16.mxu0 %v3015
    %5701 = vmatpush1.bf16.msra.mxu0 %v3014
    %5702 = vmatprep.subr.bf16.mxu0 %v3019
    %5703 = vmatpush1.bf16.msra.mxu0 %v3018
    %5704 = vmatprep.subr.bf16.mxu0 %v3023
    %5705 = vmatpush1.bf16.msra.mxu0 %v3022
    %5706 = vmatprep.subr.bf16.mxu0 %v3027
    %5707 = vmatpush1.bf16.msra.mxu0 %v3026
    %5708 = vmatprep.subr.bf16.mxu0 %v3031
    %5709 = vmatpush1.bf16.msra.mxu0 %v3030
    %5710 = vmatprep.subr.bf16.mxu0 %v3035
    %5711 = vmatpush1.bf16.msra.mxu0 %v3034
    %5712 = vmatprep.subr.bf16.mxu0 %v3039
    %5713 = vmatpush1.bf16.msra.mxu0 %v3038
    %5714 = vmatprep.subr.bf16.mxu0 %v3043
    %5715 = vmatpush1.bf16.msra.mxu0 %v3042
    %5716 = vmatprep.subr.bf16.mxu0 %v3047
    %5717 = vmatpush1.bf16.msra.mxu0 %v3046
    %5718 = vmatprep.subr.bf16.mxu0 %v3051
    %5719 = vmatpush1.bf16.msra.mxu0 %v3050
    %5720 = vmatprep.mubr.bf16.mxu0 %v463
    %5721 = vmatmul.mubr.bf16.gmra.mrb[0].mxu0 %v462
    %v5722 = vpop.f32.mrb[0].mxu0
    %v5723 = vadd.f32 %v5562, %v5722
    %v5724 = vpop.f32.mrb[0].mxu0
    %v5725 = vadd.f32 %v5564, %v5724
    %v5726 = vpop.f32.mrb[0].mxu0
    %v5727 = vadd.f32 %v5566, %v5726
    %v5728 = vpop.f32.mrb[0].mxu0
    %v5729 = vadd.f32 %v5568, %v5728
    %5730 = vmatprep.mubr.bf16.mxu0 %v479
    %5731 = vmatmul.mubr.bf16.gmra.mrb[0].mxu0 %v478
    %v5732 = vpop.f32.mrb[0].mxu0
    %v5733 = vadd.f32 %v5572, %v5732
    %v5734 = vpop.f32.mrb[0].mxu0
    %v5735 = vadd.f32 %v5574, %v5734
    %v5736 = vpop.f32.mrb[0].mxu0
    %v5737 = vadd.f32 %v5576, %v5736
    %v5738 = vpop.f32.mrb[0].mxu0
    %v5739 = vadd.f32 %v5578, %v5738
    %5740 = vmatprep.mubr.bf16.mxu0 %v495
    %5741 = vmatmul.mubr.bf16.gmra.mrb[0].mxu0 %v494
    %v5742 = vpop.f32.mrb[0].mxu0
    %v5743 = vadd.f32 %v5582, %v5742
    %v5744 = vpop.f32.mrb[0].mxu0
    %v5745 = vadd.f32 %v5584, %v5744
    %v5746 = vpop.f32.mrb[0].mxu0
    %v5747 = vadd.f32 %v5586, %v5746
    %v5748 = vpop.f32.mrb[0].mxu0
    %v5749 = vadd.f32 %v5588, %v5748
    %5750 = vmatprep.mubr.bf16.mxu0 %v511
    %5751 = vmatmul.mubr.bf16.gmra.mrb[0].mxu0 %v510
    %v5752 = vpop.f32.mrb[0].mxu0
    %v5753 = vadd.f32 %v5592, %v5752
    %v5754 = vpop.f32.mrb[0].mxu0
    %v5755 = vadd.f32 %v5594, %v5754
    %v5756 = vpop.f32.mrb[0].mxu0
    %v5757 = vadd.f32 %v5596, %v5756
    %v5758 = vpop.f32.mrb[0].mxu0
    %v5759 = vadd.f32 %v5598, %v5758
    %5760 = vmatprep.mubr.bf16.mxu0 %v527
    %5761 = vmatmul.mubr.bf16.gmra.mrb[0].mxu0 %v526
    %v5762 = vpop.f32.mrb[0].mxu0
    %v5763 = vadd.f32 %v5602, %v5762
    %v5764 = vpop.f32.mrb[0].mxu0
    %v5765 = vadd.f32 %v5604, %v5764
    %v5766 = vpop.f32.mrb[0].mxu0
    %v5767 = vadd.f32 %v5606, %v5766
    %v5768 = vpop.f32.mrb[0].mxu0
    %v5769 = vadd.f32 %v5608, %v5768
    %5770 = vmatprep.mubr.bf16.mxu0 %v543
    %5771 = vmatmul.mubr.bf16.gmra.mrb[0].mxu0 %v542
    %v5772 = vpop.f32.mrb[0].mxu0
    %v5773 = vadd.f32 %v5612, %v5772
    %v5774 = vpop.f32.mrb[0].mxu0
    %v5775 = vadd.f32 %v5614, %v5774
    %v5776 = vpop.f32.mrb[0].mxu0
    %v5777 = vadd.f32 %v5616, %v5776
    %v5778 = vpop.f32.mrb[0].mxu0
    %v5779 = vadd.f32 %v5618, %v5778
    %5780 = vmatprep.mubr.bf16.mxu0 %v559
    %5781 = vmatmul.mubr.bf16.gmra.mrb[0].mxu0 %v558
    %v5782 = vpop.f32.mrb[0].mxu0
    %v5783 = vadd.f32 %v5622, %v5782
    %v5784 = vpop.f32.mrb[0].mxu0
    %v5785 = vadd.f32 %v5624, %v5784
    %v5786 = vpop.f32.mrb[0].mxu0
    %v5787 = vadd.f32 %v5626, %v5786
    %v5788 = vpop.f32.mrb[0].mxu0
    %v5789 = vadd.f32 %v5628, %v5788
    %5790 = vmatprep.mubr.bf16.mxu0 %v575
    %5791 = vmatmul.mubr.bf16.gmra.mrb[0].mxu0 %v574
    %v5792 = vpop.f32.mrb[0].mxu0
    %v5793 = vadd.f32 %v5632, %v5792
    %v5794 = vpop.f32.mrb[0].mxu0
    %v5795 = vadd.f32 %v5634, %v5794
    %v5796 = vpop.f32.mrb[0].mxu0
    %v5797 = vadd.f32 %v5636, %v5796
    %v5798 = vpop.f32.mrb[0].mxu0
    %v5799 = vadd.f32 %v5638, %v5798
    %5800 = vmatprep.mubr.bf16.mxu0 %v591
    %5801 = vmatmul.mubr.bf16.gmra.mrb[0].mxu0 %v590
    %v5802 = vpop.f32.mrb[0].mxu0
    %v5803 = vadd.f32 %v5642, %v5802
    %v5804 = vpop.f32.mrb[0].mxu0
    %v5805 = vadd.f32 %v5644, %v5804
    %v5806 = vpop.f32.mrb[0].mxu0
    %v5807 = vadd.f32 %v5646, %v5806
    %v5808 = vpop.f32.mrb[0].mxu0
    %v5809 = vadd.f32 %v5648, %v5808
    %5810 = vmatprep.mubr.bf16.mxu0 %v607
    %5811 = vmatmul.mubr.bf16.gmra.mrb[0].mxu0 %v606
    %v5812 = vpop.f32.mrb[0].mxu0
    %v5813 = vadd.f32 %v5652, %v5812
    %v5814 = vpop.f32.mrb[0].mxu0
    %v5815 = vadd.f32 %v5654, %v5814
    %v5816 = vpop.f32.mrb[0].mxu0
    %v5817 = vadd.f32 %v5656, %v5816
    %v5818 = vpop.f32.mrb[0].mxu0
    %v5819 = vadd.f32 %v5658, %v5818
    %5820 = vmatprep.mubr.bf16.mxu0 %v623
    %5821 = vmatmul.mubr.bf16.gmra.mrb[0].mxu0 %v622
    %v5822 = vpop.f32.mrb[0].mxu0
    %v5823 = vadd.f32 %v5662, %v5822
    %v5824 = vpop.f32.mrb[0].mxu0
    %v5825 = vadd.f32 %v5664, %v5824
    %v5826 = vpop.f32.mrb[0].mxu0
    %v5827 = vadd.f32 %v5666, %v5826
    %v5828 = vpop.f32.mrb[0].mxu0
    %v5829 = vadd.f32 %v5668, %v5828
    %5830 = vmatprep.mubr.bf16.mxu0 %v639
    %5831 = vmatmul.mubr.bf16.gmra.mrb[0].mxu0 %v638
    %v5832 = vpop.f32.mrb[0].mxu0
    %v5833 = vadd.f32 %v5672, %v5832
    %v5834 = vpop.f32.mrb[0].mxu0
    %v5835 = vadd.f32 %v5674, %v5834
    %v5836 = vpop.f32.mrb[0].mxu0
    %v5837 = vadd.f32 %v5676, %v5836
    %v5838 = vpop.f32.mrb[0].mxu0
    %v5839 = vadd.f32 %v5678, %v5838
    %5840 = vmatprep.mubr.bf16.mxu0 %v655
    %5841 = vmatmul.mubr.bf16.gmra.mrb[0].mxu0 %v654
    %v5842 = vpop.f32.mrb[0].mxu0
    %v5843 = vadd.f32 %v5682, %v5842
    %v5844 = vpop.f32.mrb[0].mxu0
    %v5845 = vadd.f32 %v5684, %v5844
    %v5846 = vpop.f32.mrb[0].mxu0
    %v5847 = vpop.f32.mrb[0].mxu0
    %5848 = vdwg.mxu0
    %5849 = vmatprep.subr.bf16.mxu0 %v3055
    %5850 = vmatpush1.bf16.msra.mxu0 %v3054
    %5851 = vmatprep.subr.bf16.mxu0 %v3059
    %5852 = vmatpush1.bf16.msra.mxu0 %v3058
    %5853 = vmatprep.subr.bf16.mxu0 %v3063
    %5854 = vmatpush1.bf16.msra.mxu0 %v3062
    %5855 = vmatprep.subr.bf16.mxu0 %v3067
    %5856 = vmatpush1.bf16.msra.mxu0 %v3066
    %5857 = vmatprep.subr.bf16.mxu0 %v3071
    %5858 = vmatpush1.bf16.msra.mxu0 %v3070
    %5859 = vmatprep.subr.bf16.mxu0 %v3075
    %5860 = vmatpush1.bf16.msra.mxu0 %v3074
    %5861 = vmatprep.subr.bf16.mxu0 %v3079
    %5862 = vmatpush1.bf16.msra.mxu0 %v3078
    %5863 = vmatprep.subr.bf16.mxu0 %v3083
    %5864 = vmatpush1.bf16.msra.mxu0 %v3082
    %5865 = vmatprep.subr.bf16.mxu0 %v3087
    %5866 = vmatpush1.bf16.msra.mxu0 %v3086
    %5867 = vmatprep.subr.bf16.mxu0 %v3091
    %5868 = vmatpush1.bf16.msra.mxu0 %v3090
    %5869 = vmatprep.subr.bf16.mxu0 %v3095
    %5870 = vmatpush1.bf16.msra.mxu0 %v3094
    %5871 = vmatprep.subr.bf16.mxu0 %v3099
    %5872 = vmatpush1.bf16.msra.mxu0 %v3098
    %5873 = vmatprep.subr.bf16.mxu0 %v3103
    %5874 = vmatpush1.bf16.msra.mxu0 %v3102
    %5875 = vmatprep.subr.bf16.mxu0 %v3107
    %5876 = vmatpush1.bf16.msra.mxu0 %v3106
    %5877 = vmatprep.subr.bf16.mxu0 %v3111
    %5878 = vmatpush1.bf16.msra.mxu0 %v3110
    %5879 = vmatprep.subr.bf16.mxu0 %v3115
    %5880 = vmatpush1.bf16.msra.mxu0 %v3114
    %5881 = vmatprep.mubr.bf16.mxu0 %v465
    %5882 = vmatmul.mubr.bf16.gmra.mrb[0].mxu0 %v464
    %v5883 = vpop.f32.mrb[0].mxu0
    %v5884 = vadd.f32 %v5723, %v5883
    %v5885 = vpop.f32.mrb[0].mxu0
    %v5886 = vadd.f32 %v5725, %v5885
    %v5887 = vpop.f32.mrb[0].mxu0
    %v5888 = vadd.f32 %v5727, %v5887
    %v5889 = vpop.f32.mrb[0].mxu0
    %v5890 = vadd.f32 %v5729, %v5889
    %5891 = vmatprep.mubr.bf16.mxu0 %v481
    %5892 = vmatmul.mubr.bf16.gmra.mrb[0].mxu0 %v480
    %v5893 = vpop.f32.mrb[0].mxu0
    %v5894 = vadd.f32 %v5733, %v5893
    %v5895 = vpop.f32.mrb[0].mxu0
    %v5896 = vadd.f32 %v5735, %v5895
    %v5897 = vpop.f32.mrb[0].mxu0
    %v5898 = vadd.f32 %v5737, %v5897
    %v5899 = vpop.f32.mrb[0].mxu0
    %v5900 = vadd.f32 %v5739, %v5899
    %5901 = vmatprep.mubr.bf16.mxu0 %v497
    %5902 = vmatmul.mubr.bf16.gmra.mrb[0].mxu0 %v496
    %v5903 = vpop.f32.mrb[0].mxu0
    %v5904 = vadd.f32 %v5743, %v5903
    %v5905 = vpop.f32.mrb[0].mxu0
    %v5906 = vadd.f32 %v5745, %v5905
    %v5907 = vpop.f32.mrb[0].mxu0
    %v5908 = vadd.f32 %v5747, %v5907
    %v5909 = vpop.f32.mrb[0].mxu0
    %v5910 = vadd.f32 %v5749, %v5909
    %5911 = vmatprep.mubr.bf16.mxu0 %v513
    %5912 = vmatmul.mubr.bf16.gmra.mrb[0].mxu0 %v512
    %v5913 = vpop.f32.mrb[0].mxu0
    %v5914 = vadd.f32 %v5753, %v5913
    %v5915 = vpop.f32.mrb[0].mxu0
    %v5916 = vadd.f32 %v5755, %v5915
    %v5917 = vpop.f32.mrb[0].mxu0
    %v5918 = vadd.f32 %v5757, %v5917
    %v5919 = vpop.f32.mrb[0].mxu0
    %v5920 = vadd.f32 %v5759, %v5919
    %5921 = vmatprep.mubr.bf16.mxu0 %v529
    %5922 = vmatmul.mubr.bf16.gmra.mrb[0].mxu0 %v528
    %v5923 = vpop.f32.mrb[0].mxu0
    %v5924 = vadd.f32 %v5763, %v5923
    %v5925 = vpop.f32.mrb[0].mxu0
    %v5926 = vadd.f32 %v5765, %v5925
    %v5927 = vpop.f32.mrb[0].mxu0
    %v5928 = vadd.f32 %v5767, %v5927
    %v5929 = vpop.f32.mrb[0].mxu0
    %v5930 = vadd.f32 %v5769, %v5929
    %5931 = vmatprep.mubr.bf16.mxu0 %v545
    %5932 = vmatmul.mubr.bf16.gmra.mrb[0].mxu0 %v544
    %v5933 = vpop.f32.mrb[0].mxu0
    %v5934 = vadd.f32 %v5773, %v5933
    %v5935 = vpop.f32.mrb[0].mxu0
    %v5936 = vadd.f32 %v5775, %v5935
    %v5937 = vpop.f32.mrb[0].mxu0
    %v5938 = vadd.f32 %v5777, %v5937
    %v5939 = vpop.f32.mrb[0].mxu0
    %v5940 = vadd.f32 %v5779, %v5939
    %5941 = vmatprep.mubr.bf16.mxu0 %v561
    %5942 = vmatmul.mubr.bf16.gmra.mrb[0].mxu0 %v560
    %v5943 = vpop.f32.mrb[0].mxu0
    %v5944 = vadd.f32 %v5783, %v5943
    %v5945 = vpop.f32.mrb[0].mxu0
    %v5946 = vadd.f32 %v5785, %v5945
    %v5947 = vpop.f32.mrb[0].mxu0
    %v5948 = vadd.f32 %v5787, %v5947
    %v5949 = vpop.f32.mrb[0].mxu0
    %v5950 = vadd.f32 %v5789, %v5949
    %5951 = vmatprep.mubr.bf16.mxu0 %v577
    %5952 = vmatmul.mubr.bf16.gmra.mrb[0].mxu0 %v576
    %v5953 = vpop.f32.mrb[0].mxu0
    %v5954 = vadd.f32 %v5793, %v5953
    %v5955 = vpop.f32.mrb[0].mxu0
    %v5956 = vadd.f32 %v5795, %v5955
    %v5957 = vpop.f32.mrb[0].mxu0
    %v5958 = vadd.f32 %v5797, %v5957
    %v5959 = vpop.f32.mrb[0].mxu0
    %v5960 = vadd.f32 %v5799, %v5959
    %5961 = vmatprep.mubr.bf16.mxu0 %v593
    %5962 = vmatmul.mubr.bf16.gmra.mrb[0].mxu0 %v592
    %v5963 = vpop.f32.mrb[0].mxu0
    %v5964 = vadd.f32 %v5803, %v5963
    %v5965 = vpop.f32.mrb[0].mxu0
    %v5966 = vadd.f32 %v5805, %v5965
    %v5967 = vpop.f32.mrb[0].mxu0
    %v5968 = vadd.f32 %v5807, %v5967
    %v5969 = vpop.f32.mrb[0].mxu0
    %v5970 = vadd.f32 %v5809, %v5969
    %5971 = vmatprep.mubr.bf16.mxu0 %v609
    %5972 = vmatmul.mubr.bf16.gmra.mrb[0].mxu0 %v608
    %v5973 = vpop.f32.mrb[0].mxu0
    %v5974 = vadd.f32 %v5813, %v5973
    %v5975 = vpop.f32.mrb[0].mxu0
    %v5976 = vadd.f32 %v5815, %v5975
    %v5977 = vpop.f32.mrb[0].mxu0
    %v5978 = vadd.f32 %v5817, %v5977
    %v5979 = vpop.f32.mrb[0].mxu0
    %v5980 = vadd.f32 %v5819, %v5979
    %5981 = vmatprep.mubr.bf16.mxu0 %v625
    %5982 = vmatmul.mubr.bf16.gmra.mrb[0].mxu0 %v624
    %v5983 = vpop.f32.mrb[0].mxu0
    %v5984 = vadd.f32 %v5823, %v5983
    %v5985 = vpop.f32.mrb[0].mxu0
    %v5986 = vadd.f32 %v5825, %v5985
    %v5987 = vpop.f32.mrb[0].mxu0
    %v5988 = vadd.f32 %v5827, %v5987
    %v5989 = vpop.f32.mrb[0].mxu0
    %v5990 = vadd.f32 %v5829, %v5989
    %5991 = vmatprep.mubr.bf16.mxu0 %v641
    %5992 = vmatmul.mubr.bf16.gmra.mrb[0].mxu0 %v640
    %v5993 = vpop.f32.mrb[0].mxu0
    %v5994 = vadd.f32 %v5833, %v5993
    %v5995 = vpop.f32.mrb[0].mxu0
    %v5996 = vadd.f32 %v5835, %v5995
    %v5997 = vpop.f32.mrb[0].mxu0
    %v5998 = vadd.f32 %v5837, %v5997
    %v5999 = vpop.f32.mrb[0].mxu0
    %v6000 = vadd.f32 %v5839, %v5999
    %6001 = vmatprep.mubr.bf16.mxu0 %v657
    %6002 = vmatmul.mubr.bf16.gmra.mrb[0].mxu0 %v656
    %v6003 = vpop.f32.mrb[0].mxu0
    %v6004 = vadd.f32 %v5843, %v6003
    %v6005 = vpop.f32.mrb[0].mxu0
    %v6006 = vadd.f32 %v5845, %v6005
    %v6007 = vpop.f32.mrb[0].mxu0
    %v6008 = vpop.f32.mrb[0].mxu0
    %6009 = vdwg.mxu0
    %6010 = vmatprep.subr.bf16.mxu0 %v3119
    %6011 = vmatpush1.bf16.msra.mxu0 %v3118
    %6012 = vmatprep.subr.bf16.mxu0 %v3123
    %6013 = vmatpush1.bf16.msra.mxu0 %v3122
    %6014 = vmatprep.subr.bf16.mxu0 %v3127
    %6015 = vmatpush1.bf16.msra.mxu0 %v3126
    %6016 = vmatprep.subr.bf16.mxu0 %v3131
    %6017 = vmatpush1.bf16.msra.mxu0 %v3130
    %6018 = vmatprep.subr.bf16.mxu0 %v3135
    %6019 = vmatpush1.bf16.msra.mxu0 %v3134
    %6020 = vmatprep.subr.bf16.mxu0 %v3139
    %6021 = vmatpush1.bf16.msra.mxu0 %v3138
    %6022 = vmatprep.subr.bf16.mxu0 %v3143
    %6023 = vmatpush1.bf16.msra.mxu0 %v3142
    %6024 = vmatprep.subr.bf16.mxu0 %v3147
    %6025 = vmatpush1.bf16.msra.mxu0 %v3146
    %6026 = vmatprep.subr.bf16.mxu0 %v3151
    %6027 = vmatpush1.bf16.msra.mxu0 %v3150
    %6028 = vmatprep.subr.bf16.mxu0 %v3155
    %6029 = vmatpush1.bf16.msra.mxu0 %v3154
    %6030 = vmatprep.subr.bf16.mxu0 %v3159
    %6031 = vmatpush1.bf16.msra.mxu0 %v3158
    %6032 = vmatprep.subr.bf16.mxu0 %v3163
    %6033 = vmatpush1.bf16.msra.mxu0 %v3162
    %6034 = vmatprep.subr.bf16.mxu0 %v3167
    %6035 = vmatpush1.bf16.msra.mxu0 %v3166
    %6036 = vmatprep.subr.bf16.mxu0 %v3171
    %6037 = vmatpush1.bf16.msra.mxu0 %v3170
    %6038 = vmatprep.subr.bf16.mxu0 %v3175
    %6039 = vmatpush1.bf16.msra.mxu0 %v3174
    %6040 = vmatprep.subr.bf16.mxu0 %v3179
    %6041 = vmatpush1.bf16.msra.mxu0 %v3178
    %6042 = vmatprep.mubr.bf16.mxu0 %v467
    %6043 = vmatmul.mubr.bf16.gmra.mrb[0].mxu0 %v466
    %v6044 = vpop.f32.mrb[0].mxu0
    %v6045 = vadd.f32 %v5884, %v6044
    %v6046 = vpop.f32.mrb[0].mxu0
    %v6047 = vadd.f32 %v5886, %v6046
    %v6048 = vpop.f32.mrb[0].mxu0
    %v6049 = vadd.f32 %v5888, %v6048
    %v6050 = vpop.f32.mrb[0].mxu0
    %v6051 = vadd.f32 %v5890, %v6050
    %6052 = vmatprep.mubr.bf16.mxu0 %v483
    %6053 = vmatmul.mubr.bf16.gmra.mrb[0].mxu0 %v482
    %v6054 = vpop.f32.mrb[0].mxu0
    %v6055 = vadd.f32 %v5894, %v6054
    %v6056 = vpop.f32.mrb[0].mxu0
    %v6057 = vadd.f32 %v5896, %v6056
    %v6058 = vpop.f32.mrb[0].mxu0
    %v6059 = vadd.f32 %v5898, %v6058
    %v6060 = vpop.f32.mrb[0].mxu0
    %v6061 = vadd.f32 %v5900, %v6060
    %6062 = vmatprep.mubr.bf16.mxu0 %v499
    %6063 = vmatmul.mubr.bf16.gmra.mrb[0].mxu0 %v498
    %v6064 = vpop.f32.mrb[0].mxu0
    %v6065 = vadd.f32 %v5904, %v6064
    %v6066 = vpop.f32.mrb[0].mxu0
    %v6067 = vadd.f32 %v5906, %v6066
    %v6068 = vpop.f32.mrb[0].mxu0
    %v6069 = vadd.f32 %v5908, %v6068
    %v6070 = vpop.f32.mrb[0].mxu0
    %v6071 = vadd.f32 %v5910, %v6070
    %6072 = vmatprep.mubr.bf16.mxu0 %v515
    %6073 = vmatmul.mubr.bf16.gmra.mrb[0].mxu0 %v514
    %v6074 = vpop.f32.mrb[0].mxu0
    %v6075 = vadd.f32 %v5914, %v6074
    %v6076 = vpop.f32.mrb[0].mxu0
    %v6077 = vadd.f32 %v5916, %v6076
    %v6078 = vpop.f32.mrb[0].mxu0
    %v6079 = vadd.f32 %v5918, %v6078
    %v6080 = vpop.f32.mrb[0].mxu0
    %v6081 = vadd.f32 %v5920, %v6080
    %6082 = vmatprep.mubr.bf16.mxu0 %v531
    %6083 = vmatmul.mubr.bf16.gmra.mrb[0].mxu0 %v530
    %v6084 = vpop.f32.mrb[0].mxu0
    %v6085 = vadd.f32 %v5924, %v6084
    %v6086 = vpop.f32.mrb[0].mxu0
    %v6087 = vadd.f32 %v5926, %v6086
    %v6088 = vpop.f32.mrb[0].mxu0
    %v6089 = vadd.f32 %v5928, %v6088
    %v6090 = vpop.f32.mrb[0].mxu0
    %v6091 = vadd.f32 %v5930, %v6090
    %6092 = vmatprep.mubr.bf16.mxu0 %v547
    %6093 = vmatmul.mubr.bf16.gmra.mrb[0].mxu0 %v546
    %v6094 = vpop.f32.mrb[0].mxu0
    %v6095 = vadd.f32 %v5934, %v6094
    %v6096 = vpop.f32.mrb[0].mxu0
    %v6097 = vadd.f32 %v5936, %v6096
    %v6098 = vpop.f32.mrb[0].mxu0
    %v6099 = vadd.f32 %v5938, %v6098
    %v6100 = vpop.f32.mrb[0].mxu0
    %v6101 = vadd.f32 %v5940, %v6100
    %6102 = vmatprep.mubr.bf16.mxu0 %v563
    %6103 = vmatmul.mubr.bf16.gmra.mrb[0].mxu0 %v562
    %v6104 = vpop.f32.mrb[0].mxu0
    %v6105 = vadd.f32 %v5944, %v6104
    %v6106 = vpop.f32.mrb[0].mxu0
    %v6107 = vadd.f32 %v5946, %v6106
    %v6108 = vpop.f32.mrb[0].mxu0
    %v6109 = vadd.f32 %v5948, %v6108
    %v6110 = vpop.f32.mrb[0].mxu0
    %v6111 = vadd.f32 %v5950, %v6110
    %6112 = vmatprep.mubr.bf16.mxu0 %v579
    %6113 = vmatmul.mubr.bf16.gmra.mrb[0].mxu0 %v578
    %v6114 = vpop.f32.mrb[0].mxu0
    %v6115 = vadd.f32 %v5954, %v6114
    %v6116 = vpop.f32.mrb[0].mxu0
    %v6117 = vadd.f32 %v5956, %v6116
    %v6118 = vpop.f32.mrb[0].mxu0
    %v6119 = vadd.f32 %v5958, %v6118
    %v6120 = vpop.f32.mrb[0].mxu0
    %v6121 = vadd.f32 %v5960, %v6120
    %6122 = vmatprep.mubr.bf16.mxu0 %v595
    %6123 = vmatmul.mubr.bf16.gmra.mrb[0].mxu0 %v594
    %v6124 = vpop.f32.mrb[0].mxu0
    %v6125 = vadd.f32 %v5964, %v6124
    %v6126 = vpop.f32.mrb[0].mxu0
    %v6127 = vadd.f32 %v5966, %v6126
    %v6128 = vpop.f32.mrb[0].mxu0
    %v6129 = vadd.f32 %v5968, %v6128
    %v6130 = vpop.f32.mrb[0].mxu0
    %v6131 = vadd.f32 %v5970, %v6130
    %6132 = vmatprep.mubr.bf16.mxu0 %v611
    %6133 = vmatmul.mubr.bf16.gmra.mrb[0].mxu0 %v610
    %v6134 = vpop.f32.mrb[0].mxu0
    %v6135 = vadd.f32 %v5974, %v6134
    %v6136 = vpop.f32.mrb[0].mxu0
    %v6137 = vadd.f32 %v5976, %v6136
    %v6138 = vpop.f32.mrb[0].mxu0
    %v6139 = vadd.f32 %v5978, %v6138
    %v6140 = vpop.f32.mrb[0].mxu0
    %v6141 = vadd.f32 %v5980, %v6140
    %6142 = vmatprep.mubr.bf16.mxu0 %v627
    %6143 = vmatmul.mubr.bf16.gmra.mrb[0].mxu0 %v626
    %v6144 = vpop.f32.mrb[0].mxu0
    %v6145 = vadd.f32 %v5984, %v6144
    %v6146 = vpop.f32.mrb[0].mxu0
    %v6147 = vadd.f32 %v5986, %v6146
    %v6148 = vpop.f32.mrb[0].mxu0
    %v6149 = vadd.f32 %v5988, %v6148
    %v6150 = vpop.f32.mrb[0].mxu0
    %v6151 = vadd.f32 %v5990, %v6150
    %6152 = vmatprep.mubr.bf16.mxu0 %v643
    %6153 = vmatmul.mubr.bf16.gmra.mrb[0].mxu0 %v642
    %v6154 = vpop.f32.mrb[0].mxu0
    %v6155 = vadd.f32 %v5994, %v6154
    %v6156 = vpop.f32.mrb[0].mxu0
    %v6157 = vadd.f32 %v5996, %v6156
    %v6158 = vpop.f32.mrb[0].mxu0
    %v6159 = vadd.f32 %v5998, %v6158
    %v6160 = vpop.f32.mrb[0].mxu0
    %v6161 = vadd.f32 %v6000, %v6160
    %6162 = vmatprep.mubr.bf16.mxu0 %v659
    %6163 = vmatmul.mubr.bf16.gmra.mrb[0].mxu0 %v658
    %v6164 = vpop.f32.mrb[0].mxu0
    %v6165 = vadd.f32 %v6004, %v6164
    %v6166 = vpop.f32.mrb[0].mxu0
    %v6167 = vadd.f32 %v6006, %v6166
    %v6168 = vpop.f32.mrb[0].mxu0
    %v6169 = vpop.f32.mrb[0].mxu0
    %6170 = vdwg.mxu0
    %6171 = vmatprep.subr.bf16.mxu0 %v3183
    %6172 = vmatpush1.bf16.msra.mxu0 %v3182
    %6173 = vmatprep.subr.bf16.mxu0 %v3187
    %6174 = vmatpush1.bf16.msra.mxu0 %v3186
    %6175 = vmatprep.subr.bf16.mxu0 %v3191
    %6176 = vmatpush1.bf16.msra.mxu0 %v3190
    %6177 = vmatprep.subr.bf16.mxu0 %v3195
    %6178 = vmatpush1.bf16.msra.mxu0 %v3194
    %6179 = vmatprep.subr.bf16.mxu0 %v3199
    %6180 = vmatpush1.bf16.msra.mxu0 %v3198
    %6181 = vmatprep.subr.bf16.mxu0 %v3203
    %6182 = vmatpush1.bf16.msra.mxu0 %v3202
    %6183 = vmatprep.subr.bf16.mxu0 %v3207
    %6184 = vmatpush1.bf16.msra.mxu0 %v3206
    %6185 = vmatprep.subr.bf16.mxu0 %v3211
    %6186 = vmatpush1.bf16.msra.mxu0 %v3210
    %6187 = vmatprep.subr.bf16.mxu0 %v3215
    %6188 = vmatpush1.bf16.msra.mxu0 %v3214
    %6189 = vmatprep.subr.bf16.mxu0 %v3219
    %6190 = vmatpush1.bf16.msra.mxu0 %v3218
    %6191 = vmatprep.subr.bf16.mxu0 %v3223
    %6192 = vmatpush1.bf16.msra.mxu0 %v3222
    %6193 = vmatprep.subr.bf16.mxu0 %v3227
    %6194 = vmatpush1.bf16.msra.mxu0 %v3226
    %6195 = vmatprep.subr.bf16.mxu0 %v3231
    %6196 = vmatpush1.bf16.msra.mxu0 %v3230
    %6197 = vmatprep.subr.bf16.mxu0 %v3235
    %6198 = vmatpush1.bf16.msra.mxu0 %v3234
    %6199 = vmatprep.subr.bf16.mxu0 %v3239
    %6200 = vmatpush1.bf16.msra.mxu0 %v3238
    %6201 = vmatprep.subr.bf16.mxu0 %v3243
    %6202 = vmatpush1.bf16.msra.mxu0 %v3242
    %6203 = vmatprep.mubr.bf16.mxu0 %v469
    %6204 = vmatmul.mubr.bf16.gmra.mrb[0].mxu0 %v468
    %v6205 = vpop.f32.mrb[0].mxu0
    %v6206 = vadd.f32 %v6045, %v6205
    %v6207 = vpop.f32.mrb[0].mxu0
    %v6208 = vadd.f32 %v6047, %v6207
    %v6209 = vpop.f32.mrb[0].mxu0
    %v6210 = vadd.f32 %v6049, %v6209
    %v6211 = vpop.f32.mrb[0].mxu0
    %v6212 = vadd.f32 %v6051, %v6211
    %6213 = vmatprep.mubr.bf16.mxu0 %v485
    %6214 = vmatmul.mubr.bf16.gmra.mrb[0].mxu0 %v484
    %v6215 = vpop.f32.mrb[0].mxu0
    %v6216 = vadd.f32 %v6055, %v6215
    %v6217 = vpop.f32.mrb[0].mxu0
    %v6218 = vadd.f32 %v6057, %v6217
    %v6219 = vpop.f32.mrb[0].mxu0
    %v6220 = vadd.f32 %v6059, %v6219
    %v6221 = vpop.f32.mrb[0].mxu0
    %v6222 = vadd.f32 %v6061, %v6221
    %6223 = vmatprep.mubr.bf16.mxu0 %v501
    %6224 = vmatmul.mubr.bf16.gmra.mrb[0].mxu0 %v500
    %v6225 = vpop.f32.mrb[0].mxu0
    %v6226 = vadd.f32 %v6065, %v6225
    %v6227 = vpop.f32.mrb[0].mxu0
    %v6228 = vadd.f32 %v6067, %v6227
    %v6229 = vpop.f32.mrb[0].mxu0
    %v6230 = vadd.f32 %v6069, %v6229
    %v6231 = vpop.f32.mrb[0].mxu0
    %v6232 = vadd.f32 %v6071, %v6231
    %6233 = vmatprep.mubr.bf16.mxu0 %v517
    %6234 = vmatmul.mubr.bf16.gmra.mrb[0].mxu0 %v516
    %v6235 = vpop.f32.mrb[0].mxu0
    %v6236 = vadd.f32 %v6075, %v6235
    %v6237 = vpop.f32.mrb[0].mxu0
    %v6238 = vadd.f32 %v6077, %v6237
    %v6239 = vpop.f32.mrb[0].mxu0
    %v6240 = vadd.f32 %v6079, %v6239
    %v6241 = vpop.f32.mrb[0].mxu0
    %v6242 = vadd.f32 %v6081, %v6241
    %6243 = vmatprep.mubr.bf16.mxu0 %v533
    %6244 = vmatmul.mubr.bf16.gmra.mrb[0].mxu0 %v532
    %v6245 = vpop.f32.mrb[0].mxu0
    %v6246 = vadd.f32 %v6085, %v6245
    %v6247 = vpop.f32.mrb[0].mxu0
    %v6248 = vadd.f32 %v6087, %v6247
    %v6249 = vpop.f32.mrb[0].mxu0
    %v6250 = vadd.f32 %v6089, %v6249
    %v6251 = vpop.f32.mrb[0].mxu0
    %v6252 = vadd.f32 %v6091, %v6251
    %6253 = vmatprep.mubr.bf16.mxu0 %v549
    %6254 = vmatmul.mubr.bf16.gmra.mrb[0].mxu0 %v548
    %v6255 = vpop.f32.mrb[0].mxu0
    %v6256 = vadd.f32 %v6095, %v6255
    %v6257 = vpop.f32.mrb[0].mxu0
    %v6258 = vadd.f32 %v6097, %v6257
    %v6259 = vpop.f32.mrb[0].mxu0
    %v6260 = vadd.f32 %v6099, %v6259
    %v6261 = vpop.f32.mrb[0].mxu0
    %v6262 = vadd.f32 %v6101, %v6261
    %6263 = vmatprep.mubr.bf16.mxu0 %v565
    %6264 = vmatmul.mubr.bf16.gmra.mrb[0].mxu0 %v564
    %v6265 = vpop.f32.mrb[0].mxu0
    %v6266 = vadd.f32 %v6105, %v6265
    %v6267 = vpop.f32.mrb[0].mxu0
    %v6268 = vadd.f32 %v6107, %v6267
    %v6269 = vpop.f32.mrb[0].mxu0
    %v6270 = vadd.f32 %v6109, %v6269
    %v6271 = vpop.f32.mrb[0].mxu0
    %v6272 = vadd.f32 %v6111, %v6271
    %6273 = vmatprep.mubr.bf16.mxu0 %v581
    %6274 = vmatmul.mubr.bf16.gmra.mrb[0].mxu0 %v580
    %v6275 = vpop.f32.mrb[0].mxu0
    %v6276 = vadd.f32 %v6115, %v6275
    %v6277 = vpop.f32.mrb[0].mxu0
    %v6278 = vadd.f32 %v6117, %v6277
    %v6279 = vpop.f32.mrb[0].mxu0
    %v6280 = vadd.f32 %v6119, %v6279
    %v6281 = vpop.f32.mrb[0].mxu0
    %v6282 = vadd.f32 %v6121, %v6281
    %6283 = vmatprep.mubr.bf16.mxu0 %v597
    %6284 = vmatmul.mubr.bf16.gmra.mrb[0].mxu0 %v596
    %v6285 = vpop.f32.mrb[0].mxu0
    %v6286 = vadd.f32 %v6125, %v6285
    %v6287 = vpop.f32.mrb[0].mxu0
    %v6288 = vadd.f32 %v6127, %v6287
    %v6289 = vpop.f32.mrb[0].mxu0
    %v6290 = vadd.f32 %v6129, %v6289
    %v6291 = vpop.f32.mrb[0].mxu0
    %v6292 = vadd.f32 %v6131, %v6291
    %6293 = vmatprep.mubr.bf16.mxu0 %v613
    %6294 = vmatmul.mubr.bf16.gmra.mrb[0].mxu0 %v612
    %v6295 = vpop.f32.mrb[0].mxu0
    %v6296 = vadd.f32 %v6135, %v6295
    %v6297 = vpop.f32.mrb[0].mxu0
    %v6298 = vadd.f32 %v6137, %v6297
    %v6299 = vpop.f32.mrb[0].mxu0
    %v6300 = vadd.f32 %v6139, %v6299
    %v6301 = vpop.f32.mrb[0].mxu0
    %v6302 = vadd.f32 %v6141, %v6301
    %6303 = vmatprep.mubr.bf16.mxu0 %v629
    %6304 = vmatmul.mubr.bf16.gmra.mrb[0].mxu0 %v628
    %v6305 = vpop.f32.mrb[0].mxu0
    %v6306 = vadd.f32 %v6145, %v6305
    %v6307 = vpop.f32.mrb[0].mxu0
    %v6308 = vadd.f32 %v6147, %v6307
    %v6309 = vpop.f32.mrb[0].mxu0
    %v6310 = vadd.f32 %v6149, %v6309
    %v6311 = vpop.f32.mrb[0].mxu0
    %v6312 = vadd.f32 %v6151, %v6311
    %6313 = vmatprep.mubr.bf16.mxu0 %v645
    %6314 = vmatmul.mubr.bf16.gmra.mrb[0].mxu0 %v644
    %v6315 = vpop.f32.mrb[0].mxu0
    %v6316 = vadd.f32 %v6155, %v6315
    %v6317 = vpop.f32.mrb[0].mxu0
    %v6318 = vadd.f32 %v6157, %v6317
    %v6319 = vpop.f32.mrb[0].mxu0
    %v6320 = vadd.f32 %v6159, %v6319
    %v6321 = vpop.f32.mrb[0].mxu0
    %v6322 = vadd.f32 %v6161, %v6321
    %6323 = vmatprep.mubr.bf16.mxu0 %v661
    %6324 = vmatmul.mubr.bf16.gmra.mrb[0].mxu0 %v660
    %v6325 = vpop.f32.mrb[0].mxu0
    %v6326 = vadd.f32 %v6165, %v6325
    %v6327 = vpop.f32.mrb[0].mxu0
    %v6328 = vadd.f32 %v6167, %v6327
    %v6329 = vpop.f32.mrb[0].mxu0
    %v6330 = vpop.f32.mrb[0].mxu0
    %6331 = vdwg.mxu0
    %6332 = vst [vmem:[#allocation8] sm:$0xff] %v4918
    %6333 = vst [vmem:[#allocation8 + $0x8] sm:$0xff] %v4920
    %6334 = vst [vmem:[#allocation8 + $0x10] sm:$0xff] %v6206
    %6335 = vst [vmem:[#allocation8 + $0x18] sm:$0xff] %v6208
    %6336 = vst [vmem:[#allocation8 + $0x20] sm:$0xff] %v4922
    %6337 = vst [vmem:[#allocation8 + $0x28] sm:$0xff] %v4924
    %6338 = vst [vmem:[#allocation8 + $0x30] sm:$0xff] %v6210
    %6339 = vst [vmem:[#allocation8 + $0x38] sm:$0xff] %v6212
    %6340 = vst [vmem:[#allocation8 + $0x40] sm:$0xff] %v4928
    %6341 = vst [vmem:[#allocation8 + $0x48] sm:$0xff] %v4930
    %6342 = vst [vmem:[#allocation8 + $0x50] sm:$0xff] %v6216
    %6343 = vst [vmem:[#allocation8 + $0x58] sm:$0xff] %v6218
    %6344 = vst [vmem:[#allocation8 + $0x60] sm:$0xff] %v4932
    %6345 = vst [vmem:[#allocation8 + $0x68] sm:$0xff] %v4934
    %6346 = vst [vmem:[#allocation8 + $0x70] sm:$0xff] %v6220
    %6347 = vst [vmem:[#allocation8 + $0x78] sm:$0xff] %v6222
    %6348 = vst [vmem:[#allocation8 + $0x80] sm:$0xff] %v4938
    %6349 = vst [vmem:[#allocation8 + $0x88] sm:$0xff] %v4940
    %6350 = vst [vmem:[#allocation8 + $0x90] sm:$0xff] %v6226
    %6351 = vst [vmem:[#allocation8 + $0x98] sm:$0xff] %v6228
    %6352 = vst [vmem:[#allocation8 + $0xa0] sm:$0xff] %v4942
    %6353 = vst [vmem:[#allocation8 + $0xa8] sm:$0xff] %v4944
    %6354 = vst [vmem:[#allocation8 + $0xb0] sm:$0xff] %v6230
    %6355 = vst [vmem:[#allocation8 + $0xb8] sm:$0xff] %v6232
    %6356 = vst [vmem:[#allocation8 + $0xc0] sm:$0xff] %v4948
    %6357 = vst [vmem:[#allocation8 + $0xc8] sm:$0xff] %v4950
    %6358 = vst [vmem:[#allocation8 + $0xd0] sm:$0xff] %v6236
    %6359 = vst [vmem:[#allocation8 + $0xd8] sm:$0xff] %v6238
    %6360 = vst [vmem:[#allocation8 + $0xe0] sm:$0xff] %v4952
    %6361 = vst [vmem:[#allocation8 + $0xe8] sm:$0xff] %v4954
    %6362 = vst [vmem:[#allocation8 + $0xf0] sm:$0xff] %v6240
    %6363 = vst [vmem:[#allocation8 + $0xf8] sm:$0xff] %v6242
    %6364 = vst [vmem:[#allocation8 + $0x100] sm:$0xff] %v4958
    %6365 = vst [vmem:[#allocation8 + $0x108] sm:$0xff] %v4960
    %6366 = vst [vmem:[#allocation8 + $0x110] sm:$0xff] %v6246
    %6367 = vst [vmem:[#allocation8 + $0x118] sm:$0xff] %v6248
    %6368 = vst [vmem:[#allocation8 + $0x120] sm:$0xff] %v4962
    %6369 = vst [vmem:[#allocation8 + $0x128] sm:$0xff] %v4964
    %6370 = vst [vmem:[#allocation8 + $0x130] sm:$0xff] %v6250
    %6371 = vst [vmem:[#allocation8 + $0x138] sm:$0xff] %v6252
    %6372 = vst [vmem:[#allocation8 + $0x140] sm:$0xff] %v4968
    %6373 = vst [vmem:[#allocation8 + $0x148] sm:$0xff] %v4970
    %6374 = vst [vmem:[#allocation8 + $0x150] sm:$0xff] %v6256
    %6375 = vst [vmem:[#allocation8 + $0x158] sm:$0xff] %v6258
    %6376 = vst [vmem:[#allocation8 + $0x160] sm:$0xff] %v4972
    %6377 = vst [vmem:[#allocation8 + $0x168] sm:$0xff] %v4974
    %6378 = vst [vmem:[#allocation8 + $0x170] sm:$0xff] %v6260
    %6379 = vst [vmem:[#allocation8 + $0x178] sm:$0xff] %v6262
    %6380 = vst [vmem:[#allocation8 + $0x180] sm:$0xff] %v4978
    %6381 = vst [vmem:[#allocation8 + $0x188] sm:$0xff] %v4980
    %6382 = vst [vmem:[#allocation8 + $0x190] sm:$0xff] %v6266
    %6383 = vst [vmem:[#allocation8 + $0x198] sm:$0xff] %v6268
    %6384 = vst [vmem:[#allocation8 + $0x1a0] sm:$0xff] %v4982
    %6385 = vst [vmem:[#allocation8 + $0x1a8] sm:$0xff] %v4984
    %6386 = vst [vmem:[#allocation8 + $0x1b0] sm:$0xff] %v6270
    %6387 = vst [vmem:[#allocation8 + $0x1b8] sm:$0xff] %v6272
    %6388 = vst [vmem:[#allocation8 + $0x1c0] sm:$0xff] %v4988
    %6389 = vst [vmem:[#allocation8 + $0x1c8] sm:$0xff] %v4990
    %6390 = vst [vmem:[#allocation8 + $0x1d0] sm:$0xff] %v6276
    %6391 = vst [vmem:[#allocation8 + $0x1d8] sm:$0xff] %v6278
    %6392 = vst [vmem:[#allocation8 + $0x1e0] sm:$0xff] %v4992
    %6393 = vst [vmem:[#allocation8 + $0x1e8] sm:$0xff] %v4994
    %6394 = vst [vmem:[#allocation8 + $0x1f0] sm:$0xff] %v6280
    %6395 = vst [vmem:[#allocation8 + $0x1f8] sm:$0xff] %v6282
    %6396 = vst [vmem:[#allocation8 + $0x200] sm:$0xff] %v4998
    %6397 = vst [vmem:[#allocation8 + $0x208] sm:$0xff] %v5000
    %6398 = vst [vmem:[#allocation8 + $0x210] sm:$0xff] %v6286
    %6399 = vst [vmem:[#allocation8 + $0x218] sm:$0xff] %v6288
    %6400 = vst [vmem:[#allocation8 + $0x220] sm:$0xff] %v5002
    %6401 = vst [vmem:[#allocation8 + $0x228] sm:$0xff] %v5004
    %6402 = vst [vmem:[#allocation8 + $0x230] sm:$0xff] %v6290
    %6403 = vst [vmem:[#allocation8 + $0x238] sm:$0xff] %v6292
    %6404 = vst [vmem:[#allocation8 + $0x240] sm:$0xff] %v5008
    %6405 = vst [vmem:[#allocation8 + $0x248] sm:$0xff] %v5010
    %6406 = vst [vmem:[#allocation8 + $0x250] sm:$0xff] %v6296
    %6407 = vst [vmem:[#allocation8 + $0x258] sm:$0xff] %v6298
    %6408 = vst [vmem:[#allocation8 + $0x260] sm:$0xff] %v5012
    %6409 = vst [vmem:[#allocation8 + $0x268] sm:$0xff] %v5014
    %6410 = vst [vmem:[#allocation8 + $0x270] sm:$0xff] %v6300
    %6411 = vst [vmem:[#allocation8 + $0x278] sm:$0xff] %v6302
    %6412 = vst [vmem:[#allocation8 + $0x280] sm:$0xff] %v5018
    %6413 = vst [vmem:[#allocation8 + $0x288] sm:$0xff] %v5020
    %6414 = vst [vmem:[#allocation8 + $0x290] sm:$0xff] %v6306
    %6415 = vst [vmem:[#allocation8 + $0x298] sm:$0xff] %v6308
    %6416 = vst [vmem:[#allocation8 + $0x2a0] sm:$0xff] %v5022
    %6417 = vst [vmem:[#allocation8 + $0x2a8] sm:$0xff] %v5024
    %6418 = vst [vmem:[#allocation8 + $0x2b0] sm:$0xff] %v6310
    %6419 = vst [vmem:[#allocation8 + $0x2b8] sm:$0xff] %v6312
    %6420 = vst [vmem:[#allocation8 + $0x2c0] sm:$0xff] %v5028
    %6421 = vst [vmem:[#allocation8 + $0x2c8] sm:$0xff] %v5030
    %6422 = vst [vmem:[#allocation8 + $0x2d0] sm:$0xff] %v6316
    %6423 = vst [vmem:[#allocation8 + $0x2d8] sm:$0xff] %v6318
    %6424 = vst [vmem:[#allocation8 + $0x2e0] sm:$0xff] %v5032
    %6425 = vst [vmem:[#allocation8 + $0x2e8] sm:$0xff] %v5034
    %6426 = vst [vmem:[#allocation8 + $0x2f0] sm:$0xff] %v6320
    %6427 = vst [vmem:[#allocation8 + $0x2f8] sm:$0xff] %v6322
    %6428 = vst [vmem:[#allocation8 + $0x300] sm:$0xf] %v5038
    %6429 = vst [vmem:[#allocation8 + $0x308] sm:$0xf] %v5040
    %6430 = vst [vmem:[#allocation8 + $0x310] sm:$0xf] %v6326
    %6431 = vst [vmem:[#allocation8 + $0x318] sm:$0xf] %v6328
    // Predicated region
    $region26: #{tpu_custom_call.1} parent=1 // pred_check
      _
    $region27: #{tpu_custom_call.1} parent=1 // pred_check_branch
      %6433 = sbr.rel (0) target = $region29
    $region28: #{tpu_custom_call.1} parent=1 // pred_region
      %s6435 = ssub.s32 12800, 12800
      %6436 = vsyncadd [#allocation4], %s6435
      %s6437 = sshll.u32 [#allocation8], 4
      %s6438 = int_to_ptr.vmem [resolvable:$true] %s6437
      %6443 = dma.vmem_to_hbm [thread:$0]  %s6438, 12800, %s3, [#allocation4], 512, 512, 32
    $region29: #{tpu_custom_call.1} parent=1 // pred_fallthru
      _
    // Predicated region
    $region30: #{tpu_custom_call.1} parent=1 // pred_check
      _
    $region31: #{tpu_custom_call.1} parent=1 // pred_check_branch
      %6445 = sbr.rel (0) target = $region33
    $region32: #{tpu_custom_call.1} parent=1 // pred_region
      %6446 = dma.done [#allocation4], 12800
    $region33: #{tpu_custom_call.1} parent=1 // pred_fallthru
      _
    %6447 = vsyncpa [#allocation3], 1
    %6448 = vsyncpa [#allocation6], 1
    %6449 = vsyncpa [#allocation4], 1

</llo_original>
